<compile_context>
chip_gen: v7x
topology: tpu7x:2x2x1
jax: 0.10.0
libtpu: 0.0.40
codegen_flags: <defaults>
</compile_context>

<pallas_src>
import jax
import jax.numpy as jnp
import numpy as np
from jax.experimental import pallas as pl
from jax.experimental.pallas import tpu as pltpu


# --------------------------------- fused forward kernel ---------------------------------

def make_fused_kernel(num_layers, t_len, b_pad, hid, vocab_pad):
    """Kernel body: embedding gather (one-hot matmul) + stacked LSTM over all encodes."""

    def kernel(ids_ref, table_ref, *refs):
        w_refs = refs[:3 * num_layers]
        out_ref = refs[3 * num_layers]

        # ---- embedding lookup: one-hot matmul against the VMEM-resident table (MXU) ----
        idx = ids_ref[...]                                                # (T*Bp, 1) int32
        vocab_iota = jax.lax.broadcasted_iota(
            jnp.int32, (t_len * b_pad, vocab_pad), 1)
        onehot = (idx == vocab_iota).astype(jnp.float32)                  # (T*Bp, Vp)
        x = jnp.dot(onehot, table_ref[...],
                    preferred_element_type=jnp.float32)                   # (T*Bp, E)

        wih = [w_refs[3 * l][...] for l in range(num_layers)]             # (in_dim, 4H)
        whh = [w_refs[3 * l + 1][...] for l in range(num_layers)]         # (H, 4H)
        bias_raw = [w_refs[3 * l + 2][...] for l in range(num_layers)]    # (1, 4H)

        # Hoisted layer-0 input projection + bias for the whole sequence (one big matmul).
        gx0 = jnp.dot(x, wih[0], preferred_element_type=jnp.float32) + bias_raw[0]

        # Hoisted per-layer bias broadcasts for layers >= 1 (don't re-broadcast per step).
        bias_b = [jnp.broadcast_to(bias_raw[l], (b_pad, 4 * hid))
                  for l in range(1, num_layers)]

        h = [jnp.zeros((b_pad, hid), jnp.float32) for _ in range(num_layers)]
        c = [jnp.zeros((b_pad, hid), jnp.float32) for _ in range(num_layers)]

        # ---- wavefront over (t, l): layer l's step t only needs layer l-1's h_t ----
        # Fully unrolled (T, L static) so the scheduler can overlap layer l-1's step t+1
        # with layer l's step t; critical path is T + L - 1 dependent steps.
        for t in range(t_len):
            for l in range(num_layers):
                if l == 0:
                    # Sublane-aligned whole-vreg slice of the hoisted projection.
                    gates = gx0[t * b_pad:(t + 1) * b_pad, :]
                else:
                    gates = jnp.dot(h[l - 1], wih[l],
                                    preferred_element_type=jnp.float32) + bias_b[l - 1]
                gates = gates + jnp.dot(h[l], whh[l],
                                        preferred_element_type=jnp.float32)   # (Bp, 4H)

                # Fused activations: two full-tile EUP passes, lane-slice afterwards.
                sig = jax.nn.sigmoid(gates)
                th = jnp.tanh(gates)
                i_g = sig[:, 0 * hid:1 * hid]
                f_g = sig[:, 1 * hid:2 * hid]
                g_g = th[:, 2 * hid:3 * hid]
                o_g = sig[:, 3 * hid:4 * hid]
                c[l] = f_g * c[l] + i_g * g_g
                h[l] = o_g * jnp.tanh(c[l])

            # Direct lane-slice store of the top layer's h_t (no concatenate, short live ranges).
            out_ref[:, t * hid:(t + 1) * hid] = h[num_layers - 1]

    return kernel


def fused_forward_call(params, ids_tm, b_pad, t_len):
    """ids_tm: (T*B_pad, 1) int32, time-major (flat row = t*B_pad + b)."""
    table = params["embedding"]
    vocab, emb_dim = table.shape
    vocab_pad = ((vocab + 127) // 128) * 128
    table_p = jnp.pad(table, ((0, vocab_pad - vocab), (0, 0))) if vocab_pad != vocab else table

    layers = params["lstm"]
    num_layers = len(layers)
    hid = layers[0]["whh_t"].shape[0]

    args = [ids_tm, table_p]
    for layer in layers:
        args += [layer["wih_t"], layer["whh_t"], layer["bias"]]

    vmem = pl.BlockSpec(memory_space=pltpu.MemorySpace.VMEM)
    out = pl.pallas_call(
        make_fused_kernel(num_layers, t_len, b_pad, hid, vocab_pad),
        out_shape=jax.ShapeDtypeStruct((b_pad, t_len * hid), jnp.float32),
        in_specs=[vmem] * len(args),
        out_specs=vmem,
    )(*args)
    return out                                                           # (B_pad, T*H)


# ------------------------------------ model glue -------------------------------------

def init_params(key, vocab_size, embedding_dim, hidden_dim, num_layers):
    keys = jax.random.split(key, 1 + 4 * num_layers)
    params = {
        "embedding": jax.random.normal(keys[0], (vocab_size, embedding_dim), jnp.float32),
    }
    stdv = 1.0 / np.sqrt(hidden_dim)   # PyTorch nn.LSTM default init: U(-1/sqrt(H), 1/sqrt(H))
    layers = []
    for l in range(num_layers):
        in_dim = embedding_dim if l == 0 else hidden_dim
        k = keys[1 + 4 * l: 1 + 4 * (l + 1)]
        w_ih = jax.random.uniform(k[0], (4 * hidden_dim, in_dim), jnp.float32, -stdv, stdv)
        w_hh = jax.random.uniform(k[1], (4 * hidden_dim, hidden_dim), jnp.float32, -stdv, stdv)
        b_ih = jax.random.uniform(k[2], (4 * hidden_dim,), jnp.float32, -stdv, stdv)
        b_hh = jax.random.uniform(k[3], (4 * hidden_dim,), jnp.float32, -stdv, stdv)
        layers.append({
            "wih_t": w_ih.T,                                       # (in_dim, 4H)
            "whh_t": w_hh.T,                                       # (H, 4H)
            "bias": (b_ih + b_hh).reshape(1, 4 * hidden_dim),      # (1, 4H)
        })
    params["lstm"] = layers
    return params


def forward(params, query, document, document_non_relevant, max_length):
    """Mirrors TextEmbeddingModelwithLSTM.forward: returns 3x (B, max_length, H)."""
    ids = jnp.stack([
        query.reshape(-1, max_length),
        document.reshape(-1, max_length),
        document_non_relevant.reshape(-1, max_length),
    ]).astype(jnp.int32)                                            # (3, B, T)
    _, b, t = ids.shape
    n = 3 * b                                                       # encodes folded into batch
    b_pad = ((n + 7) // 8) * 8                                      # sublane-pad to 8
    hid = params["lstm"][0]["whh_t"].shape[0]

    ids_flat = jnp.pad(ids.reshape(n, t), ((0, b_pad - n), (0, 0)))
    ids_tm = jnp.transpose(ids_flat, (1, 0)).reshape(t * b_pad, 1)  # time-major, flat = t*Bp + b

    out = fused_forward_call(params, ids_tm, b_pad, t)              # (B_pad, T*H)
    out = out.reshape(b_pad, t, hid)[:n].reshape(3, b, t, hid)      # cheap row-major reshape
    return out[0], out[1], out[2]


# ------------------------------- pure-JAX reference ----------------------------------

def encode_ref(params, ids, max_length):
    emb = params["embedding"][ids]
    emb = emb.reshape(-1, max_length, emb.shape[-1])
    x = jnp.transpose(emb, (1, 0, 2))                               # (T, B, E)
    hid = params["lstm"][0]["whh_t"].shape[0]
    b = x.shape[1]
    hp = jax.lax.Precision.HIGHEST                                  # true-f32 reference matmuls
    for layer in params["lstm"]:
        def step(carry, x_t, layer=layer):
            h, c = carry
            gates = (jnp.dot(x_t, layer["wih_t"], precision=hp)
                     + jnp.dot(h, layer["whh_t"], precision=hp)
                     + layer["bias"])
            i, f, g, o = jnp.split(gates, 4, axis=-1)
            c = jax.nn.sigmoid(f) * c + jax.nn.sigmoid(i) * jnp.tanh(g)
            h = jax.nn.sigmoid(o) * jnp.tanh(c)
            return (h, c), h
        init = (jnp.zeros((b, hid), jnp.float32), jnp.zeros((b, hid), jnp.float32))
        _, x = jax.lax.scan(step, init, x)
    return jnp.transpose(x, (1, 0, 2))                              # (B, T, H)


# ----------------------------------------- main ---------------------------------------

if __name__ == "__main__":
    hidden_dim = 32
    num_layers = 2
    vocab_size = 1000
    embedding_dim = 128
    max_length = 8
    batch = 2

    key = jax.random.PRNGKey(0)
    pkey, qkey, dkey, nkey = jax.random.split(key, 4)
    params = init_params(pkey, vocab_size, embedding_dim, hidden_dim, num_layers)

    query = jax.random.randint(qkey, (batch, max_length), 0, vocab_size, jnp.int32)
    document = jax.random.randint(dkey, (batch, max_length), 0, vocab_size, jnp.int32)
    document_nr = jax.random.randint(nkey, (batch, max_length), 0, vocab_size, jnp.int32)

    fwd = jax.jit(forward, static_argnums=(4,))
    outs = fwd(params, query, document, document_nr, max_length)
    outs = jax.block_until_ready(outs)

    # All-f32 path: tolerance tightened vs. the previous 2e-2 so layout/slicing bugs can't hide.
    for got, ids in zip(outs, (query, document, document_nr)):
        assert got.shape == (batch, max_length, hidden_dim)
        want = encode_ref(params, ids, max_length)
        np.testing.assert_allclose(np.asarray(got), np.asarray(want), rtol=1e-4, atol=1e-4)

    print("KERNEL_OK")
</pallas_src>

<mosaic_0001>
module attributes {stable_mosaic.version = 11 : i64} {
  func.func @kernel(%arg0: memref<64x1xi32, #tpu.memory_space<vmem>>, %arg1: memref<1024x128xf32, #tpu.memory_space<vmem>>, %arg2: memref<128x128xf32, #tpu.memory_space<vmem>>, %arg3: memref<32x128xf32, #tpu.memory_space<vmem>>, %arg4: memref<1x128xf32, #tpu.memory_space<vmem>>, %arg5: memref<32x128xf32, #tpu.memory_space<vmem>>, %arg6: memref<32x128xf32, #tpu.memory_space<vmem>>, %arg7: memref<1x128xf32, #tpu.memory_space<vmem>>, %arg8: memref<8x256xf32, #tpu.memory_space<vmem>>) attributes {dimension_semantics = [], scalar_prefetch = 0 : i64, scratch_operands = 0 : i64, tpu.core_type = #tpu.core_type<tc>} {
    %c0 = arith.constant 0 : index
    %c0_0 = arith.constant 0 : index
    %0 = vector.load %arg0[%c0, %c0_0] : memref<64x1xi32, #tpu.memory_space<vmem>>, vector<64x1xi32>
    %1 = tpu.iota {dimensions = array<i32: 1>} : vector<64x1024xi32>
    %2 = vector.broadcast %0 : vector<64x1xi32> to vector<64x1024xi32>
    %3 = arith.cmpi eq, %2, %1 : vector<64x1024xi32>
    %4 = arith.extui %3 : vector<64x1024xi1> to vector<64x1024xi32>
    %5 = arith.sitofp %4 : vector<64x1024xi32> to vector<64x1024xf32>
    %c0_1 = arith.constant 0 : index
    %c0_2 = arith.constant 0 : index
    %6 = vector.load %arg1[%c0_1, %c0_2] : memref<1024x128xf32, #tpu.memory_space<vmem>>, vector<1024x128xf32>
    %cst = arith.constant dense<0.000000e+00> : vector<64x128xf32>
    %7 = tpu.matmul %5, %6, %cst {dimension_numbers = #tpu.dot_dimension_numbers<[1], [0], [0], [1], [0, 0, 1, 1], [], []>} : vector<64x1024xf32>, vector<1024x128xf32>, vector<64x128xf32> -> vector<64x128xf32>
    %c0_3 = arith.constant 0 : index
    %c0_4 = arith.constant 0 : index
    %8 = vector.load %arg2[%c0_3, %c0_4] : memref<128x128xf32, #tpu.memory_space<vmem>>, vector<128x128xf32>
    %c0_5 = arith.constant 0 : index
    %c0_6 = arith.constant 0 : index
    %9 = vector.load %arg5[%c0_5, %c0_6] : memref<32x128xf32, #tpu.memory_space<vmem>>, vector<32x128xf32>
    %c0_7 = arith.constant 0 : index
    %c0_8 = arith.constant 0 : index
    %10 = vector.load %arg3[%c0_7, %c0_8] : memref<32x128xf32, #tpu.memory_space<vmem>>, vector<32x128xf32>
    %c0_9 = arith.constant 0 : index
    %c0_10 = arith.constant 0 : index
    %11 = vector.load %arg6[%c0_9, %c0_10] : memref<32x128xf32, #tpu.memory_space<vmem>>, vector<32x128xf32>
    %c0_11 = arith.constant 0 : index
    %c0_12 = arith.constant 0 : index
    %12 = vector.load %arg4[%c0_11, %c0_12] : memref<1x128xf32, #tpu.memory_space<vmem>>, vector<1x128xf32>
    %c0_13 = arith.constant 0 : index
    %c0_14 = arith.constant 0 : index
    %13 = vector.load %arg7[%c0_13, %c0_14] : memref<1x128xf32, #tpu.memory_space<vmem>>, vector<1x128xf32>
    %cst_15 = arith.constant dense<0.000000e+00> : vector<64x128xf32>
    %14 = tpu.matmul %7, %8, %cst_15 {dimension_numbers = #tpu.dot_dimension_numbers<[1], [0], [0], [1], [0, 0, 1, 1], [], []>} : vector<64x128xf32>, vector<128x128xf32>, vector<64x128xf32> -> vector<64x128xf32>
    %15 = vector.broadcast %12 : vector<1x128xf32> to vector<64x128xf32>
    %16 = arith.addf %14, %15 : vector<64x128xf32>
    %17 = vector.shape_cast %13 : vector<1x128xf32> to vector<1x128xf32>
    %18 = vector.broadcast %17 : vector<1x128xf32> to vector<8x128xf32>
    %cst_16 = arith.constant 0.000000e+00 : f32
    %19 = vector.broadcast %cst_16 : f32 to vector<8x32xf32>
    %cst_17 = arith.constant 0.000000e+00 : f32
    %20 = vector.broadcast %cst_17 : f32 to vector<8x32xf32>
    %cst_18 = arith.constant 0.000000e+00 : f32
    %21 = vector.broadcast %cst_18 : f32 to vector<8x32xf32>
    %cst_19 = arith.constant 0.000000e+00 : f32
    %22 = vector.broadcast %cst_19 : f32 to vector<8x32xf32>
    %23 = vector.extract_strided_slice %16 {offsets = [0, 0], sizes = [8, 128], strides = [1, 1]} : vector<64x128xf32> to vector<8x128xf32>
    %cst_20 = arith.constant dense<0.000000e+00> : vector<8x128xf32>
    %24 = tpu.matmul %19, %10, %cst_20 {dimension_numbers = #tpu.dot_dimension_numbers<[1], [0], [0], [1], [0, 0, 1, 1], [], []>} : vector<8x32xf32>, vector<32x128xf32>, vector<8x128xf32> -> vector<8x128xf32>
    %25 = arith.addf %23, %24 : vector<8x128xf32>
    %26 = arith.negf %25 : vector<8x128xf32>
    %27 = math.exp %26 : vector<8x128xf32>
    %cst_21 = arith.constant 1.000000e+00 : f32
    %28 = vector.broadcast %cst_21 : f32 to vector<8x128xf32>
    %29 = arith.addf %28, %27 : vector<8x128xf32>
    %30 = arith.divf %28, %29 : vector<8x128xf32>
    %31 = math.tanh %25 : vector<8x128xf32>
    %32 = vector.extract_strided_slice %30 {offsets = [0, 0], sizes = [8, 32], strides = [1, 1]} : vector<8x128xf32> to vector<8x32xf32>
    %33 = vector.extract_strided_slice %30 {offsets = [0, 32], sizes = [8, 32], strides = [1, 1]} : vector<8x128xf32> to vector<8x32xf32>
    %34 = vector.extract_strided_slice %31 {offsets = [0, 64], sizes = [8, 32], strides = [1, 1]} : vector<8x128xf32> to vector<8x32xf32>
    %35 = vector.extract_strided_slice %30 {offsets = [0, 96], sizes = [8, 32], strides = [1, 1]} : vector<8x128xf32> to vector<8x32xf32>
    %36 = arith.mulf %33, %21 : vector<8x32xf32>
    %37 = arith.mulf %32, %34 : vector<8x32xf32>
    %38 = arith.addf %36, %37 : vector<8x32xf32>
    %39 = math.tanh %38 : vector<8x32xf32>
    %40 = arith.mulf %35, %39 : vector<8x32xf32>
    %cst_22 = arith.constant dense<0.000000e+00> : vector<8x128xf32>
    %41 = tpu.matmul %40, %9, %cst_22 {dimension_numbers = #tpu.dot_dimension_numbers<[1], [0], [0], [1], [0, 0, 1, 1], [], []>} : vector<8x32xf32>, vector<32x128xf32>, vector<8x128xf32> -> vector<8x128xf32>
    %42 = arith.addf %41, %18 : vector<8x128xf32>
    %cst_23 = arith.constant dense<0.000000e+00> : vector<8x128xf32>
    %43 = tpu.matmul %20, %11, %cst_23 {dimension_numbers = #tpu.dot_dimension_numbers<[1], [0], [0], [1], [0, 0, 1, 1], [], []>} : vector<8x32xf32>, vector<32x128xf32>, vector<8x128xf32> -> vector<8x128xf32>
    %44 = arith.addf %42, %43 : vector<8x128xf32>
    %45 = arith.negf %44 : vector<8x128xf32>
    %46 = math.exp %45 : vector<8x128xf32>
    %cst_24 = arith.constant 1.000000e+00 : f32
    %47 = vector.broadcast %cst_24 : f32 to vector<8x128xf32>
    %48 = arith.addf %47, %46 : vector<8x128xf32>
    %49 = arith.divf %47, %48 : vector<8x128xf32>
    %50 = math.tanh %44 : vector<8x128xf32>
    %51 = vector.extract_strided_slice %49 {offsets = [0, 0], sizes = [8, 32], strides = [1, 1]} : vector<8x128xf32> to vector<8x32xf32>
    %52 = vector.extract_strided_slice %49 {offsets = [0, 32], sizes = [8, 32], strides = [1, 1]} : vector<8x128xf32> to vector<8x32xf32>
    %53 = vector.extract_strided_slice %50 {offsets = [0, 64], sizes = [8, 32], strides = [1, 1]} : vector<8x128xf32> to vector<8x32xf32>
    %54 = vector.extract_strided_slice %49 {offsets = [0, 96], sizes = [8, 32], strides = [1, 1]} : vector<8x128xf32> to vector<8x32xf32>
    %55 = arith.mulf %52, %22 : vector<8x32xf32>
    %56 = arith.mulf %51, %53 : vector<8x32xf32>
    %57 = arith.addf %55, %56 : vector<8x32xf32>
    %58 = math.tanh %57 : vector<8x32xf32>
    %59 = arith.mulf %54, %58 : vector<8x32xf32>
    %c0_25 = arith.constant 0 : index
    %c0_26 = arith.constant 0 : index
    %60 = vector.load %arg8[%c0_25, %c0_26] : memref<8x256xf32, #tpu.memory_space<vmem>>, vector<8x32xf32>
    tpu.vector_store %arg8[%c0_25, %c0_26], %59 {strides = array<i32>} : memref<8x256xf32, #tpu.memory_space<vmem>>, vector<8x32xf32>,
    %61 = vector.extract_strided_slice %16 {offsets = [8, 0], sizes = [8, 128], strides = [1, 1]} : vector<64x128xf32> to vector<8x128xf32>
    %cst_27 = arith.constant dense<0.000000e+00> : vector<8x128xf32>
    %62 = tpu.matmul %40, %10, %cst_27 {dimension_numbers = #tpu.dot_dimension_numbers<[1], [0], [0], [1], [0, 0, 1, 1], [], []>} : vector<8x32xf32>, vector<32x128xf32>, vector<8x128xf32> -> vector<8x128xf32>
    %63 = arith.addf %61, %62 : vector<8x128xf32>
    %64 = arith.negf %63 : vector<8x128xf32>
    %65 = math.exp %64 : vector<8x128xf32>
    %cst_28 = arith.constant 1.000000e+00 : f32
    %66 = vector.broadcast %cst_28 : f32 to vector<8x128xf32>
    %67 = arith.addf %66, %65 : vector<8x128xf32>
    %68 = arith.divf %66, %67 : vector<8x128xf32>
    %69 = math.tanh %63 : vector<8x128xf32>
    %70 = vector.extract_strided_slice %68 {offsets = [0, 0], sizes = [8, 32], strides = [1, 1]} : vector<8x128xf32> to vector<8x32xf32>
    %71 = vector.extract_strided_slice %68 {offsets = [0, 32], sizes = [8, 32], strides = [1, 1]} : vector<8x128xf32> to vector<8x32xf32>
    %72 = vector.extract_strided_slice %69 {offsets = [0, 64], sizes = [8, 32], strides = [1, 1]} : vector<8x128xf32> to vector<8x32xf32>
    %73 = vector.extract_strided_slice %68 {offsets = [0, 96], sizes = [8, 32], strides = [1, 1]} : vector<8x128xf32> to vector<8x32xf32>
    %74 = arith.mulf %71, %38 : vector<8x32xf32>
    %75 = arith.mulf %70, %72 : vector<8x32xf32>
    %76 = arith.addf %74, %75 : vector<8x32xf32>
    %77 = math.tanh %76 : vector<8x32xf32>
    %78 = arith.mulf %73, %77 : vector<8x32xf32>
    %cst_29 = arith.constant dense<0.000000e+00> : vector<8x128xf32>
    %79 = tpu.matmul %78, %9, %cst_29 {dimension_numbers = #tpu.dot_dimension_numbers<[1], [0], [0], [1], [0, 0, 1, 1], [], []>} : vector<8x32xf32>, vector<32x128xf32>, vector<8x128xf32> -> vector<8x128xf32>
    %80 = arith.addf %79, %18 : vector<8x128xf32>
    %cst_30 = arith.constant dense<0.000000e+00> : vector<8x128xf32>
    %81 = tpu.matmul %59, %11, %cst_30 {dimension_numbers = #tpu.dot_dimension_numbers<[1], [0], [0], [1], [0, 0, 1, 1], [], []>} : vector<8x32xf32>, vector<32x128xf32>, vector<8x128xf32> -> vector<8x128xf32>
    %82 = arith.addf %80, %81 : vector<8x128xf32>
    %83 = arith.negf %82 : vector<8x128xf32>
    %84 = math.exp %83 : vector<8x128xf32>
    %cst_31 = arith.constant 1.000000e+00 : f32
    %85 = vector.broadcast %cst_31 : f32 to vector<8x128xf32>
    %86 = arith.addf %85, %84 : vector<8x128xf32>
    %87 = arith.divf %85, %86 : vector<8x128xf32>
    %88 = math.tanh %82 : vector<8x128xf32>
    %89 = vector.extract_strided_slice %87 {offsets = [0, 0], sizes = [8, 32], strides = [1, 1]} : vector<8x128xf32> to vector<8x32xf32>
    %90 = vector.extract_strided_slice %87 {offsets = [0, 32], sizes = [8, 32], strides = [1, 1]} : vector<8x128xf32> to vector<8x32xf32>
    %91 = vector.extract_strided_slice %88 {offsets = [0, 64], sizes = [8, 32], strides = [1, 1]} : vector<8x128xf32> to vector<8x32xf32>
    %92 = vector.extract_strided_slice %87 {offsets = [0, 96], sizes = [8, 32], strides = [1, 1]} : vector<8x128xf32> to vector<8x32xf32>
    %93 = arith.mulf %90, %57 : vector<8x32xf32>
    %94 = arith.mulf %89, %91 : vector<8x32xf32>
    %95 = arith.addf %93, %94 : vector<8x32xf32>
    %96 = math.tanh %95 : vector<8x32xf32>
    %97 = arith.mulf %92, %96 : vector<8x32xf32>
    %c0_32 = arith.constant 0 : index
    %c32 = arith.constant 32 : index
    %98 = vector.load %arg8[%c0_32, %c32] : memref<8x256xf32, #tpu.memory_space<vmem>>, vector<8x32xf32>
    tpu.vector_store %arg8[%c0_32, %c32], %97 {strides = array<i32>} : memref<8x256xf32, #tpu.memory_space<vmem>>, vector<8x32xf32>,
    %99 = vector.extract_strided_slice %16 {offsets = [16, 0], sizes = [8, 128], strides = [1, 1]} : vector<64x128xf32> to vector<8x128xf32>
    %cst_33 = arith.constant dense<0.000000e+00> : vector<8x128xf32>
    %100 = tpu.matmul %78, %10, %cst_33 {dimension_numbers = #tpu.dot_dimension_numbers<[1], [0], [0], [1], [0, 0, 1, 1], [], []>} : vector<8x32xf32>, vector<32x128xf32>, vector<8x128xf32> -> vector<8x128xf32>
    %101 = arith.addf %99, %100 : vector<8x128xf32>
    %102 = arith.negf %101 : vector<8x128xf32>
    %103 = math.exp %102 : vector<8x128xf32>
    %cst_34 = arith.constant 1.000000e+00 : f32
    %104 = vector.broadcast %cst_34 : f32 to vector<8x128xf32>
    %105 = arith.addf %104, %103 : vector<8x128xf32>
    %106 = arith.divf %104, %105 : vector<8x128xf32>
    %107 = math.tanh %101 : vector<8x128xf32>
    %108 = vector.extract_strided_slice %106 {offsets = [0, 0], sizes = [8, 32], strides = [1, 1]} : vector<8x128xf32> to vector<8x32xf32>
    %109 = vector.extract_strided_slice %106 {offsets = [0, 32], sizes = [8, 32], strides = [1, 1]} : vector<8x128xf32> to vector<8x32xf32>
    %110 = vector.extract_strided_slice %107 {offsets = [0, 64], sizes = [8, 32], strides = [1, 1]} : vector<8x128xf32> to vector<8x32xf32>
    %111 = vector.extract_strided_slice %106 {offsets = [0, 96], sizes = [8, 32], strides = [1, 1]} : vector<8x128xf32> to vector<8x32xf32>
    %112 = arith.mulf %109, %76 : vector<8x32xf32>
    %113 = arith.mulf %108, %110 : vector<8x32xf32>
    %114 = arith.addf %112, %113 : vector<8x32xf32>
    %115 = math.tanh %114 : vector<8x32xf32>
    %116 = arith.mulf %111, %115 : vector<8x32xf32>
    %cst_35 = arith.constant dense<0.000000e+00> : vector<8x128xf32>
    %117 = tpu.matmul %116, %9, %cst_35 {dimension_numbers = #tpu.dot_dimension_numbers<[1], [0], [0], [1], [0, 0, 1, 1], [], []>} : vector<8x32xf32>, vector<32x128xf32>, vector<8x128xf32> -> vector<8x128xf32>
    %118 = arith.addf %117, %18 : vector<8x128xf32>
    %cst_36 = arith.constant dense<0.000000e+00> : vector<8x128xf32>
    %119 = tpu.matmul %97, %11, %cst_36 {dimension_numbers = #tpu.dot_dimension_numbers<[1], [0], [0], [1], [0, 0, 1, 1], [], []>} : vector<8x32xf32>, vector<32x128xf32>, vector<8x128xf32> -> vector<8x128xf32>
    %120 = arith.addf %118, %119 : vector<8x128xf32>
    %121 = arith.negf %120 : vector<8x128xf32>
    %122 = math.exp %121 : vector<8x128xf32>
    %cst_37 = arith.constant 1.000000e+00 : f32
    %123 = vector.broadcast %cst_37 : f32 to vector<8x128xf32>
    %124 = arith.addf %123, %122 : vector<8x128xf32>
    %125 = arith.divf %123, %124 : vector<8x128xf32>
    %126 = math.tanh %120 : vector<8x128xf32>
    %127 = vector.extract_strided_slice %125 {offsets = [0, 0], sizes = [8, 32], strides = [1, 1]} : vector<8x128xf32> to vector<8x32xf32>
    %128 = vector.extract_strided_slice %125 {offsets = [0, 32], sizes = [8, 32], strides = [1, 1]} : vector<8x128xf32> to vector<8x32xf32>
    %129 = vector.extract_strided_slice %126 {offsets = [0, 64], sizes = [8, 32], strides = [1, 1]} : vector<8x128xf32> to vector<8x32xf32>
    %130 = vector.extract_strided_slice %125 {offsets = [0, 96], sizes = [8, 32], strides = [1, 1]} : vector<8x128xf32> to vector<8x32xf32>
    %131 = arith.mulf %128, %95 : vector<8x32xf32>
    %132 = arith.mulf %127, %129 : vector<8x32xf32>
    %133 = arith.addf %131, %132 : vector<8x32xf32>
    %134 = math.tanh %133 : vector<8x32xf32>
    %135 = arith.mulf %130, %134 : vector<8x32xf32>
    %c0_38 = arith.constant 0 : index
    %c64 = arith.constant 64 : index
    %136 = vector.load %arg8[%c0_38, %c64] : memref<8x256xf32, #tpu.memory_space<vmem>>, vector<8x32xf32>
    tpu.vector_store %arg8[%c0_38, %c64], %135 {strides = array<i32>} : memref<8x256xf32, #tpu.memory_space<vmem>>, vector<8x32xf32>,
    %137 = vector.extract_strided_slice %16 {offsets = [24, 0], sizes = [8, 128], strides = [1, 1]} : vector<64x128xf32> to vector<8x128xf32>
    %cst_39 = arith.constant dense<0.000000e+00> : vector<8x128xf32>
    %138 = tpu.matmul %116, %10, %cst_39 {dimension_numbers = #tpu.dot_dimension_numbers<[1], [0], [0], [1], [0, 0, 1, 1], [], []>} : vector<8x32xf32>, vector<32x128xf32>, vector<8x128xf32> -> vector<8x128xf32>
    %139 = arith.addf %137, %138 : vector<8x128xf32>
    %140 = arith.negf %139 : vector<8x128xf32>
    %141 = math.exp %140 : vector<8x128xf32>
    %cst_40 = arith.constant 1.000000e+00 : f32
    %142 = vector.broadcast %cst_40 : f32 to vector<8x128xf32>
    %143 = arith.addf %142, %141 : vector<8x128xf32>
    %144 = arith.divf %142, %143 : vector<8x128xf32>
    %145 = math.tanh %139 : vector<8x128xf32>
    %146 = vector.extract_strided_slice %144 {offsets = [0, 0], sizes = [8, 32], strides = [1, 1]} : vector<8x128xf32> to vector<8x32xf32>
    %147 = vector.extract_strided_slice %144 {offsets = [0, 32], sizes = [8, 32], strides = [1, 1]} : vector<8x128xf32> to vector<8x32xf32>
    %148 = vector.extract_strided_slice %145 {offsets = [0, 64], sizes = [8, 32], strides = [1, 1]} : vector<8x128xf32> to vector<8x32xf32>
    %149 = vector.extract_strided_slice %144 {offsets = [0, 96], sizes = [8, 32], strides = [1, 1]} : vector<8x128xf32> to vector<8x32xf32>
    %150 = arith.mulf %147, %114 : vector<8x32xf32>
    %151 = arith.mulf %146, %148 : vector<8x32xf32>
    %152 = arith.addf %150, %151 : vector<8x32xf32>
    %153 = math.tanh %152 : vector<8x32xf32>
    %154 = arith.mulf %149, %153 : vector<8x32xf32>
    %cst_41 = arith.constant dense<0.000000e+00> : vector<8x128xf32>
    %155 = tpu.matmul %154, %9, %cst_41 {dimension_numbers = #tpu.dot_dimension_numbers<[1], [0], [0], [1], [0, 0, 1, 1], [], []>} : vector<8x32xf32>, vector<32x128xf32>, vector<8x128xf32> -> vector<8x128xf32>
    %156 = arith.addf %155, %18 : vector<8x128xf32>
    %cst_42 = arith.constant dense<0.000000e+00> : vector<8x128xf32>
    %157 = tpu.matmul %135, %11, %cst_42 {dimension_numbers = #tpu.dot_dimension_numbers<[1], [0], [0], [1], [0, 0, 1, 1], [], []>} : vector<8x32xf32>, vector<32x128xf32>, vector<8x128xf32> -> vector<8x128xf32>
    %158 = arith.addf %156, %157 : vector<8x128xf32>
    %159 = arith.negf %158 : vector<8x128xf32>
    %160 = math.exp %159 : vector<8x128xf32>
    %cst_43 = arith.constant 1.000000e+00 : f32
    %161 = vector.broadcast %cst_43 : f32 to vector<8x128xf32>
    %162 = arith.addf %161, %160 : vector<8x128xf32>
    %163 = arith.divf %161, %162 : vector<8x128xf32>
    %164 = math.tanh %158 : vector<8x128xf32>
    %165 = vector.extract_strided_slice %163 {offsets = [0, 0], sizes = [8, 32], strides = [1, 1]} : vector<8x128xf32> to vector<8x32xf32>
    %166 = vector.extract_strided_slice %163 {offsets = [0, 32], sizes = [8, 32], strides = [1, 1]} : vector<8x128xf32> to vector<8x32xf32>
    %167 = vector.extract_strided_slice %164 {offsets = [0, 64], sizes = [8, 32], strides = [1, 1]} : vector<8x128xf32> to vector<8x32xf32>
    %168 = vector.extract_strided_slice %163 {offsets = [0, 96], sizes = [8, 32], strides = [1, 1]} : vector<8x128xf32> to vector<8x32xf32>
    %169 = arith.mulf %166, %133 : vector<8x32xf32>
    %170 = arith.mulf %165, %167 : vector<8x32xf32>
    %171 = arith.addf %169, %170 : vector<8x32xf32>
    %172 = math.tanh %171 : vector<8x32xf32>
    %173 = arith.mulf %168, %172 : vector<8x32xf32>
    %c0_44 = arith.constant 0 : index
    %c96 = arith.constant 96 : index
    %174 = vector.load %arg8[%c0_44, %c96] : memref<8x256xf32, #tpu.memory_space<vmem>>, vector<8x32xf32>
    tpu.vector_store %arg8[%c0_44, %c96], %173 {strides = array<i32>} : memref<8x256xf32, #tpu.memory_space<vmem>>, vector<8x32xf32>,
    %175 = vector.extract_strided_slice %16 {offsets = [32, 0], sizes = [8, 128], strides = [1, 1]} : vector<64x128xf32> to vector<8x128xf32>
    %cst_45 = arith.constant dense<0.000000e+00> : vector<8x128xf32>
    %176 = tpu.matmul %154, %10, %cst_45 {dimension_numbers = #tpu.dot_dimension_numbers<[1], [0], [0], [1], [0, 0, 1, 1], [], []>} : vector<8x32xf32>, vector<32x128xf32>, vector<8x128xf32> -> vector<8x128xf32>
    %177 = arith.addf %175, %176 : vector<8x128xf32>
    %178 = arith.negf %177 : vector<8x128xf32>
    %179 = math.exp %178 : vector<8x128xf32>
    %cst_46 = arith.constant 1.000000e+00 : f32
    %180 = vector.broadcast %cst_46 : f32 to vector<8x128xf32>
    %181 = arith.addf %180, %179 : vector<8x128xf32>
    %182 = arith.divf %180, %181 : vector<8x128xf32>
    %183 = math.tanh %177 : vector<8x128xf32>
    %184 = vector.extract_strided_slice %182 {offsets = [0, 0], sizes = [8, 32], strides = [1, 1]} : vector<8x128xf32> to vector<8x32xf32>
    %185 = vector.extract_strided_slice %182 {offsets = [0, 32], sizes = [8, 32], strides = [1, 1]} : vector<8x128xf32> to vector<8x32xf32>
    %186 = vector.extract_strided_slice %183 {offsets = [0, 64], sizes = [8, 32], strides = [1, 1]} : vector<8x128xf32> to vector<8x32xf32>
    %187 = vector.extract_strided_slice %182 {offsets = [0, 96], sizes = [8, 32], strides = [1, 1]} : vector<8x128xf32> to vector<8x32xf32>
    %188 = arith.mulf %185, %152 : vector<8x32xf32>
    %189 = arith.mulf %184, %186 : vector<8x32xf32>
    %190 = arith.addf %188, %189 : vector<8x32xf32>
    %191 = math.tanh %190 : vector<8x32xf32>
    %192 = arith.mulf %187, %191 : vector<8x32xf32>
    %cst_47 = arith.constant dense<0.000000e+00> : vector<8x128xf32>
    %193 = tpu.matmul %192, %9, %cst_47 {dimension_numbers = #tpu.dot_dimension_numbers<[1], [0], [0], [1], [0, 0, 1, 1], [], []>} : vector<8x32xf32>, vector<32x128xf32>, vector<8x128xf32> -> vector<8x128xf32>
    %194 = arith.addf %193, %18 : vector<8x128xf32>
    %cst_48 = arith.constant dense<0.000000e+00> : vector<8x128xf32>
    %195 = tpu.matmul %173, %11, %cst_48 {dimension_numbers = #tpu.dot_dimension_numbers<[1], [0], [0], [1], [0, 0, 1, 1], [], []>} : vector<8x32xf32>, vector<32x128xf32>, vector<8x128xf32> -> vector<8x128xf32>
    %196 = arith.addf %194, %195 : vector<8x128xf32>
    %197 = arith.negf %196 : vector<8x128xf32>
    %198 = math.exp %197 : vector<8x128xf32>
    %cst_49 = arith.constant 1.000000e+00 : f32
    %199 = vector.broadcast %cst_49 : f32 to vector<8x128xf32>
    %200 = arith.addf %199, %198 : vector<8x128xf32>
    %201 = arith.divf %199, %200 : vector<8x128xf32>
    %202 = math.tanh %196 : vector<8x128xf32>
    %203 = vector.extract_strided_slice %201 {offsets = [0, 0], sizes = [8, 32], strides = [1, 1]} : vector<8x128xf32> to vector<8x32xf32>
    %204 = vector.extract_strided_slice %201 {offsets = [0, 32], sizes = [8, 32], strides = [1, 1]} : vector<8x128xf32> to vector<8x32xf32>
    %205 = vector.extract_strided_slice %202 {offsets = [0, 64], sizes = [8, 32], strides = [1, 1]} : vector<8x128xf32> to vector<8x32xf32>
    %206 = vector.extract_strided_slice %201 {offsets = [0, 96], sizes = [8, 32], strides = [1, 1]} : vector<8x128xf32> to vector<8x32xf32>
    %207 = arith.mulf %204, %171 : vector<8x32xf32>
    %208 = arith.mulf %203, %205 : vector<8x32xf32>
    %209 = arith.addf %207, %208 : vector<8x32xf32>
    %210 = math.tanh %209 : vector<8x32xf32>
    %211 = arith.mulf %206, %210 : vector<8x32xf32>
    %c0_50 = arith.constant 0 : index
    %c128 = arith.constant 128 : index
    %212 = vector.load %arg8[%c0_50, %c128] : memref<8x256xf32, #tpu.memory_space<vmem>>, vector<8x32xf32>
    tpu.vector_store %arg8[%c0_50, %c128], %211 {strides = array<i32>} : memref<8x256xf32, #tpu.memory_space<vmem>>, vector<8x32xf32>,
    %213 = vector.extract_strided_slice %16 {offsets = [40, 0], sizes = [8, 128], strides = [1, 1]} : vector<64x128xf32> to vector<8x128xf32>
    %cst_51 = arith.constant dense<0.000000e+00> : vector<8x128xf32>
    %214 = tpu.matmul %192, %10, %cst_51 {dimension_numbers = #tpu.dot_dimension_numbers<[1], [0], [0], [1], [0, 0, 1, 1], [], []>} : vector<8x32xf32>, vector<32x128xf32>, vector<8x128xf32> -> vector<8x128xf32>
    %215 = arith.addf %213, %214 : vector<8x128xf32>
    %216 = arith.negf %215 : vector<8x128xf32>
    %217 = math.exp %216 : vector<8x128xf32>
    %cst_52 = arith.constant 1.000000e+00 : f32
    %218 = vector.broadcast %cst_52 : f32 to vector<8x128xf32>
    %219 = arith.addf %218, %217 : vector<8x128xf32>
    %220 = arith.divf %218, %219 : vector<8x128xf32>
    %221 = math.tanh %215 : vector<8x128xf32>
    %222 = vector.extract_strided_slice %220 {offsets = [0, 0], sizes = [8, 32], strides = [1, 1]} : vector<8x128xf32> to vector<8x32xf32>
    %223 = vector.extract_strided_slice %220 {offsets = [0, 32], sizes = [8, 32], strides = [1, 1]} : vector<8x128xf32> to vector<8x32xf32>
    %224 = vector.extract_strided_slice %221 {offsets = [0, 64], sizes = [8, 32], strides = [1, 1]} : vector<8x128xf32> to vector<8x32xf32>
    %225 = vector.extract_strided_slice %220 {offsets = [0, 96], sizes = [8, 32], strides = [1, 1]} : vector<8x128xf32> to vector<8x32xf32>
    %226 = arith.mulf %223, %190 : vector<8x32xf32>
    %227 = arith.mulf %222, %224 : vector<8x32xf32>
    %228 = arith.addf %226, %227 : vector<8x32xf32>
    %229 = math.tanh %228 : vector<8x32xf32>
    %230 = arith.mulf %225, %229 : vector<8x32xf32>
    %cst_53 = arith.constant dense<0.000000e+00> : vector<8x128xf32>
    %231 = tpu.matmul %230, %9, %cst_53 {dimension_numbers = #tpu.dot_dimension_numbers<[1], [0], [0], [1], [0, 0, 1, 1], [], []>} : vector<8x32xf32>, vector<32x128xf32>, vector<8x128xf32> -> vector<8x128xf32>
    %232 = arith.addf %231, %18 : vector<8x128xf32>
    %cst_54 = arith.constant dense<0.000000e+00> : vector<8x128xf32>
    %233 = tpu.matmul %211, %11, %cst_54 {dimension_numbers = #tpu.dot_dimension_numbers<[1], [0], [0], [1], [0, 0, 1, 1], [], []>} : vector<8x32xf32>, vector<32x128xf32>, vector<8x128xf32> -> vector<8x128xf32>
    %234 = arith.addf %232, %233 : vector<8x128xf32>
    %235 = arith.negf %234 : vector<8x128xf32>
    %236 = math.exp %235 : vector<8x128xf32>
    %cst_55 = arith.constant 1.000000e+00 : f32
    %237 = vector.broadcast %cst_55 : f32 to vector<8x128xf32>
    %238 = arith.addf %237, %236 : vector<8x128xf32>
    %239 = arith.divf %237, %238 : vector<8x128xf32>
    %240 = math.tanh %234 : vector<8x128xf32>
    %241 = vector.extract_strided_slice %239 {offsets = [0, 0], sizes = [8, 32], strides = [1, 1]} : vector<8x128xf32> to vector<8x32xf32>
    %242 = vector.extract_strided_slice %239 {offsets = [0, 32], sizes = [8, 32], strides = [1, 1]} : vector<8x128xf32> to vector<8x32xf32>
    %243 = vector.extract_strided_slice %240 {offsets = [0, 64], sizes = [8, 32], strides = [1, 1]} : vector<8x128xf32> to vector<8x32xf32>
    %244 = vector.extract_strided_slice %239 {offsets = [0, 96], sizes = [8, 32], strides = [1, 1]} : vector<8x128xf32> to vector<8x32xf32>
    %245 = arith.mulf %242, %209 : vector<8x32xf32>
    %246 = arith.mulf %241, %243 : vector<8x32xf32>
    %247 = arith.addf %245, %246 : vector<8x32xf32>
    %248 = math.tanh %247 : vector<8x32xf32>
    %249 = arith.mulf %244, %248 : vector<8x32xf32>
    %c0_56 = arith.constant 0 : index
    %c160 = arith.constant 160 : index
    %250 = vector.load %arg8[%c0_56, %c160] : memref<8x256xf32, #tpu.memory_space<vmem>>, vector<8x32xf32>
    tpu.vector_store %arg8[%c0_56, %c160], %249 {strides = array<i32>} : memref<8x256xf32, #tpu.memory_space<vmem>>, vector<8x32xf32>,
    %251 = vector.extract_strided_slice %16 {offsets = [48, 0], sizes = [8, 128], strides = [1, 1]} : vector<64x128xf32> to vector<8x128xf32>
    %cst_57 = arith.constant dense<0.000000e+00> : vector<8x128xf32>
    %252 = tpu.matmul %230, %10, %cst_57 {dimension_numbers = #tpu.dot_dimension_numbers<[1], [0], [0], [1], [0, 0, 1, 1], [], []>} : vector<8x32xf32>, vector<32x128xf32>, vector<8x128xf32> -> vector<8x128xf32>
    %253 = arith.addf %251, %252 : vector<8x128xf32>
    %254 = arith.negf %253 : vector<8x128xf32>
    %255 = math.exp %254 : vector<8x128xf32>
    %cst_58 = arith.constant 1.000000e+00 : f32
    %256 = vector.broadcast %cst_58 : f32 to vector<8x128xf32>
    %257 = arith.addf %256, %255 : vector<8x128xf32>
    %258 = arith.divf %256, %257 : vector<8x128xf32>
    %259 = math.tanh %253 : vector<8x128xf32>
    %260 = vector.extract_strided_slice %258 {offsets = [0, 0], sizes = [8, 32], strides = [1, 1]} : vector<8x128xf32> to vector<8x32xf32>
    %261 = vector.extract_strided_slice %258 {offsets = [0, 32], sizes = [8, 32], strides = [1, 1]} : vector<8x128xf32> to vector<8x32xf32>
    %262 = vector.extract_strided_slice %259 {offsets = [0, 64], sizes = [8, 32], strides = [1, 1]} : vector<8x128xf32> to vector<8x32xf32>
    %263 = vector.extract_strided_slice %258 {offsets = [0, 96], sizes = [8, 32], strides = [1, 1]} : vector<8x128xf32> to vector<8x32xf32>
    %264 = arith.mulf %261, %228 : vector<8x32xf32>
    %265 = arith.mulf %260, %262 : vector<8x32xf32>
    %266 = arith.addf %264, %265 : vector<8x32xf32>
    %267 = math.tanh %266 : vector<8x32xf32>
    %268 = arith.mulf %263, %267 : vector<8x32xf32>
    %cst_59 = arith.constant dense<0.000000e+00> : vector<8x128xf32>
    %269 = tpu.matmul %268, %9, %cst_59 {dimension_numbers = #tpu.dot_dimension_numbers<[1], [0], [0], [1], [0, 0, 1, 1], [], []>} : vector<8x32xf32>, vector<32x128xf32>, vector<8x128xf32> -> vector<8x128xf32>
    %270 = arith.addf %269, %18 : vector<8x128xf32>
    %cst_60 = arith.constant dense<0.000000e+00> : vector<8x128xf32>
    %271 = tpu.matmul %249, %11, %cst_60 {dimension_numbers = #tpu.dot_dimension_numbers<[1], [0], [0], [1], [0, 0, 1, 1], [], []>} : vector<8x32xf32>, vector<32x128xf32>, vector<8x128xf32> -> vector<8x128xf32>
    %272 = arith.addf %270, %271 : vector<8x128xf32>
    %273 = arith.negf %272 : vector<8x128xf32>
    %274 = math.exp %273 : vector<8x128xf32>
    %cst_61 = arith.constant 1.000000e+00 : f32
    %275 = vector.broadcast %cst_61 : f32 to vector<8x128xf32>
    %276 = arith.addf %275, %274 : vector<8x128xf32>
    %277 = arith.divf %275, %276 : vector<8x128xf32>
    %278 = math.tanh %272 : vector<8x128xf32>
    %279 = vector.extract_strided_slice %277 {offsets = [0, 0], sizes = [8, 32], strides = [1, 1]} : vector<8x128xf32> to vector<8x32xf32>
    %280 = vector.extract_strided_slice %277 {offsets = [0, 32], sizes = [8, 32], strides = [1, 1]} : vector<8x128xf32> to vector<8x32xf32>
    %281 = vector.extract_strided_slice %278 {offsets = [0, 64], sizes = [8, 32], strides = [1, 1]} : vector<8x128xf32> to vector<8x32xf32>
    %282 = vector.extract_strided_slice %277 {offsets = [0, 96], sizes = [8, 32], strides = [1, 1]} : vector<8x128xf32> to vector<8x32xf32>
    %283 = arith.mulf %280, %247 : vector<8x32xf32>
    %284 = arith.mulf %279, %281 : vector<8x32xf32>
    %285 = arith.addf %283, %284 : vector<8x32xf32>
    %286 = math.tanh %285 : vector<8x32xf32>
    %287 = arith.mulf %282, %286 : vector<8x32xf32>
    %c0_62 = arith.constant 0 : index
    %c192 = arith.constant 192 : index
    %288 = vector.load %arg8[%c0_62, %c192] : memref<8x256xf32, #tpu.memory_space<vmem>>, vector<8x32xf32>
    tpu.vector_store %arg8[%c0_62, %c192], %287 {strides = array<i32>} : memref<8x256xf32, #tpu.memory_space<vmem>>, vector<8x32xf32>,
    %289 = vector.extract_strided_slice %16 {offsets = [56, 0], sizes = [8, 128], strides = [1, 1]} : vector<64x128xf32> to vector<8x128xf32>
    %cst_63 = arith.constant dense<0.000000e+00> : vector<8x128xf32>
    %290 = tpu.matmul %268, %10, %cst_63 {dimension_numbers = #tpu.dot_dimension_numbers<[1], [0], [0], [1], [0, 0, 1, 1], [], []>} : vector<8x32xf32>, vector<32x128xf32>, vector<8x128xf32> -> vector<8x128xf32>
    %291 = arith.addf %289, %290 : vector<8x128xf32>
    %292 = arith.negf %291 : vector<8x128xf32>
    %293 = math.exp %292 : vector<8x128xf32>
    %cst_64 = arith.constant 1.000000e+00 : f32
    %294 = vector.broadcast %cst_64 : f32 to vector<8x128xf32>
    %295 = arith.addf %294, %293 : vector<8x128xf32>
    %296 = arith.divf %294, %295 : vector<8x128xf32>
    %297 = math.tanh %291 : vector<8x128xf32>
    %298 = vector.extract_strided_slice %296 {offsets = [0, 0], sizes = [8, 32], strides = [1, 1]} : vector<8x128xf32> to vector<8x32xf32>
    %299 = vector.extract_strided_slice %296 {offsets = [0, 32], sizes = [8, 32], strides = [1, 1]} : vector<8x128xf32> to vector<8x32xf32>
    %300 = vector.extract_strided_slice %297 {offsets = [0, 64], sizes = [8, 32], strides = [1, 1]} : vector<8x128xf32> to vector<8x32xf32>
    %301 = vector.extract_strided_slice %296 {offsets = [0, 96], sizes = [8, 32], strides = [1, 1]} : vector<8x128xf32> to vector<8x32xf32>
    %302 = arith.mulf %299, %266 : vector<8x32xf32>
    %303 = arith.mulf %298, %300 : vector<8x32xf32>
    %304 = arith.addf %302, %303 : vector<8x32xf32>
    %305 = math.tanh %304 : vector<8x32xf32>
    %306 = arith.mulf %301, %305 : vector<8x32xf32>
    %cst_65 = arith.constant dense<0.000000e+00> : vector<8x128xf32>
    %307 = tpu.matmul %306, %9, %cst_65 {dimension_numbers = #tpu.dot_dimension_numbers<[1], [0], [0], [1], [0, 0, 1, 1], [], []>} : vector<8x32xf32>, vector<32x128xf32>, vector<8x128xf32> -> vector<8x128xf32>
    %308 = arith.addf %307, %18 : vector<8x128xf32>
    %cst_66 = arith.constant dense<0.000000e+00> : vector<8x128xf32>
    %309 = tpu.matmul %287, %11, %cst_66 {dimension_numbers = #tpu.dot_dimension_numbers<[1], [0], [0], [1], [0, 0, 1, 1], [], []>} : vector<8x32xf32>, vector<32x128xf32>, vector<8x128xf32> -> vector<8x128xf32>
    %310 = arith.addf %308, %309 : vector<8x128xf32>
    %311 = arith.negf %310 : vector<8x128xf32>
    %312 = math.exp %311 : vector<8x128xf32>
    %cst_67 = arith.constant 1.000000e+00 : f32
    %313 = vector.broadcast %cst_67 : f32 to vector<8x128xf32>
    %314 = arith.addf %313, %312 : vector<8x128xf32>
    %315 = arith.divf %313, %314 : vector<8x128xf32>
    %316 = math.tanh %310 : vector<8x128xf32>
    %317 = vector.extract_strided_slice %315 {offsets = [0, 0], sizes = [8, 32], strides = [1, 1]} : vector<8x128xf32> to vector<8x32xf32>
    %318 = vector.extract_strided_slice %315 {offsets = [0, 32], sizes = [8, 32], strides = [1, 1]} : vector<8x128xf32> to vector<8x32xf32>
    %319 = vector.extract_strided_slice %316 {offsets = [0, 64], sizes = [8, 32], strides = [1, 1]} : vector<8x128xf32> to vector<8x32xf32>
    %320 = vector.extract_strided_slice %315 {offsets = [0, 96], sizes = [8, 32], strides = [1, 1]} : vector<8x128xf32> to vector<8x32xf32>
    %321 = arith.mulf %318, %285 : vector<8x32xf32>
    %322 = arith.mulf %317, %319 : vector<8x32xf32>
    %323 = arith.addf %321, %322 : vector<8x32xf32>
    %324 = math.tanh %323 : vector<8x32xf32>
    %325 = arith.mulf %320, %324 : vector<8x32xf32>
    %c0_68 = arith.constant 0 : index
    %c224 = arith.constant 224 : index
    %326 = vector.load %arg8[%c0_68, %c224] : memref<8x256xf32, #tpu.memory_space<vmem>>, vector<8x32xf32>
    tpu.vector_store %arg8[%c0_68, %c224], %325 {strides = array<i32>} : memref<8x256xf32, #tpu.memory_space<vmem>>, vector<8x32xf32>,
    return
  }
}

</mosaic_0001>

<llo_original>
// kernel: squeeze.3
$region0: #{squeeze.3}
  %s0 = inlined_call_operand.vmem [shape: f32[2,256], index: 0, kind: input, shape index: {}]
  %s1 = inlined_call_operand.hbm [shape: f32[2,8,32], index: 1, kind: output, shape index: {}]
  $region1: #{squeeze.3} parent=0
    #allocation0 [shape = 'u8[8192]{0}', space=vmem, size = 0x2000, scoped, tag = 'operand span for operand 1']
    #allocation1 [shape = 's32[1]{0}', space=sflag, size = 0x4, scoped, tag = 'scoped memory for squeeze.3']
    #allocation2 [shape = 'u8[8192]{0}', space=vmem, size = 0x2000, scoped, tag = 'scoped mem for input reshape']
    %2 = vsyncpa [#allocation1], 0
    %s4 = sshllo.u32 0, 2
    %s5 = scalar_lea.vmem %s0, 2
    %v6 = vld [vmem:[%s5] sm:%s4]
    %s7 = scalar_lea.vmem [#allocation2], 8
    %8 = vst [vmem:[%s7] sm:%s4] %v6
    %v9 = vld [vmem:[%s0] sm:%s4]
    %10 = vst [vmem:[#allocation2] sm:%s4] %v9
    %v11 = vld [vmem:[#allocation2] sm:$0x3]
    %vm12 = vcmask 261120
    %13 = vst.msk [vmem:[#allocation0] ss:$8 sm:$0x3] %vm12, %v11
    %s14 = scalar_lea.vmem [#allocation2], 8
    %v15 = vld [vmem:[%s14] sm:$0x3]
    %vm16 = vcmask 261120
    %s17 = scalar_lea.vmem [#allocation0], 4
    %18 = vst.msk [vmem:[%s17] ss:$8 sm:$0x3] %vm16, %v15
    %v19 = vld.sshfl [vmem:[#allocation2] sm:$0xff pattern:$0x99999180]
    %20 = vrot.lane.b32.xlu0 %v19, 96
    %v21 = vpop.permute.xlu0 %20
    %vm22 = vcmask 261120
    %s23 = scalar_lea.vmem [#allocation0], 1
    %24 = vst.msk [vmem:[%s23] ss:$4 sm:$0xf] %vm22, %v21
    %v25 = vld.sshfl [vmem:[#allocation2] sm:$0xff pattern:$0x99999180]
    %26 = vrot.lane.b32.xlu0 %v25, 64
    %v27 = vpop.permute.xlu0 %26
    %vm28 = vcmask 261120
    %s29 = scalar_lea.vmem [#allocation0], 2
    %30 = vst.msk [vmem:[%s29] ss:$4 sm:$0xf] %vm28, %v27
    %v31 = vld.sshfl [vmem:[#allocation2] sm:$0xff pattern:$0x99999180]
    %32 = vrot.lane.b32.xlu0 %v31, 32
    %v33 = vpop.permute.xlu0 %32
    %vm34 = vcmask 261120
    %s35 = scalar_lea.vmem [#allocation0], 3
    %36 = vst.msk [vmem:[%s35] ss:$4 sm:$0xf] %vm34, %v33
    %s38 = ssub.s32 256, 256
    %39 = vsyncadd [#allocation1], %s38
    %s41 = sshll.u32 [#allocation0], 4
    %s42 = int_to_ptr.vmem [resolvable:$true] %s41
    %44 = dma.vmem_to_hbm [thread:$0]  %s42, 256, %s1, [#allocation1]
    %45 = dma.done [#allocation1], 256
    %46 = vsyncpa [#allocation1], 1

// kernel: forward.1
$region0: #{forward.1}
  #allocation0 [shape = 'u32[]', space=smem, size = 0x4, offset = 0x4, fixed_abs, tag = 'smem constant byte address 0x4 - core index']
  #allocation1 [shape = 'u32[144,128]{1,0:T(1,128)}', space=vmem, size = 0x12000, scoped, tag = 'internal scratch']
  %s0 = inlined_call_operand.vmem [shape: s32[64,1], index: 0, kind: input, shape index: {}]
  %s1 = inlined_call_operand.vmem [shape: f32[1024,128], index: 1, kind: input, shape index: {}]
  %s2 = inlined_call_operand.vmem [shape: f32[128,128], index: 2, kind: input, shape index: {}]
  %s3 = inlined_call_operand.vmem [shape: f32[32,128], index: 3, kind: input, shape index: {}]
  %s4 = inlined_call_operand.vmem [shape: f32[1,128], index: 4, kind: input, shape index: {}]
  %s5 = inlined_call_operand.vmem [shape: f32[32,128], index: 5, kind: input, shape index: {}]
  %s6 = inlined_call_operand.vmem [shape: f32[32,128], index: 6, kind: input, shape index: {}]
  %s7 = inlined_call_operand.vmem [shape: f32[1,128], index: 7, kind: input, shape index: {}]
  %s8 = inlined_call_operand.vmem [shape: f32[8,256], index: 8, kind: output, shape index: {}]
  %s9 = sld [smem:[#allocation0]]
  $region42: #{forward.1} parent=0
    _
  %s11 = ssub.s32 1, %s9
  %s12 = scalar_select 0, %s11, %s9
  // Predicated region
  $region2: #{forward.1} parent=0 // pred_check
    _
  $region3: #{forward.1} parent=0 // pred_check_branch
    %14 = sbr.rel (0) target = $region5
  $region4: #{forward.1} parent=0 // pred_region
    _
  $region5: #{forward.1} parent=0 // pred_fallthru
    _
  // Predicated region
  $region6: #{forward.1} parent=0 // pred_check
    _
  $region7: #{forward.1} parent=0 // pred_check_branch
    %16 = sbr.rel (0) target = $region9
  $region8: #{forward.1} parent=0 // pred_region
    _
  $region9: #{forward.1} parent=0 // pred_fallthru
    _
  // Predicated region
  $region10: #{forward.1} parent=0 // pred_check
    _
  $region11: #{forward.1} parent=0 // pred_check_branch
    %18 = sbr.rel (0) target = $region13
  $region12: #{forward.1} parent=0 // pred_region
    _
  $region13: #{forward.1} parent=0 // pred_fallthru
    _
  // Predicated region
  $region14: #{forward.1} parent=0 // pred_check
    _
  $region15: #{forward.1} parent=0 // pred_check_branch
    %20 = sbr.rel (0) target = $region17
  $region16: #{forward.1} parent=0 // pred_region
    _
  $region17: #{forward.1} parent=0 // pred_fallthru
    _
  // Predicated region
  $region18: #{forward.1} parent=0 // pred_check
    _
  $region19: #{forward.1} parent=0 // pred_check_branch
    %22 = sbr.rel (0) target = $region21
  $region20: #{forward.1} parent=0 // pred_region
    _
  $region21: #{forward.1} parent=0 // pred_fallthru
    _
  // Predicated region
  $region22: #{forward.1} parent=0 // pred_check
    _
  $region23: #{forward.1} parent=0 // pred_check_branch
    %24 = sbr.rel (0) target = $region25
  $region24: #{forward.1} parent=0 // pred_region
    _
  $region25: #{forward.1} parent=0 // pred_fallthru
    _
  // Predicated region
  $region26: #{forward.1} parent=0 // pred_check
    _
  $region27: #{forward.1} parent=0 // pred_check_branch
    %26 = sbr.rel (0) target = $region29
  $region28: #{forward.1} parent=0 // pred_region
    _
  $region29: #{forward.1} parent=0 // pred_fallthru
    _
  // Predicated region
  $region30: #{forward.1} parent=0 // pred_check
    _
  $region31: #{forward.1} parent=0 // pred_check_branch
    %28 = sbr.rel (0) target = $region33
  $region32: #{forward.1} parent=0 // pred_region
    _
  $region33: #{forward.1} parent=0 // pred_fallthru
    _
  %v29 = vld [vmem:[%s0] sm:$0xff]
  %v30 = vld [vmem:[%s0 + $0x8] sm:$0xff]
  %v31 = vld [vmem:[%s0 + $0x10] sm:$0xff]
  %v32 = vld [vmem:[%s0 + $0x18] sm:$0xff]
  %v33 = vld [vmem:[%s0 + $0x20] sm:$0xff]
  %v34 = vld [vmem:[%s0 + $0x28] sm:$0xff]
  %v35 = vld [vmem:[%s0 + $0x30] sm:$0xff]
  %v36 = vld [vmem:[%s0 + $0x38] sm:$0xff]
  %v37 = vlaneseq
  %v38 = vand.u32 %v37, 127
  %v39 = vadd.s32 %v38, 128
  %v40 = vadd.s32 %v38, 256
  %v41 = vadd.s32 %v38, 384
  %v42 = vadd.s32 %v38, 512
  %v43 = vadd.s32 %v38, 640
  %v44 = vadd.s32 %v38, 768
  %v45 = vadd.s32 %v38, 896
  %46 = vset.pattern.permute.xlu0 0
  %47 = vperm.xlu0 %46, %v29
  %v48 = vpop.permute.xlu0 %47
  %49 = vset.pattern.permute.xlu0 0
  %50 = vperm.xlu0 %49, %v30
  %v51 = vpop.permute.xlu0 %50
  %52 = vset.pattern.permute.xlu0 0
  %53 = vperm.xlu0 %52, %v31
  %v54 = vpop.permute.xlu0 %53
  %55 = vset.pattern.permute.xlu0 0
  %56 = vperm.xlu0 %55, %v32
  %v57 = vpop.permute.xlu0 %56
  %58 = vset.pattern.permute.xlu0 0
  %59 = vperm.xlu0 %58, %v33
  %v60 = vpop.permute.xlu0 %59
  %61 = vset.pattern.permute.xlu0 0
  %62 = vperm.xlu0 %61, %v34
  %v63 = vpop.permute.xlu0 %62
  %64 = vset.pattern.permute.xlu0 0
  %65 = vperm.xlu0 %64, %v35
  %v66 = vpop.permute.xlu0 %65
  %67 = vset.pattern.permute.xlu0 0
  %68 = vperm.xlu0 %67, %v36
  %v69 = vpop.permute.xlu0 %68
  %vm70 = vcmp.eq.s32.totalorder %v48, %v38
  %vm71 = vcmp.eq.s32.totalorder %v48, %v39
  %vm72 = vcmp.eq.s32.totalorder %v48, %v40
  %vm73 = vcmp.eq.s32.totalorder %v48, %v41
  %vm74 = vcmp.eq.s32.totalorder %v48, %v42
  %vm75 = vcmp.eq.s32.totalorder %v48, %v43
  %vm76 = vcmp.eq.s32.totalorder %v48, %v44
  %vm77 = vcmp.eq.s32.totalorder %v48, %v45
  %vm78 = vcmp.eq.s32.totalorder %v51, %v38
  %vm79 = vcmp.eq.s32.totalorder %v51, %v39
  %vm80 = vcmp.eq.s32.totalorder %v51, %v40
  %vm81 = vcmp.eq.s32.totalorder %v51, %v41
  %vm82 = vcmp.eq.s32.totalorder %v51, %v42
  %vm83 = vcmp.eq.s32.totalorder %v51, %v43
  %vm84 = vcmp.eq.s32.totalorder %v51, %v44
  %vm85 = vcmp.eq.s32.totalorder %v51, %v45
  %vm86 = vcmp.eq.s32.totalorder %v54, %v38
  %vm87 = vcmp.eq.s32.totalorder %v54, %v39
  %vm88 = vcmp.eq.s32.totalorder %v54, %v40
  %vm89 = vcmp.eq.s32.totalorder %v54, %v41
  %vm90 = vcmp.eq.s32.totalorder %v54, %v42
  %vm91 = vcmp.eq.s32.totalorder %v54, %v43
  %vm92 = vcmp.eq.s32.totalorder %v54, %v44
  %vm93 = vcmp.eq.s32.totalorder %v54, %v45
  %vm94 = vcmp.eq.s32.totalorder %v57, %v38
  %vm95 = vcmp.eq.s32.totalorder %v57, %v39
  %vm96 = vcmp.eq.s32.totalorder %v57, %v40
  %vm97 = vcmp.eq.s32.totalorder %v57, %v41
  %vm98 = vcmp.eq.s32.totalorder %v57, %v42
  %vm99 = vcmp.eq.s32.totalorder %v57, %v43
  %vm100 = vcmp.eq.s32.totalorder %v57, %v44
  %vm101 = vcmp.eq.s32.totalorder %v57, %v45
  %vm102 = vcmp.eq.s32.totalorder %v60, %v38
  %vm103 = vcmp.eq.s32.totalorder %v60, %v39
  %vm104 = vcmp.eq.s32.totalorder %v60, %v40
  %vm105 = vcmp.eq.s32.totalorder %v60, %v41
  %vm106 = vcmp.eq.s32.totalorder %v60, %v42
  %vm107 = vcmp.eq.s32.totalorder %v60, %v43
  %vm108 = vcmp.eq.s32.totalorder %v60, %v44
  %vm109 = vcmp.eq.s32.totalorder %v60, %v45
  %vm110 = vcmp.eq.s32.totalorder %v63, %v38
  %vm111 = vcmp.eq.s32.totalorder %v63, %v39
  %vm112 = vcmp.eq.s32.totalorder %v63, %v40
  %vm113 = vcmp.eq.s32.totalorder %v63, %v41
  %vm114 = vcmp.eq.s32.totalorder %v63, %v42
  %vm115 = vcmp.eq.s32.totalorder %v63, %v43
  %vm116 = vcmp.eq.s32.totalorder %v63, %v44
  %vm117 = vcmp.eq.s32.totalorder %v63, %v45
  %vm118 = vcmp.eq.s32.totalorder %v66, %v38
  %vm119 = vcmp.eq.s32.totalorder %v66, %v39
  %vm120 = vcmp.eq.s32.totalorder %v66, %v40
  %vm121 = vcmp.eq.s32.totalorder %v66, %v41
  %vm122 = vcmp.eq.s32.totalorder %v66, %v42
  %vm123 = vcmp.eq.s32.totalorder %v66, %v43
  %vm124 = vcmp.eq.s32.totalorder %v66, %v44
  %vm125 = vcmp.eq.s32.totalorder %v66, %v45
  %vm126 = vcmp.eq.s32.totalorder %v69, %v38
  %vm127 = vcmp.eq.s32.totalorder %v69, %v39
  %vm128 = vcmp.eq.s32.totalorder %v69, %v40
  %vm129 = vcmp.eq.s32.totalorder %v69, %v41
  %vm130 = vcmp.eq.s32.totalorder %v69, %v42
  %vm131 = vcmp.eq.s32.totalorder %v69, %v43
  %vm132 = vcmp.eq.s32.totalorder %v69, %v44
  %vm133 = vcmp.eq.s32.totalorder %v69, %v45
  %v134 = vsel %vm70, 1, 0
  %v135 = vsel %vm71, 1, 0
  %v136 = vsel %vm72, 1, 0
  %v137 = vsel %vm73, 1, 0
  %v138 = vsel %vm74, 1, 0
  %v139 = vsel %vm75, 1, 0
  %v140 = vsel %vm76, 1, 0
  %v141 = vsel %vm77, 1, 0
  %v142 = vsel %vm78, 1, 0
  %v143 = vsel %vm79, 1, 0
  %v144 = vsel %vm80, 1, 0
  %v145 = vsel %vm81, 1, 0
  %v146 = vsel %vm82, 1, 0
  %v147 = vsel %vm83, 1, 0
  %v148 = vsel %vm84, 1, 0
  %v149 = vsel %vm85, 1, 0
  %v150 = vsel %vm86, 1, 0
  %v151 = vsel %vm87, 1, 0
  %v152 = vsel %vm88, 1, 0
  %v153 = vsel %vm89, 1, 0
  %v154 = vsel %vm90, 1, 0
  %v155 = vsel %vm91, 1, 0
  %v156 = vsel %vm92, 1, 0
  %v157 = vsel %vm93, 1, 0
  %v158 = vsel %vm94, 1, 0
  %v159 = vsel %vm95, 1, 0
  %v160 = vsel %vm96, 1, 0
  %v161 = vsel %vm97, 1, 0
  %v162 = vsel %vm98, 1, 0
  %v163 = vsel %vm99, 1, 0
  %v164 = vsel %vm100, 1, 0
  %v165 = vsel %vm101, 1, 0
  %v166 = vsel %vm102, 1, 0
  %v167 = vsel %vm103, 1, 0
  %v168 = vsel %vm104, 1, 0
  %v169 = vsel %vm105, 1, 0
  %v170 = vsel %vm106, 1, 0
  %v171 = vsel %vm107, 1, 0
  %v172 = vsel %vm108, 1, 0
  %v173 = vsel %vm109, 1, 0
  %v174 = vsel %vm110, 1, 0
  %v175 = vsel %vm111, 1, 0
  %v176 = vsel %vm112, 1, 0
  %v177 = vsel %vm113, 1, 0
  %v178 = vsel %vm114, 1, 0
  %v179 = vsel %vm115, 1, 0
  %v180 = vsel %vm116, 1, 0
  %v181 = vsel %vm117, 1, 0
  %v182 = vsel %vm118, 1, 0
  %v183 = vsel %vm119, 1, 0
  %v184 = vsel %vm120, 1, 0
  %v185 = vsel %vm121, 1, 0
  %v186 = vsel %vm122, 1, 0
  %v187 = vsel %vm123, 1, 0
  %v188 = vsel %vm124, 1, 0
  %v189 = vsel %vm125, 1, 0
  %v190 = vsel %vm126, 1, 0
  %v191 = vsel %vm127, 1, 0
  %v192 = vsel %vm128, 1, 0
  %v193 = vsel %vm129, 1, 0
  %v194 = vsel %vm130, 1, 0
  %v195 = vsel %vm131, 1, 0
  %v196 = vsel %vm132, 1, 0
  %v197 = vsel %vm133, 1, 0
  %v198 = vcvt.s32.f32 %v134
  %v199 = vcvt.s32.f32 %v135
  %v200 = vcvt.s32.f32 %v136
  %v201 = vcvt.s32.f32 %v137
  %v202 = vcvt.s32.f32 %v138
  %v203 = vcvt.s32.f32 %v139
  %v204 = vcvt.s32.f32 %v140
  %v205 = vcvt.s32.f32 %v141
  %v206 = vcvt.s32.f32 %v142
  %v207 = vcvt.s32.f32 %v143
  %v208 = vcvt.s32.f32 %v144
  %v209 = vcvt.s32.f32 %v145
  %v210 = vcvt.s32.f32 %v146
  %v211 = vcvt.s32.f32 %v147
  %v212 = vcvt.s32.f32 %v148
  %v213 = vcvt.s32.f32 %v149
  %v214 = vcvt.s32.f32 %v150
  %v215 = vcvt.s32.f32 %v151
  %v216 = vcvt.s32.f32 %v152
  %v217 = vcvt.s32.f32 %v153
  %v218 = vcvt.s32.f32 %v154
  %v219 = vcvt.s32.f32 %v155
  %v220 = vcvt.s32.f32 %v156
  %v221 = vcvt.s32.f32 %v157
  %v222 = vcvt.s32.f32 %v158
  %v223 = vcvt.s32.f32 %v159
  %v224 = vcvt.s32.f32 %v160
  %v225 = vcvt.s32.f32 %v161
  %v226 = vcvt.s32.f32 %v162
  %v227 = vcvt.s32.f32 %v163
  %v228 = vcvt.s32.f32 %v164
  %v229 = vcvt.s32.f32 %v165
  %v230 = vcvt.s32.f32 %v166
  %v231 = vcvt.s32.f32 %v167
  %v232 = vcvt.s32.f32 %v168
  %v233 = vcvt.s32.f32 %v169
  %v234 = vcvt.s32.f32 %v170
  %v235 = vcvt.s32.f32 %v171
  %v236 = vcvt.s32.f32 %v172
  %v237 = vcvt.s32.f32 %v173
  %v238 = vcvt.s32.f32 %v174
  %v239 = vcvt.s32.f32 %v175
  %v240 = vcvt.s32.f32 %v176
  %v241 = vcvt.s32.f32 %v177
  %v242 = vcvt.s32.f32 %v178
  %v243 = vcvt.s32.f32 %v179
  %v244 = vcvt.s32.f32 %v180
  %v245 = vcvt.s32.f32 %v181
  %v246 = vcvt.s32.f32 %v182
  %v247 = vcvt.s32.f32 %v183
  %v248 = vcvt.s32.f32 %v184
  %v249 = vcvt.s32.f32 %v185
  %v250 = vcvt.s32.f32 %v186
  %v251 = vcvt.s32.f32 %v187
  %v252 = vcvt.s32.f32 %v188
  %v253 = vcvt.s32.f32 %v189
  %v254 = vcvt.s32.f32 %v190
  %v255 = vcvt.s32.f32 %v191
  %v256 = vcvt.s32.f32 %v192
  %v257 = vcvt.s32.f32 %v193
  %v258 = vcvt.s32.f32 %v194
  %v259 = vcvt.s32.f32 %v195
  %v260 = vcvt.s32.f32 %v196
  %v261 = vcvt.s32.f32 %v197
  %v262 = vld [vmem:[%s1] sm:$0xff]
  %v263 = vld [vmem:[%s1 + $0x8] sm:$0xff]
  %v264 = vld [vmem:[%s1 + $0x10] sm:$0xff]
  %v265 = vld [vmem:[%s1 + $0x18] sm:$0xff]
  %v266 = vld [vmem:[%s1 + $0x20] sm:$0xff]
  %v267 = vld [vmem:[%s1 + $0x28] sm:$0xff]
  %v268 = vld [vmem:[%s1 + $0x30] sm:$0xff]
  %v269 = vld [vmem:[%s1 + $0x38] sm:$0xff]
  %v270 = vld [vmem:[%s1 + $0x40] sm:$0xff]
  %v271 = vld [vmem:[%s1 + $0x48] sm:$0xff]
  %v272 = vld [vmem:[%s1 + $0x50] sm:$0xff]
  %v273 = vld [vmem:[%s1 + $0x58] sm:$0xff]
  %v274 = vld [vmem:[%s1 + $0x60] sm:$0xff]
  %v275 = vld [vmem:[%s1 + $0x68] sm:$0xff]
  %v276 = vld [vmem:[%s1 + $0x70] sm:$0xff]
  %v277 = vld [vmem:[%s1 + $0x78] sm:$0xff]
  %v278 = vld [vmem:[%s1 + $0x80] sm:$0xff]
  %v279 = vld [vmem:[%s1 + $0x88] sm:$0xff]
  %v280 = vld [vmem:[%s1 + $0x90] sm:$0xff]
  %v281 = vld [vmem:[%s1 + $0x98] sm:$0xff]
  %v282 = vld [vmem:[%s1 + $0xa0] sm:$0xff]
  %v283 = vld [vmem:[%s1 + $0xa8] sm:$0xff]
  %v284 = vld [vmem:[%s1 + $0xb0] sm:$0xff]
  %v285 = vld [vmem:[%s1 + $0xb8] sm:$0xff]
  %v286 = vld [vmem:[%s1 + $0xc0] sm:$0xff]
  %v287 = vld [vmem:[%s1 + $0xc8] sm:$0xff]
  %v288 = vld [vmem:[%s1 + $0xd0] sm:$0xff]
  %v289 = vld [vmem:[%s1 + $0xd8] sm:$0xff]
  %v290 = vld [vmem:[%s1 + $0xe0] sm:$0xff]
  %v291 = vld [vmem:[%s1 + $0xe8] sm:$0xff]
  %v292 = vld [vmem:[%s1 + $0xf0] sm:$0xff]
  %v293 = vld [vmem:[%s1 + $0xf8] sm:$0xff]
  %v294 = vld [vmem:[%s1 + $0x100] sm:$0xff]
  %v295 = vld [vmem:[%s1 + $0x108] sm:$0xff]
  %v296 = vld [vmem:[%s1 + $0x110] sm:$0xff]
  %v297 = vld [vmem:[%s1 + $0x118] sm:$0xff]
  %v298 = vld [vmem:[%s1 + $0x120] sm:$0xff]
  %v299 = vld [vmem:[%s1 + $0x128] sm:$0xff]
  %v300 = vld [vmem:[%s1 + $0x130] sm:$0xff]
  %v301 = vld [vmem:[%s1 + $0x138] sm:$0xff]
  %v302 = vld [vmem:[%s1 + $0x140] sm:$0xff]
  %v303 = vld [vmem:[%s1 + $0x148] sm:$0xff]
  %v304 = vld [vmem:[%s1 + $0x150] sm:$0xff]
  %v305 = vld [vmem:[%s1 + $0x158] sm:$0xff]
  %v306 = vld [vmem:[%s1 + $0x160] sm:$0xff]
  %v307 = vld [vmem:[%s1 + $0x168] sm:$0xff]
  %v308 = vld [vmem:[%s1 + $0x170] sm:$0xff]
  %v309 = vld [vmem:[%s1 + $0x178] sm:$0xff]
  %v310 = vld [vmem:[%s1 + $0x180] sm:$0xff]
  %v311 = vld [vmem:[%s1 + $0x188] sm:$0xff]
  %v312 = vld [vmem:[%s1 + $0x190] sm:$0xff]
  %v313 = vld [vmem:[%s1 + $0x198] sm:$0xff]
  %v314 = vld [vmem:[%s1 + $0x1a0] sm:$0xff]
  %v315 = vld [vmem:[%s1 + $0x1a8] sm:$0xff]
  %v316 = vld [vmem:[%s1 + $0x1b0] sm:$0xff]
  %v317 = vld [vmem:[%s1 + $0x1b8] sm:$0xff]
  %v318 = vld [vmem:[%s1 + $0x1c0] sm:$0xff]
  %v319 = vld [vmem:[%s1 + $0x1c8] sm:$0xff]
  %v320 = vld [vmem:[%s1 + $0x1d0] sm:$0xff]
  %v321 = vld [vmem:[%s1 + $0x1d8] sm:$0xff]
  %v322 = vld [vmem:[%s1 + $0x1e0] sm:$0xff]
  %v323 = vld [vmem:[%s1 + $0x1e8] sm:$0xff]
  %v324 = vld [vmem:[%s1 + $0x1f0] sm:$0xff]
  %v325 = vld [vmem:[%s1 + $0x1f8] sm:$0xff]
  %v326 = vld [vmem:[%s1 + $0x200] sm:$0xff]
  %v327 = vld [vmem:[%s1 + $0x208] sm:$0xff]
  %v328 = vld [vmem:[%s1 + $0x210] sm:$0xff]
  %v329 = vld [vmem:[%s1 + $0x218] sm:$0xff]
  %v330 = vld [vmem:[%s1 + $0x220] sm:$0xff]
  %v331 = vld [vmem:[%s1 + $0x228] sm:$0xff]
  %v332 = vld [vmem:[%s1 + $0x230] sm:$0xff]
  %v333 = vld [vmem:[%s1 + $0x238] sm:$0xff]
  %v334 = vld [vmem:[%s1 + $0x240] sm:$0xff]
  %v335 = vld [vmem:[%s1 + $0x248] sm:$0xff]
  %v336 = vld [vmem:[%s1 + $0x250] sm:$0xff]
  %v337 = vld [vmem:[%s1 + $0x258] sm:$0xff]
  %v338 = vld [vmem:[%s1 + $0x260] sm:$0xff]
  %v339 = vld [vmem:[%s1 + $0x268] sm:$0xff]
  %v340 = vld [vmem:[%s1 + $0x270] sm:$0xff]
  %v341 = vld [vmem:[%s1 + $0x278] sm:$0xff]
  %v342 = vld [vmem:[%s1 + $0x280] sm:$0xff]
  %v343 = vld [vmem:[%s1 + $0x288] sm:$0xff]
  %v344 = vld [vmem:[%s1 + $0x290] sm:$0xff]
  %v345 = vld [vmem:[%s1 + $0x298] sm:$0xff]
  %v346 = vld [vmem:[%s1 + $0x2a0] sm:$0xff]
  %v347 = vld [vmem:[%s1 + $0x2a8] sm:$0xff]
  %v348 = vld [vmem:[%s1 + $0x2b0] sm:$0xff]
  %v349 = vld [vmem:[%s1 + $0x2b8] sm:$0xff]
  %v350 = vld [vmem:[%s1 + $0x2c0] sm:$0xff]
  %v351 = vld [vmem:[%s1 + $0x2c8] sm:$0xff]
  %v352 = vld [vmem:[%s1 + $0x2d0] sm:$0xff]
  %v353 = vld [vmem:[%s1 + $0x2d8] sm:$0xff]
  %v354 = vld [vmem:[%s1 + $0x2e0] sm:$0xff]
  %v355 = vld [vmem:[%s1 + $0x2e8] sm:$0xff]
  %v356 = vld [vmem:[%s1 + $0x2f0] sm:$0xff]
  %v357 = vld [vmem:[%s1 + $0x2f8] sm:$0xff]
  %v358 = vld [vmem:[%s1 + $0x300] sm:$0xff]
  %v359 = vld [vmem:[%s1 + $0x308] sm:$0xff]
  %v360 = vld [vmem:[%s1 + $0x310] sm:$0xff]
  %v361 = vld [vmem:[%s1 + $0x318] sm:$0xff]
  %v362 = vld [vmem:[%s1 + $0x320] sm:$0xff]
  %v363 = vld [vmem:[%s1 + $0x328] sm:$0xff]
  %v364 = vld [vmem:[%s1 + $0x330] sm:$0xff]
  %v365 = vld [vmem:[%s1 + $0x338] sm:$0xff]
  %v366 = vld [vmem:[%s1 + $0x340] sm:$0xff]
  %v367 = vld [vmem:[%s1 + $0x348] sm:$0xff]
  %v368 = vld [vmem:[%s1 + $0x350] sm:$0xff]
  %v369 = vld [vmem:[%s1 + $0x358] sm:$0xff]
  %v370 = vld [vmem:[%s1 + $0x360] sm:$0xff]
  %v371 = vld [vmem:[%s1 + $0x368] sm:$0xff]
  %v372 = vld [vmem:[%s1 + $0x370] sm:$0xff]
  %v373 = vld [vmem:[%s1 + $0x378] sm:$0xff]
  %v374 = vld [vmem:[%s1 + $0x380] sm:$0xff]
  %v375 = vld [vmem:[%s1 + $0x388] sm:$0xff]
  %v376 = vld [vmem:[%s1 + $0x390] sm:$0xff]
  %v377 = vld [vmem:[%s1 + $0x398] sm:$0xff]
  %v378 = vld [vmem:[%s1 + $0x3a0] sm:$0xff]
  %v379 = vld [vmem:[%s1 + $0x3a8] sm:$0xff]
  %v380 = vld [vmem:[%s1 + $0x3b0] sm:$0xff]
  %v381 = vld [vmem:[%s1 + $0x3b8] sm:$0xff]
  %v382 = vld [vmem:[%s1 + $0x3c0] sm:$0xff]
  %v383 = vld [vmem:[%s1 + $0x3c8] sm:$0xff]
  %v384 = vld [vmem:[%s1 + $0x3d0] sm:$0xff]
  %v385 = vld [vmem:[%s1 + $0x3d8] sm:$0xff]
  %v386 = vld [vmem:[%s1 + $0x3e0] sm:$0xff]
  %v387 = vld [vmem:[%s1 + $0x3e8] sm:$0xff]
  %v388 = vld [vmem:[%s1 + $0x3f0] sm:$0xff]
  %v389 = vld [vmem:[%s1 + $0x3f8] sm:$0xff]
  %390 = vmatprep.subr.mxu0 0.0
  %391 = vmatpush1.msra.mxu0 %v262
  %392 = vmatprep.subr.mxu0 0.0
  %393 = vmatpush1.msra.mxu0 %v263
  %394 = vmatprep.subr.mxu0 0.0
  %395 = vmatpush1.msra.mxu0 %v264
  %396 = vmatprep.subr.mxu0 0.0
  %397 = vmatpush1.msra.mxu0 %v265
  %398 = vmatprep.subr.mxu0 0.0
  %399 = vmatpush1.msra.mxu0 %v266
  %400 = vmatprep.subr.mxu0 0.0
  %401 = vmatpush1.msra.mxu0 %v267
  %402 = vmatprep.subr.mxu0 0.0
  %403 = vmatpush1.msra.mxu0 %v268
  %404 = vmatprep.subr.mxu0 0.0
  %405 = vmatpush1.msra.mxu0 %v269
  %406 = vmatprep.subr.mxu0 0.0
  %407 = vmatpush1.msra.mxu0 %v270
  %408 = vmatprep.subr.mxu0 0.0
  %409 = vmatpush1.msra.mxu0 %v271
  %410 = vmatprep.subr.mxu0 0.0
  %411 = vmatpush1.msra.mxu0 %v272
  %412 = vmatprep.subr.mxu0 0.0
  %413 = vmatpush1.msra.mxu0 %v273
  %414 = vmatprep.subr.mxu0 0.0
  %415 = vmatpush1.msra.mxu0 %v274
  %416 = vmatprep.subr.mxu0 0.0
  %417 = vmatpush1.msra.mxu0 %v275
  %418 = vmatprep.subr.mxu0 0.0
  %419 = vmatpush1.msra.mxu0 %v276
  %420 = vmatprep.subr.mxu0 0.0
  %421 = vmatpush1.msra.mxu0 %v277
  %422 = vmatprep.subr.mxu0 0.0
  %423 = vmatpush1.msra.mxu0 %v278
  %424 = vmatprep.subr.mxu0 0.0
  %425 = vmatpush1.msra.mxu0 %v279
  %426 = vmatprep.subr.mxu0 0.0
  %427 = vmatpush1.msra.mxu0 %v280
  %428 = vmatprep.subr.mxu0 0.0
  %429 = vmatpush1.msra.mxu0 %v281
  %430 = vmatprep.subr.mxu0 0.0
  %431 = vmatpush1.msra.mxu0 %v282
  %432 = vmatprep.subr.mxu0 0.0
  %433 = vmatpush1.msra.mxu0 %v283
  %434 = vmatprep.subr.mxu0 0.0
  %435 = vmatpush1.msra.mxu0 %v284
  %436 = vmatprep.subr.mxu0 0.0
  %437 = vmatpush1.msra.mxu0 %v285
  %438 = vmatprep.subr.mxu0 0.0
  %439 = vmatpush1.msra.mxu0 %v286
  %440 = vmatprep.subr.mxu0 0.0
  %441 = vmatpush1.msra.mxu0 %v287
  %442 = vmatprep.subr.mxu0 0.0
  %443 = vmatpush1.msra.mxu0 %v288
  %444 = vmatprep.subr.mxu0 0.0
  %445 = vmatpush1.msra.mxu0 %v289
  %446 = vmatprep.subr.mxu0 0.0
  %447 = vmatpush1.msra.mxu0 %v290
  %448 = vmatprep.subr.mxu0 0.0
  %449 = vmatpush1.msra.mxu0 %v291
  %450 = vmatprep.subr.mxu0 0.0
  %451 = vmatpush1.msra.mxu0 %v292
  %452 = vmatprep.subr.mxu0 0.0
  %453 = vmatpush1.msra.mxu0 %v293
  %454 = vmatprep.mubr.f32.mxu0 %v199
  %455 = vmatmul.mubr.f32.gmra.mrb[0].mxu0 %v198
  %v456 = vpop.f32.mrb[0].mxu0
  %v457 = vadd.f32 0.0, %v456
  %v458 = vpop.f32.mrb[0].mxu0
  %459 = vmatprep.mubr.f32.mxu0 %v207
  %460 = vmatmul.mubr.f32.gmra.mrb[0].mxu0 %v206
  %v461 = vpop.f32.mrb[0].mxu0
  %v462 = vadd.f32 0.0, %v461
  %v463 = vpop.f32.mrb[0].mxu0
  %464 = vmatprep.mubr.f32.mxu0 %v215
  %465 = vmatmul.mubr.f32.gmra.mrb[0].mxu0 %v214
  %v466 = vpop.f32.mrb[0].mxu0
  %v467 = vadd.f32 0.0, %v466
  %v468 = vpop.f32.mrb[0].mxu0
  %469 = vmatprep.mubr.f32.mxu0 %v223
  %470 = vmatmul.mubr.f32.gmra.mrb[0].mxu0 %v222
  %v471 = vpop.f32.mrb[0].mxu0
  %v472 = vadd.f32 0.0, %v471
  %v473 = vpop.f32.mrb[0].mxu0
  %474 = vmatprep.mubr.f32.mxu0 %v231
  %475 = vmatmul.mubr.f32.gmra.mrb[0].mxu0 %v230
  %v476 = vpop.f32.mrb[0].mxu0
  %v477 = vadd.f32 0.0, %v476
  %v478 = vpop.f32.mrb[0].mxu0
  %479 = vmatprep.mubr.f32.mxu0 %v239
  %480 = vmatmul.mubr.f32.gmra.mrb[0].mxu0 %v238
  %v481 = vpop.f32.mrb[0].mxu0
  %v482 = vadd.f32 0.0, %v481
  %v483 = vpop.f32.mrb[0].mxu0
  %484 = vmatprep.mubr.f32.mxu0 %v247
  %485 = vmatmul.mubr.f32.gmra.mrb[0].mxu0 %v246
  %v486 = vpop.f32.mrb[0].mxu0
  %v487 = vadd.f32 0.0, %v486
  %v488 = vpop.f32.mrb[0].mxu0
  %489 = vmatprep.mubr.f32.mxu0 %v255
  %490 = vmatmul.mubr.f32.gmra.mrb[0].mxu0 %v254
  %v491 = vpop.f32.mrb[0].mxu0
  %v492 = vadd.f32 0.0, %v491
  %v493 = vpop.f32.mrb[0].mxu0
  %494 = vdwg.mxu0
  %495 = vmatprep.subr.mxu0 0.0
  %496 = vmatpush1.msra.mxu0 %v294
  %497 = vmatprep.subr.mxu0 0.0
  %498 = vmatpush1.msra.mxu0 %v295
  %499 = vmatprep.subr.mxu0 0.0
  %500 = vmatpush1.msra.mxu0 %v296
  %501 = vmatprep.subr.mxu0 0.0
  %502 = vmatpush1.msra.mxu0 %v297
  %503 = vmatprep.subr.mxu0 0.0
  %504 = vmatpush1.msra.mxu0 %v298
  %505 = vmatprep.subr.mxu0 0.0
  %506 = vmatpush1.msra.mxu0 %v299
  %507 = vmatprep.subr.mxu0 0.0
  %508 = vmatpush1.msra.mxu0 %v300
  %509 = vmatprep.subr.mxu0 0.0
  %510 = vmatpush1.msra.mxu0 %v301
  %511 = vmatprep.subr.mxu0 0.0
  %512 = vmatpush1.msra.mxu0 %v302
  %513 = vmatprep.subr.mxu0 0.0
  %514 = vmatpush1.msra.mxu0 %v303
  %515 = vmatprep.subr.mxu0 0.0
  %516 = vmatpush1.msra.mxu0 %v304
  %517 = vmatprep.subr.mxu0 0.0
  %518 = vmatpush1.msra.mxu0 %v305
  %519 = vmatprep.subr.mxu0 0.0
  %520 = vmatpush1.msra.mxu0 %v306
  %521 = vmatprep.subr.mxu0 0.0
  %522 = vmatpush1.msra.mxu0 %v307
  %523 = vmatprep.subr.mxu0 0.0
  %524 = vmatpush1.msra.mxu0 %v308
  %525 = vmatprep.subr.mxu0 0.0
  %526 = vmatpush1.msra.mxu0 %v309
  %527 = vmatprep.subr.mxu0 0.0
  %528 = vmatpush1.msra.mxu0 %v310
  %529 = vmatprep.subr.mxu0 0.0
  %530 = vmatpush1.msra.mxu0 %v311
  %531 = vmatprep.subr.mxu0 0.0
  %532 = vmatpush1.msra.mxu0 %v312
  %533 = vmatprep.subr.mxu0 0.0
  %534 = vmatpush1.msra.mxu0 %v313
  %535 = vmatprep.subr.mxu0 0.0
  %536 = vmatpush1.msra.mxu0 %v314
  %537 = vmatprep.subr.mxu0 0.0
  %538 = vmatpush1.msra.mxu0 %v315
  %539 = vmatprep.subr.mxu0 0.0
  %540 = vmatpush1.msra.mxu0 %v316
  %541 = vmatprep.subr.mxu0 0.0
  %542 = vmatpush1.msra.mxu0 %v317
  %543 = vmatprep.subr.mxu0 0.0
  %544 = vmatpush1.msra.mxu0 %v318
  %545 = vmatprep.subr.mxu0 0.0
  %546 = vmatpush1.msra.mxu0 %v319
  %547 = vmatprep.subr.mxu0 0.0
  %548 = vmatpush1.msra.mxu0 %v320
  %549 = vmatprep.subr.mxu0 0.0
  %550 = vmatpush1.msra.mxu0 %v321
  %551 = vmatprep.subr.mxu0 0.0
  %552 = vmatpush1.msra.mxu0 %v322
  %553 = vmatprep.subr.mxu0 0.0
  %554 = vmatpush1.msra.mxu0 %v323
  %555 = vmatprep.subr.mxu0 0.0
  %556 = vmatpush1.msra.mxu0 %v324
  %557 = vmatprep.subr.mxu0 0.0
  %558 = vmatpush1.msra.mxu0 %v325
  %559 = vmatprep.mubr.f32.mxu0 %v201
  %560 = vmatmul.mubr.f32.gmra.mrb[0].mxu0 %v200
  %v561 = vpop.f32.mrb[0].mxu0
  %v562 = vadd.f32 %v457, %v561
  %v563 = vpop.f32.mrb[0].mxu0
  %564 = vmatprep.mubr.f32.mxu0 %v209
  %565 = vmatmul.mubr.f32.gmra.mrb[0].mxu0 %v208
  %v566 = vpop.f32.mrb[0].mxu0
  %v567 = vadd.f32 %v462, %v566
  %v568 = vpop.f32.mrb[0].mxu0
  %569 = vmatprep.mubr.f32.mxu0 %v217
  %570 = vmatmul.mubr.f32.gmra.mrb[0].mxu0 %v216
  %v571 = vpop.f32.mrb[0].mxu0
  %v572 = vadd.f32 %v467, %v571
  %v573 = vpop.f32.mrb[0].mxu0
  %574 = vmatprep.mubr.f32.mxu0 %v225
  %575 = vmatmul.mubr.f32.gmra.mrb[0].mxu0 %v224
  %v576 = vpop.f32.mrb[0].mxu0
  %v577 = vadd.f32 %v472, %v576
  %v578 = vpop.f32.mrb[0].mxu0
  %579 = vmatprep.mubr.f32.mxu0 %v233
  %580 = vmatmul.mubr.f32.gmra.mrb[0].mxu0 %v232
  %v581 = vpop.f32.mrb[0].mxu0
  %v582 = vadd.f32 %v477, %v581
  %v583 = vpop.f32.mrb[0].mxu0
  %584 = vmatprep.mubr.f32.mxu0 %v241
  %585 = vmatmul.mubr.f32.gmra.mrb[0].mxu0 %v240
  %v586 = vpop.f32.mrb[0].mxu0
  %v587 = vadd.f32 %v482, %v586
  %v588 = vpop.f32.mrb[0].mxu0
  %589 = vmatprep.mubr.f32.mxu0 %v249
  %590 = vmatmul.mubr.f32.gmra.mrb[0].mxu0 %v248
  %v591 = vpop.f32.mrb[0].mxu0
  %v592 = vadd.f32 %v487, %v591
  %v593 = vpop.f32.mrb[0].mxu0
  %594 = vmatprep.mubr.f32.mxu0 %v257
  %595 = vmatmul.mubr.f32.gmra.mrb[0].mxu0 %v256
  %v596 = vpop.f32.mrb[0].mxu0
  %v597 = vadd.f32 %v492, %v596
  %v598 = vpop.f32.mrb[0].mxu0
  %599 = vdwg.mxu0
  %600 = vmatprep.subr.mxu0 0.0
  %601 = vmatpush1.msra.mxu0 %v326
  %602 = vmatprep.subr.mxu0 0.0
  %603 = vmatpush1.msra.mxu0 %v327
  %604 = vmatprep.subr.mxu0 0.0
  %605 = vmatpush1.msra.mxu0 %v328
  %606 = vmatprep.subr.mxu0 0.0
  %607 = vmatpush1.msra.mxu0 %v329
  %608 = vmatprep.subr.mxu0 0.0
  %609 = vmatpush1.msra.mxu0 %v330
  %610 = vmatprep.subr.mxu0 0.0
  %611 = vmatpush1.msra.mxu0 %v331
  %612 = vmatprep.subr.mxu0 0.0
  %613 = vmatpush1.msra.mxu0 %v332
  %614 = vmatprep.subr.mxu0 0.0
  %615 = vmatpush1.msra.mxu0 %v333
  %616 = vmatprep.subr.mxu0 0.0
  %617 = vmatpush1.msra.mxu0 %v334
  %618 = vmatprep.subr.mxu0 0.0
  %619 = vmatpush1.msra.mxu0 %v335
  %620 = vmatprep.subr.mxu0 0.0
  %621 = vmatpush1.msra.mxu0 %v336
  %622 = vmatprep.subr.mxu0 0.0
  %623 = vmatpush1.msra.mxu0 %v337
  %624 = vmatprep.subr.mxu0 0.0
  %625 = vmatpush1.msra.mxu0 %v338
  %626 = vmatprep.subr.mxu0 0.0
  %627 = vmatpush1.msra.mxu0 %v339
  %628 = vmatprep.subr.mxu0 0.0
  %629 = vmatpush1.msra.mxu0 %v340
  %630 = vmatprep.subr.mxu0 0.0
  %631 = vmatpush1.msra.mxu0 %v341
  %632 = vmatprep.subr.mxu0 0.0
  %633 = vmatpush1.msra.mxu0 %v342
  %634 = vmatprep.subr.mxu0 0.0
  %635 = vmatpush1.msra.mxu0 %v343
  %636 = vmatprep.subr.mxu0 0.0
  %637 = vmatpush1.msra.mxu0 %v344
  %638 = vmatprep.subr.mxu0 0.0
  %639 = vmatpush1.msra.mxu0 %v345
  %640 = vmatprep.subr.mxu0 0.0
  %641 = vmatpush1.msra.mxu0 %v346
  %642 = vmatprep.subr.mxu0 0.0
  %643 = vmatpush1.msra.mxu0 %v347
  %644 = vmatprep.subr.mxu0 0.0
  %645 = vmatpush1.msra.mxu0 %v348
  %646 = vmatprep.subr.mxu0 0.0
  %647 = vmatpush1.msra.mxu0 %v349
  %648 = vmatprep.subr.mxu0 0.0
  %649 = vmatpush1.msra.mxu0 %v350
  %650 = vmatprep.subr.mxu0 0.0
  %651 = vmatpush1.msra.mxu0 %v351
  %652 = vmatprep.subr.mxu0 0.0
  %653 = vmatpush1.msra.mxu0 %v352
  %654 = vmatprep.subr.mxu0 0.0
  %655 = vmatpush1.msra.mxu0 %v353
  %656 = vmatprep.subr.mxu0 0.0
  %657 = vmatpush1.msra.mxu0 %v354
  %658 = vmatprep.subr.mxu0 0.0
  %659 = vmatpush1.msra.mxu0 %v355
  %660 = vmatprep.subr.mxu0 0.0
  %661 = vmatpush1.msra.mxu0 %v356
  %662 = vmatprep.subr.mxu0 0.0
  %663 = vmatpush1.msra.mxu0 %v357
  %664 = vmatprep.mubr.f32.mxu0 %v203
  %665 = vmatmul.mubr.f32.gmra.mrb[0].mxu0 %v202
  %v666 = vpop.f32.mrb[0].mxu0
  %v667 = vadd.f32 %v562, %v666
  %v668 = vpop.f32.mrb[0].mxu0
  %669 = vmatprep.mubr.f32.mxu0 %v211
  %670 = vmatmul.mubr.f32.gmra.mrb[0].mxu0 %v210
  %v671 = vpop.f32.mrb[0].mxu0
  %v672 = vadd.f32 %v567, %v671
  %v673 = vpop.f32.mrb[0].mxu0
  %674 = vmatprep.mubr.f32.mxu0 %v219
  %675 = vmatmul.mubr.f32.gmra.mrb[0].mxu0 %v218
  %v676 = vpop.f32.mrb[0].mxu0
  %v677 = vadd.f32 %v572, %v676
  %v678 = vpop.f32.mrb[0].mxu0
  %679 = vmatprep.mubr.f32.mxu0 %v227
  %680 = vmatmul.mubr.f32.gmra.mrb[0].mxu0 %v226
  %v681 = vpop.f32.mrb[0].mxu0
  %v682 = vadd.f32 %v577, %v681
  %v683 = vpop.f32.mrb[0].mxu0
  %684 = vmatprep.mubr.f32.mxu0 %v235
  %685 = vmatmul.mubr.f32.gmra.mrb[0].mxu0 %v234
  %v686 = vpop.f32.mrb[0].mxu0
  %v687 = vadd.f32 %v582, %v686
  %v688 = vpop.f32.mrb[0].mxu0
  %689 = vmatprep.mubr.f32.mxu0 %v243
  %690 = vmatmul.mubr.f32.gmra.mrb[0].mxu0 %v242
  %v691 = vpop.f32.mrb[0].mxu0
  %v692 = vadd.f32 %v587, %v691
  %v693 = vpop.f32.mrb[0].mxu0
  %694 = vmatprep.mubr.f32.mxu0 %v251
  %695 = vmatmul.mubr.f32.gmra.mrb[0].mxu0 %v250
  %v696 = vpop.f32.mrb[0].mxu0
  %v697 = vadd.f32 %v592, %v696
  %v698 = vpop.f32.mrb[0].mxu0
  %699 = vmatprep.mubr.f32.mxu0 %v259
  %700 = vmatmul.mubr.f32.gmra.mrb[0].mxu0 %v258
  %v701 = vpop.f32.mrb[0].mxu0
  %v702 = vadd.f32 %v597, %v701
  %v703 = vpop.f32.mrb[0].mxu0
  %704 = vdwg.mxu0
  %705 = vmatprep.subr.mxu0 0.0
  %706 = vmatpush1.msra.mxu0 %v358
  %707 = vmatprep.subr.mxu0 0.0
  %708 = vmatpush1.msra.mxu0 %v359
  %709 = vmatprep.subr.mxu0 0.0
  %710 = vmatpush1.msra.mxu0 %v360
  %711 = vmatprep.subr.mxu0 0.0
  %712 = vmatpush1.msra.mxu0 %v361
  %713 = vmatprep.subr.mxu0 0.0
  %714 = vmatpush1.msra.mxu0 %v362
  %715 = vmatprep.subr.mxu0 0.0
  %716 = vmatpush1.msra.mxu0 %v363
  %717 = vmatprep.subr.mxu0 0.0
  %718 = vmatpush1.msra.mxu0 %v364
  %719 = vmatprep.subr.mxu0 0.0
  %720 = vmatpush1.msra.mxu0 %v365
  %721 = vmatprep.subr.mxu0 0.0
  %722 = vmatpush1.msra.mxu0 %v366
  %723 = vmatprep.subr.mxu0 0.0
  %724 = vmatpush1.msra.mxu0 %v367
  %725 = vmatprep.subr.mxu0 0.0
  %726 = vmatpush1.msra.mxu0 %v368
  %727 = vmatprep.subr.mxu0 0.0
  %728 = vmatpush1.msra.mxu0 %v369
  %729 = vmatprep.subr.mxu0 0.0
  %730 = vmatpush1.msra.mxu0 %v370
  %731 = vmatprep.subr.mxu0 0.0
  %732 = vmatpush1.msra.mxu0 %v371
  %733 = vmatprep.subr.mxu0 0.0
  %734 = vmatpush1.msra.mxu0 %v372
  %735 = vmatprep.subr.mxu0 0.0
  %736 = vmatpush1.msra.mxu0 %v373
  %737 = vmatprep.subr.mxu0 0.0
  %738 = vmatpush1.msra.mxu0 %v374
  %739 = vmatprep.subr.mxu0 0.0
  %740 = vmatpush1.msra.mxu0 %v375
  %741 = vmatprep.subr.mxu0 0.0
  %742 = vmatpush1.msra.mxu0 %v376
  %743 = vmatprep.subr.mxu0 0.0
  %744 = vmatpush1.msra.mxu0 %v377
  %745 = vmatprep.subr.mxu0 0.0
  %746 = vmatpush1.msra.mxu0 %v378
  %747 = vmatprep.subr.mxu0 0.0
  %748 = vmatpush1.msra.mxu0 %v379
  %749 = vmatprep.subr.mxu0 0.0
  %750 = vmatpush1.msra.mxu0 %v380
  %751 = vmatprep.subr.mxu0 0.0
  %752 = vmatpush1.msra.mxu0 %v381
  %753 = vmatprep.subr.mxu0 0.0
  %754 = vmatpush1.msra.mxu0 %v382
  %755 = vmatprep.subr.mxu0 0.0
  %756 = vmatpush1.msra.mxu0 %v383
  %757 = vmatprep.subr.mxu0 0.0
  %758 = vmatpush1.msra.mxu0 %v384
  %759 = vmatprep.subr.mxu0 0.0
  %760 = vmatpush1.msra.mxu0 %v385
  %761 = vmatprep.subr.mxu0 0.0
  %762 = vmatpush1.msra.mxu0 %v386
  %763 = vmatprep.subr.mxu0 0.0
  %764 = vmatpush1.msra.mxu0 %v387
  %765 = vmatprep.subr.mxu0 0.0
  %766 = vmatpush1.msra.mxu0 %v388
  %767 = vmatprep.subr.mxu0 0.0
  %768 = vmatpush1.msra.mxu0 %v389
  %769 = vmatprep.mubr.f32.mxu0 %v205
  %770 = vmatmul.mubr.f32.gmra.mrb[0].mxu0 %v204
  %v771 = vpop.f32.mrb[0].mxu0
  %v772 = vadd.f32 %v667, %v771
  %v773 = vpop.f32.mrb[0].mxu0
  %774 = vmatprep.mubr.f32.mxu0 %v213
  %775 = vmatmul.mubr.f32.gmra.mrb[0].mxu0 %v212
  %v776 = vpop.f32.mrb[0].mxu0
  %v777 = vadd.f32 %v672, %v776
  %v778 = vpop.f32.mrb[0].mxu0
  %779 = vmatprep.mubr.f32.mxu0 %v221
  %780 = vmatmul.mubr.f32.gmra.mrb[0].mxu0 %v220
  %v781 = vpop.f32.mrb[0].mxu0
  %v782 = vadd.f32 %v677, %v781
  %v783 = vpop.f32.mrb[0].mxu0
  %784 = vmatprep.mubr.f32.mxu0 %v229
  %785 = vmatmul.mubr.f32.gmra.mrb[0].mxu0 %v228
  %v786 = vpop.f32.mrb[0].mxu0
  %v787 = vadd.f32 %v682, %v786
  %v788 = vpop.f32.mrb[0].mxu0
  %789 = vmatprep.mubr.f32.mxu0 %v237
  %790 = vmatmul.mubr.f32.gmra.mrb[0].mxu0 %v236
  %v791 = vpop.f32.mrb[0].mxu0
  %v792 = vadd.f32 %v687, %v791
  %v793 = vpop.f32.mrb[0].mxu0
  %794 = vmatprep.mubr.f32.mxu0 %v245
  %795 = vmatmul.mubr.f32.gmra.mrb[0].mxu0 %v244
  %v796 = vpop.f32.mrb[0].mxu0
  %v797 = vadd.f32 %v692, %v796
  %v798 = vpop.f32.mrb[0].mxu0
  %799 = vmatprep.mubr.f32.mxu0 %v253
  %800 = vmatmul.mubr.f32.gmra.mrb[0].mxu0 %v252
  %v801 = vpop.f32.mrb[0].mxu0
  %v802 = vadd.f32 %v697, %v801
  %v803 = vpop.f32.mrb[0].mxu0
  %804 = vmatprep.mubr.f32.mxu0 %v261
  %805 = vmatmul.mubr.f32.gmra.mrb[0].mxu0 %v260
  %v806 = vpop.f32.mrb[0].mxu0
  %v807 = vadd.f32 %v702, %v806
  %v808 = vpop.f32.mrb[0].mxu0
  %809 = vdwg.mxu0
  %v810 = vld [vmem:[%s2] sm:$0xff]
  %v811 = vld [vmem:[%s2 + $0x8] sm:$0xff]
  %v812 = vld [vmem:[%s2 + $0x10] sm:$0xff]
  %v813 = vld [vmem:[%s2 + $0x18] sm:$0xff]
  %v814 = vld [vmem:[%s2 + $0x20] sm:$0xff]
  %v815 = vld [vmem:[%s2 + $0x28] sm:$0xff]
  %v816 = vld [vmem:[%s2 + $0x30] sm:$0xff]
  %v817 = vld [vmem:[%s2 + $0x38] sm:$0xff]
  %v818 = vld [vmem:[%s2 + $0x40] sm:$0xff]
  %v819 = vld [vmem:[%s2 + $0x48] sm:$0xff]
  %v820 = vld [vmem:[%s2 + $0x50] sm:$0xff]
  %v821 = vld [vmem:[%s2 + $0x58] sm:$0xff]
  %v822 = vld [vmem:[%s2 + $0x60] sm:$0xff]
  %v823 = vld [vmem:[%s2 + $0x68] sm:$0xff]
  %v824 = vld [vmem:[%s2 + $0x70] sm:$0xff]
  %v825 = vld [vmem:[%s2 + $0x78] sm:$0xff]
  %v826 = vld [vmem:[%s5] sm:$0xff]
  %v827 = vld [vmem:[%s5 + $0x8] sm:$0xff]
  %v828 = vld [vmem:[%s5 + $0x10] sm:$0xff]
  %v829 = vld [vmem:[%s5 + $0x18] sm:$0xff]
  %v830 = vld [vmem:[%s3] sm:$0xff]
  %v831 = vld [vmem:[%s3 + $0x8] sm:$0xff]
  %v832 = vld [vmem:[%s3 + $0x10] sm:$0xff]
  %v833 = vld [vmem:[%s3 + $0x18] sm:$0xff]
  %v834 = vld [vmem:[%s6] sm:$0xff]
  %v835 = vld [vmem:[%s6 + $0x8] sm:$0xff]
  %v836 = vld [vmem:[%s6 + $0x10] sm:$0xff]
  %v837 = vld [vmem:[%s6 + $0x18] sm:$0xff]
  %v838 = vld [vmem:[%s4] sm:$0x1]
  %v839 = vld [vmem:[%s7] sm:$0x1]
  %v841 = vlaneseq
  %v842 = vshrl.u32 %v841, 7
  %v843 = vsub.s32 0, %v842
  %v844 = vrot.slane %v838, %v843
  %846 = vmatprep.subr.mxu0 0.0
  %847 = vmatpush1.msra.mxu0 %v810
  %848 = vmatprep.subr.mxu0 0.0
  %849 = vmatpush1.msra.mxu0 %v811
  %850 = vmatprep.subr.mxu0 0.0
  %851 = vmatpush1.msra.mxu0 %v812
  %852 = vmatprep.subr.mxu0 0.0
  %853 = vmatpush1.msra.mxu0 %v813
  %854 = vmatprep.subr.mxu0 0.0
  %855 = vmatpush1.msra.mxu0 %v814
  %856 = vmatprep.subr.mxu0 0.0
  %857 = vmatpush1.msra.mxu0 %v815
  %858 = vmatprep.subr.mxu0 0.0
  %859 = vmatpush1.msra.mxu0 %v816
  %860 = vmatprep.subr.mxu0 0.0
  %861 = vmatpush1.msra.mxu0 %v817
  %862 = vmatprep.subr.mxu0 0.0
  %863 = vmatpush1.msra.mxu0 %v818
  %864 = vmatprep.subr.mxu0 0.0
  %865 = vmatpush1.msra.mxu0 %v819
  %866 = vmatprep.subr.mxu0 0.0
  %867 = vmatpush1.msra.mxu0 %v820
  %868 = vmatprep.subr.mxu0 0.0
  %869 = vmatpush1.msra.mxu0 %v821
  %870 = vmatprep.subr.mxu0 0.0
  %871 = vmatpush1.msra.mxu0 %v822
  %872 = vmatprep.subr.mxu0 0.0
  %873 = vmatpush1.msra.mxu0 %v823
  %874 = vmatprep.subr.mxu0 0.0
  %875 = vmatpush1.msra.mxu0 %v824
  %876 = vmatprep.subr.mxu0 0.0
  %877 = vmatpush1.msra.mxu0 %v825
  %878 = vmatprep.subr.mxu0 0.0
  %879 = vmatpush1.msra.mxu0 0.0
  %880 = vmatprep.subr.mxu0 0.0
  %881 = vmatpush1.msra.mxu0 0.0
  %882 = vmatprep.subr.mxu0 0.0
  %883 = vmatpush1.msra.mxu0 0.0
  %884 = vmatprep.subr.mxu0 0.0
  %885 = vmatpush1.msra.mxu0 0.0
  %886 = vmatprep.subr.mxu0 0.0
  %887 = vmatpush1.msra.mxu0 0.0
  %888 = vmatprep.subr.mxu0 0.0
  %889 = vmatpush1.msra.mxu0 0.0
  %890 = vmatprep.subr.mxu0 0.0
  %891 = vmatpush1.msra.mxu0 0.0
  %892 = vmatprep.subr.mxu0 0.0
  %893 = vmatpush1.msra.mxu0 0.0
  %894 = vmatprep.subr.mxu0 0.0
  %895 = vmatpush1.msra.mxu0 0.0
  %896 = vmatprep.subr.mxu0 0.0
  %897 = vmatpush1.msra.mxu0 0.0
  %898 = vmatprep.subr.mxu0 0.0
  %899 = vmatpush1.msra.mxu0 0.0
  %900 = vmatprep.subr.mxu0 0.0
  %901 = vmatpush1.msra.mxu0 0.0
  %902 = vmatprep.subr.mxu0 0.0
  %903 = vmatpush1.msra.mxu0 0.0
  %904 = vmatprep.subr.mxu0 0.0
  %905 = vmatpush1.msra.mxu0 0.0
  %906 = vmatprep.subr.mxu0 0.0
  %907 = vmatpush1.msra.mxu0 0.0
  %908 = vmatprep.subr.mxu0 0.0
  %909 = vmatpush1.msra.mxu0 0.0
  %910 = vmatprep.mubr.f32.mxu0 0.0
  %911 = vmatmul.mubr.f32.gmra.mrb[0].mxu0 %v772
  %v912 = vpop.f32.mrb[0].mxu0
  %v913 = vadd.f32 %v844, %v912
  %v914 = vpop.f32.mrb[0].mxu0
  %915 = vmatprep.mubr.f32.mxu0 0.0
  %916 = vmatmul.mubr.f32.gmra.mrb[0].mxu0 %v777
  %v917 = vpop.f32.mrb[0].mxu0
  %v918 = vadd.f32 %v844, %v917
  %v919 = vpop.f32.mrb[0].mxu0
  %920 = vmatprep.mubr.f32.mxu0 0.0
  %921 = vmatmul.mubr.f32.gmra.mrb[0].mxu0 %v782
  %v922 = vpop.f32.mrb[0].mxu0
  %v923 = vadd.f32 %v844, %v922
  %v924 = vpop.f32.mrb[0].mxu0
  %925 = vmatprep.mubr.f32.mxu0 0.0
  %926 = vmatmul.mubr.f32.gmra.mrb[0].mxu0 %v787
  %v927 = vpop.f32.mrb[0].mxu0
  %v928 = vadd.f32 %v844, %v927
  %v929 = vpop.f32.mrb[0].mxu0
  %930 = vmatprep.mubr.f32.mxu0 0.0
  %931 = vmatmul.mubr.f32.gmra.mrb[0].mxu0 %v792
  %v932 = vpop.f32.mrb[0].mxu0
  %v933 = vadd.f32 %v844, %v932
  %v934 = vpop.f32.mrb[0].mxu0
  %935 = vmatprep.mubr.f32.mxu0 0.0
  %936 = vmatmul.mubr.f32.gmra.mrb[0].mxu0 %v797
  %v937 = vpop.f32.mrb[0].mxu0
  %v938 = vadd.f32 %v844, %v937
  %v939 = vpop.f32.mrb[0].mxu0
  %940 = vmatprep.mubr.f32.mxu0 0.0
  %941 = vmatmul.mubr.f32.gmra.mrb[0].mxu0 %v802
  %v942 = vpop.f32.mrb[0].mxu0
  %v943 = vadd.f32 %v844, %v942
  %v944 = vpop.f32.mrb[0].mxu0
  %945 = vmatprep.mubr.f32.mxu0 0.0
  %946 = vmatmul.mubr.f32.gmra.mrb[0].mxu0 %v807
  %v947 = vpop.f32.mrb[0].mxu0
  %v948 = vadd.f32 %v844, %v947
  %v949 = vpop.f32.mrb[0].mxu0
  %950 = vdwg.mxu0
  %v952 = vlaneseq
  %v953 = vshrl.u32 %v952, 7
  %v954 = vsub.s32 0, %v953
  %v955 = vrot.slane %v839, %v954
  %vm957 = vcmask 261120
  %v959 = vsel %vm957, 0.0, 0
  %961 = vmatprep.subr.mxu0 0.0
  %962 = vmatpush1.msra.mxu0 %v830
  %963 = vmatprep.subr.mxu0 0.0
  %964 = vmatpush1.msra.mxu0 %v831
  %965 = vmatprep.subr.mxu0 0.0
  %966 = vmatpush1.msra.mxu0 %v832
  %967 = vmatprep.subr.mxu0 0.0
  %968 = vmatpush1.msra.mxu0 %v833
  %969 = vmatprep.subr.mxu0 0.0
  %970 = vmatpush1.msra.mxu0 0.0
  %971 = vmatprep.subr.mxu0 0.0
  %972 = vmatpush1.msra.mxu0 0.0
  %973 = vmatprep.subr.mxu0 0.0
  %974 = vmatpush1.msra.mxu0 0.0
  %975 = vmatprep.subr.mxu0 0.0
  %976 = vmatpush1.msra.mxu0 0.0
  %977 = vmatprep.subr.mxu0 0.0
  %978 = vmatpush1.msra.mxu0 0.0
  %979 = vmatprep.subr.mxu0 0.0
  %980 = vmatpush1.msra.mxu0 0.0
  %981 = vmatprep.subr.mxu0 0.0
  %982 = vmatpush1.msra.mxu0 0.0
  %983 = vmatprep.subr.mxu0 0.0
  %984 = vmatpush1.msra.mxu0 0.0
  %985 = vmatprep.subr.mxu0 0.0
  %986 = vmatpush1.msra.mxu0 0.0
  %987 = vmatprep.subr.mxu0 0.0
  %988 = vmatpush1.msra.mxu0 0.0
  %989 = vmatprep.subr.mxu0 0.0
  %990 = vmatpush1.msra.mxu0 0.0
  %991 = vmatprep.subr.mxu0 0.0
  %992 = vmatpush1.msra.mxu0 0.0
  %993 = vmatprep.subr.mxu0 0.0
  %994 = vmatpush1.msra.mxu0 0.0
  %995 = vmatprep.subr.mxu0 0.0
  %996 = vmatpush1.msra.mxu0 0.0
  %997 = vmatprep.subr.mxu0 0.0
  %998 = vmatpush1.msra.mxu0 0.0
  %999 = vmatprep.subr.mxu0 0.0
  %1000 = vmatpush1.msra.mxu0 0.0
  %1001 = vmatprep.subr.mxu0 0.0
  %1002 = vmatpush1.msra.mxu0 0.0
  %1003 = vmatprep.subr.mxu0 0.0
  %1004 = vmatpush1.msra.mxu0 0.0
  %1005 = vmatprep.subr.mxu0 0.0
  %1006 = vmatpush1.msra.mxu0 0.0
  %1007 = vmatprep.subr.mxu0 0.0
  %1008 = vmatpush1.msra.mxu0 0.0
  %1009 = vmatprep.subr.mxu0 0.0
  %1010 = vmatpush1.msra.mxu0 0.0
  %1011 = vmatprep.subr.mxu0 0.0
  %1012 = vmatpush1.msra.mxu0 0.0
  %1013 = vmatprep.subr.mxu0 0.0
  %1014 = vmatpush1.msra.mxu0 0.0
  %1015 = vmatprep.subr.mxu0 0.0
  %1016 = vmatpush1.msra.mxu0 0.0
  %1017 = vmatprep.subr.mxu0 0.0
  %1018 = vmatpush1.msra.mxu0 0.0
  %1019 = vmatprep.subr.mxu0 0.0
  %1020 = vmatpush1.msra.mxu0 0.0
  %1021 = vmatprep.subr.mxu0 0.0
  %1022 = vmatpush1.msra.mxu0 0.0
  %1023 = vmatprep.subr.mxu0 0.0
  %1024 = vmatpush1.msra.mxu0 0.0
  %1025 = vmatprep.mubr.f32.mxu0 0.0
  %1026 = vmatmul.mubr.f32.gmra.mrb[0].mxu0 %v959
  %v1027 = vpop.f32.mrb[0].mxu0
  %v1028 = vadd.f32 0.0, %v1027
  %v1029 = vpop.f32.mrb[0].mxu0
  %1030 = vdwg.mxu0
  %v1031 = vadd.f32 %v913, %v1028
  %v1032 = vxor.u32 %v1031, 2147483648
  %v1033 = vmul.f32 %v1032, 1.442695
  %v1034 = vpow.pop %v1033
  %v1035 = vadd.f32 %v1034, 1.0
  %v1036 = vrcp.pop %v1035
  %v1037 = vmul.f32 1.0, %v1036
  %v1038 = vtanh.pop %v1031
  %v1039 = vmul.f32 %v1037, 0.0
  %1041 = vrot.lane.b32.xlu0 %v1038, 64
  %v1042 = vpop.permute.xlu0 %1041
  %v1044 = vmul.f32 %v1037, %v1042
  %1046 = vrot.lane.b32.xlu0 %v1044, 32
  %v1047 = vpop.permute.xlu0 %1046
  %v1049 = vadd.f32 %v1039, %v1047
  %v1050 = vtanh.pop %v1049
  %1052 = vrot.lane.b32.xlu0 %v1050, 64
  %v1053 = vpop.permute.xlu0 %1052
  %v1055 = vmul.f32 %v1037, %v1053
  %1057 = vrot.lane.b32.xlu0 %v1055, 32
  %v1058 = vpop.permute.xlu0 %1057
  %v1059 = vsel %vm957, %v1058, 0
  %1061 = vmatprep.subr.mxu0 0.0
  %1062 = vmatpush1.msra.mxu0 %v826
  %1063 = vmatprep.subr.mxu0 0.0
  %1064 = vmatpush1.msra.mxu0 %v827
  %1065 = vmatprep.subr.mxu0 0.0
  %1066 = vmatpush1.msra.mxu0 %v828
  %1067 = vmatprep.subr.mxu0 0.0
  %1068 = vmatpush1.msra.mxu0 %v829
  %1069 = vmatprep.subr.mxu0 0.0
  %1070 = vmatpush1.msra.mxu0 0.0
  %1071 = vmatprep.subr.mxu0 0.0
  %1072 = vmatpush1.msra.mxu0 0.0
  %1073 = vmatprep.subr.mxu0 0.0
  %1074 = vmatpush1.msra.mxu0 0.0
  %1075 = vmatprep.subr.mxu0 0.0
  %1076 = vmatpush1.msra.mxu0 0.0
  %1077 = vmatprep.subr.mxu0 0.0
  %1078 = vmatpush1.msra.mxu0 0.0
  %1079 = vmatprep.subr.mxu0 0.0
  %1080 = vmatpush1.msra.mxu0 0.0
  %1081 = vmatprep.subr.mxu0 0.0
  %1082 = vmatpush1.msra.mxu0 0.0
  %1083 = vmatprep.subr.mxu0 0.0
  %1084 = vmatpush1.msra.mxu0 0.0
  %1085 = vmatprep.subr.mxu0 0.0
  %1086 = vmatpush1.msra.mxu0 0.0
  %1087 = vmatprep.subr.mxu0 0.0
  %1088 = vmatpush1.msra.mxu0 0.0
  %1089 = vmatprep.subr.mxu0 0.0
  %1090 = vmatpush1.msra.mxu0 0.0
  %1091 = vmatprep.subr.mxu0 0.0
  %1092 = vmatpush1.msra.mxu0 0.0
  %1093 = vmatprep.subr.mxu0 0.0
  %1094 = vmatpush1.msra.mxu0 0.0
  %1095 = vmatprep.subr.mxu0 0.0
  %1096 = vmatpush1.msra.mxu0 0.0
  %1097 = vmatprep.subr.mxu0 0.0
  %1098 = vmatpush1.msra.mxu0 0.0
  %1099 = vmatprep.subr.mxu0 0.0
  %1100 = vmatpush1.msra.mxu0 0.0
  %1101 = vmatprep.subr.mxu0 0.0
  %1102 = vmatpush1.msra.mxu0 0.0
  %1103 = vmatprep.subr.mxu0 0.0
  %1104 = vmatpush1.msra.mxu0 0.0
  %1105 = vmatprep.subr.mxu0 0.0
  %1106 = vmatpush1.msra.mxu0 0.0
  %1107 = vmatprep.subr.mxu0 0.0
  %1108 = vmatpush1.msra.mxu0 0.0
  %1109 = vmatprep.subr.mxu0 0.0
  %1110 = vmatpush1.msra.mxu0 0.0
  %1111 = vmatprep.subr.mxu0 0.0
  %1112 = vmatpush1.msra.mxu0 0.0
  %1113 = vmatprep.subr.mxu0 0.0
  %1114 = vmatpush1.msra.mxu0 0.0
  %1115 = vmatprep.subr.mxu0 0.0
  %1116 = vmatpush1.msra.mxu0 0.0
  %1117 = vmatprep.subr.mxu0 0.0
  %1118 = vmatpush1.msra.mxu0 0.0
  %1119 = vmatprep.subr.mxu0 0.0
  %1120 = vmatpush1.msra.mxu0 0.0
  %1121 = vmatprep.subr.mxu0 0.0
  %1122 = vmatpush1.msra.mxu0 0.0
  %1123 = vmatprep.subr.mxu0 0.0
  %1124 = vmatpush1.msra.mxu0 0.0
  %1125 = vmatprep.mubr.f32.mxu0 0.0
  %1126 = vmatmul.mubr.f32.gmra.mrb[0].mxu0 %v1059
  %v1127 = vpop.f32.mrb[0].mxu0
  %v1128 = vadd.f32 %v955, %v1127
  %v1129 = vpop.f32.mrb[0].mxu0
  %1130 = vdwg.mxu0
  %1131 = vmatprep.subr.mxu0 0.0
  %1132 = vmatpush1.msra.mxu0 %v834
  %1133 = vmatprep.subr.mxu0 0.0
  %1134 = vmatpush1.msra.mxu0 %v835
  %1135 = vmatprep.subr.mxu0 0.0
  %1136 = vmatpush1.msra.mxu0 %v836
  %1137 = vmatprep.subr.mxu0 0.0
  %1138 = vmatpush1.msra.mxu0 %v837
  %1139 = vmatprep.subr.mxu0 0.0
  %1140 = vmatpush1.msra.mxu0 0.0
  %1141 = vmatprep.subr.mxu0 0.0
  %1142 = vmatpush1.msra.mxu0 0.0
  %1143 = vmatprep.subr.mxu0 0.0
  %1144 = vmatpush1.msra.mxu0 0.0
  %1145 = vmatprep.subr.mxu0 0.0
  %1146 = vmatpush1.msra.mxu0 0.0
  %1147 = vmatprep.subr.mxu0 0.0
  %1148 = vmatpush1.msra.mxu0 0.0
  %1149 = vmatprep.subr.mxu0 0.0
  %1150 = vmatpush1.msra.mxu0 0.0
  %1151 = vmatprep.subr.mxu0 0.0
  %1152 = vmatpush1.msra.mxu0 0.0
  %1153 = vmatprep.subr.mxu0 0.0
  %1154 = vmatpush1.msra.mxu0 0.0
  %1155 = vmatprep.subr.mxu0 0.0
  %1156 = vmatpush1.msra.mxu0 0.0
  %1157 = vmatprep.subr.mxu0 0.0
  %1158 = vmatpush1.msra.mxu0 0.0
  %1159 = vmatprep.subr.mxu0 0.0
  %1160 = vmatpush1.msra.mxu0 0.0
  %1161 = vmatprep.subr.mxu0 0.0
  %1162 = vmatpush1.msra.mxu0 0.0
  %1163 = vmatprep.subr.mxu0 0.0
  %1164 = vmatpush1.msra.mxu0 0.0
  %1165 = vmatprep.subr.mxu0 0.0
  %1166 = vmatpush1.msra.mxu0 0.0
  %1167 = vmatprep.subr.mxu0 0.0
  %1168 = vmatpush1.msra.mxu0 0.0
  %1169 = vmatprep.subr.mxu0 0.0
  %1170 = vmatpush1.msra.mxu0 0.0
  %1171 = vmatprep.subr.mxu0 0.0
  %1172 = vmatpush1.msra.mxu0 0.0
  %1173 = vmatprep.subr.mxu0 0.0
  %1174 = vmatpush1.msra.mxu0 0.0
  %1175 = vmatprep.subr.mxu0 0.0
  %1176 = vmatpush1.msra.mxu0 0.0
  %1177 = vmatprep.subr.mxu0 0.0
  %1178 = vmatpush1.msra.mxu0 0.0
  %1179 = vmatprep.subr.mxu0 0.0
  %1180 = vmatpush1.msra.mxu0 0.0
  %1181 = vmatprep.subr.mxu0 0.0
  %1182 = vmatpush1.msra.mxu0 0.0
  %1183 = vmatprep.subr.mxu0 0.0
  %1184 = vmatpush1.msra.mxu0 0.0
  %1185 = vmatprep.subr.mxu0 0.0
  %1186 = vmatpush1.msra.mxu0 0.0
  %1187 = vmatprep.subr.mxu0 0.0
  %1188 = vmatpush1.msra.mxu0 0.0
  %1189 = vmatprep.subr.mxu0 0.0
  %1190 = vmatpush1.msra.mxu0 0.0
  %1191 = vmatprep.subr.mxu0 0.0
  %1192 = vmatpush1.msra.mxu0 0.0
  %1193 = vmatprep.subr.mxu0 0.0
  %1194 = vmatpush1.msra.mxu0 0.0
  %1195 = vmatprep.mubr.f32.mxu0 0.0
  %1196 = vmatmul.mubr.f32.gmra.mrb[0].mxu0 %v959
  %v1197 = vpop.f32.mrb[0].mxu0
  %v1198 = vadd.f32 0.0, %v1197
  %v1199 = vpop.f32.mrb[0].mxu0
  %1200 = vdwg.mxu0
  %v1201 = vadd.f32 %v1128, %v1198
  %v1202 = vxor.u32 %v1201, 2147483648
  %v1203 = vmul.f32 %v1202, 1.442695
  %v1204 = vpow.pop %v1203
  %v1205 = vadd.f32 %v1204, 1.0
  %v1206 = vrcp.pop %v1205
  %v1207 = vmul.f32 1.0, %v1206
  %v1208 = vtanh.pop %v1201
  %v1209 = vmul.f32 %v1207, 0.0
  %1211 = vrot.lane.b32.xlu0 %v1208, 64
  %v1212 = vpop.permute.xlu0 %1211
  %v1214 = vmul.f32 %v1207, %v1212
  %1216 = vrot.lane.b32.xlu0 %v1214, 32
  %v1217 = vpop.permute.xlu0 %1216
  %v1219 = vadd.f32 %v1209, %v1217
  %v1220 = vtanh.pop %v1219
  %1222 = vrot.lane.b32.xlu0 %v1220, 64
  %v1223 = vpop.permute.xlu0 %1222
  %v1225 = vmul.f32 %v1207, %v1223
  %1227 = vrot.lane.b32.xlu0 %v1225, 32
  %v1228 = vpop.permute.xlu0 %1227
  %1230 = vst.msk [vmem:[%s8] sm:$0xff] %vm957, %v1228
  %1231 = vmatprep.subr.mxu0 0.0
  %1232 = vmatpush1.msra.mxu0 %v830
  %1233 = vmatprep.subr.mxu0 0.0
  %1234 = vmatpush1.msra.mxu0 %v831
  %1235 = vmatprep.subr.mxu0 0.0
  %1236 = vmatpush1.msra.mxu0 %v832
  %1237 = vmatprep.subr.mxu0 0.0
  %1238 = vmatpush1.msra.mxu0 %v833
  %1239 = vmatprep.subr.mxu0 0.0
  %1240 = vmatpush1.msra.mxu0 0.0
  %1241 = vmatprep.subr.mxu0 0.0
  %1242 = vmatpush1.msra.mxu0 0.0
  %1243 = vmatprep.subr.mxu0 0.0
  %1244 = vmatpush1.msra.mxu0 0.0
  %1245 = vmatprep.subr.mxu0 0.0
  %1246 = vmatpush1.msra.mxu0 0.0
  %1247 = vmatprep.subr.mxu0 0.0
  %1248 = vmatpush1.msra.mxu0 0.0
  %1249 = vmatprep.subr.mxu0 0.0
  %1250 = vmatpush1.msra.mxu0 0.0
  %1251 = vmatprep.subr.mxu0 0.0
  %1252 = vmatpush1.msra.mxu0 0.0
  %1253 = vmatprep.subr.mxu0 0.0
  %1254 = vmatpush1.msra.mxu0 0.0
  %1255 = vmatprep.subr.mxu0 0.0
  %1256 = vmatpush1.msra.mxu0 0.0
  %1257 = vmatprep.subr.mxu0 0.0
  %1258 = vmatpush1.msra.mxu0 0.0
  %1259 = vmatprep.subr.mxu0 0.0
  %1260 = vmatpush1.msra.mxu0 0.0
  %1261 = vmatprep.subr.mxu0 0.0
  %1262 = vmatpush1.msra.mxu0 0.0
  %1263 = vmatprep.subr.mxu0 0.0
  %1264 = vmatpush1.msra.mxu0 0.0
  %1265 = vmatprep.subr.mxu0 0.0
  %1266 = vmatpush1.msra.mxu0 0.0
  %1267 = vmatprep.subr.mxu0 0.0
  %1268 = vmatpush1.msra.mxu0 0.0
  %1269 = vmatprep.subr.mxu0 0.0
  %1270 = vmatpush1.msra.mxu0 0.0
  %1271 = vmatprep.subr.mxu0 0.0
  %1272 = vmatpush1.msra.mxu0 0.0
  %1273 = vmatprep.subr.mxu0 0.0
  %1274 = vmatpush1.msra.mxu0 0.0
  %1275 = vmatprep.subr.mxu0 0.0
  %1276 = vmatpush1.msra.mxu0 0.0
  %1277 = vmatprep.subr.mxu0 0.0
  %1278 = vmatpush1.msra.mxu0 0.0
  %1279 = vmatprep.subr.mxu0 0.0
  %1280 = vmatpush1.msra.mxu0 0.0
  %1281 = vmatprep.subr.mxu0 0.0
  %1282 = vmatpush1.msra.mxu0 0.0
  %1283 = vmatprep.subr.mxu0 0.0
  %1284 = vmatpush1.msra.mxu0 0.0
  %1285 = vmatprep.subr.mxu0 0.0
  %1286 = vmatpush1.msra.mxu0 0.0
  %1287 = vmatprep.subr.mxu0 0.0
  %1288 = vmatpush1.msra.mxu0 0.0
  %1289 = vmatprep.subr.mxu0 0.0
  %1290 = vmatpush1.msra.mxu0 0.0
  %1291 = vmatprep.subr.mxu0 0.0
  %1292 = vmatpush1.msra.mxu0 0.0
  %1293 = vmatprep.subr.mxu0 0.0
  %1294 = vmatpush1.msra.mxu0 0.0
  %1295 = vmatprep.mubr.f32.mxu0 0.0
  %1296 = vmatmul.mubr.f32.gmra.mrb[0].mxu0 %v1059
  %v1297 = vpop.f32.mrb[0].mxu0
  %v1298 = vadd.f32 0.0, %v1297
  %v1299 = vpop.f32.mrb[0].mxu0
  %1300 = vdwg.mxu0
  %v1301 = vadd.f32 %v918, %v1298
  %v1302 = vxor.u32 %v1301, 2147483648
  %v1303 = vmul.f32 %v1302, 1.442695
  %v1304 = vpow.pop %v1303
  %v1305 = vadd.f32 %v1304, 1.0
  %v1306 = vrcp.pop %v1305
  %v1307 = vmul.f32 1.0, %v1306
  %v1308 = vtanh.pop %v1301
  %v1309 = vmul.f32 %v1307, %v1049
  %1311 = vrot.lane.b32.xlu0 %v1308, 64
  %v1312 = vpop.permute.xlu0 %1311
  %v1314 = vmul.f32 %v1307, %v1312
  %1316 = vrot.lane.b32.xlu0 %v1314, 32
  %v1317 = vpop.permute.xlu0 %1316
  %v1319 = vadd.f32 %v1309, %v1317
  %v1320 = vtanh.pop %v1319
  %1322 = vrot.lane.b32.xlu0 %v1320, 64
  %v1323 = vpop.permute.xlu0 %1322
  %v1325 = vmul.f32 %v1307, %v1323
  %1327 = vrot.lane.b32.xlu0 %v1325, 32
  %v1328 = vpop.permute.xlu0 %1327
  %v1329 = vsel %vm957, %v1328, 0
  %1331 = vmatprep.subr.mxu0 0.0
  %1332 = vmatpush1.msra.mxu0 %v826
  %1333 = vmatprep.subr.mxu0 0.0
  %1334 = vmatpush1.msra.mxu0 %v827
  %1335 = vmatprep.subr.mxu0 0.0
  %1336 = vmatpush1.msra.mxu0 %v828
  %1337 = vmatprep.subr.mxu0 0.0
  %1338 = vmatpush1.msra.mxu0 %v829
  %1339 = vmatprep.subr.mxu0 0.0
  %1340 = vmatpush1.msra.mxu0 0.0
  %1341 = vmatprep.subr.mxu0 0.0
  %1342 = vmatpush1.msra.mxu0 0.0
  %1343 = vmatprep.subr.mxu0 0.0
  %1344 = vmatpush1.msra.mxu0 0.0
  %1345 = vmatprep.subr.mxu0 0.0
  %1346 = vmatpush1.msra.mxu0 0.0
  %1347 = vmatprep.subr.mxu0 0.0
  %1348 = vmatpush1.msra.mxu0 0.0
  %1349 = vmatprep.subr.mxu0 0.0
  %1350 = vmatpush1.msra.mxu0 0.0
  %1351 = vmatprep.subr.mxu0 0.0
  %1352 = vmatpush1.msra.mxu0 0.0
  %1353 = vmatprep.subr.mxu0 0.0
  %1354 = vmatpush1.msra.mxu0 0.0
  %1355 = vmatprep.subr.mxu0 0.0
  %1356 = vmatpush1.msra.mxu0 0.0
  %1357 = vmatprep.subr.mxu0 0.0
  %1358 = vmatpush1.msra.mxu0 0.0
  %1359 = vmatprep.subr.mxu0 0.0
  %1360 = vmatpush1.msra.mxu0 0.0
  %1361 = vmatprep.subr.mxu0 0.0
  %1362 = vmatpush1.msra.mxu0 0.0
  %1363 = vmatprep.subr.mxu0 0.0
  %1364 = vmatpush1.msra.mxu0 0.0
  %1365 = vmatprep.subr.mxu0 0.0
  %1366 = vmatpush1.msra.mxu0 0.0
  %1367 = vmatprep.subr.mxu0 0.0
  %1368 = vmatpush1.msra.mxu0 0.0
  %1369 = vmatprep.subr.mxu0 0.0
  %1370 = vmatpush1.msra.mxu0 0.0
  %1371 = vmatprep.subr.mxu0 0.0
  %1372 = vmatpush1.msra.mxu0 0.0
  %1373 = vmatprep.subr.mxu0 0.0
  %1374 = vmatpush1.msra.mxu0 0.0
  %1375 = vmatprep.subr.mxu0 0.0
  %1376 = vmatpush1.msra.mxu0 0.0
  %1377 = vmatprep.subr.mxu0 0.0
  %1378 = vmatpush1.msra.mxu0 0.0
  %1379 = vmatprep.subr.mxu0 0.0
  %1380 = vmatpush1.msra.mxu0 0.0
  %1381 = vmatprep.subr.mxu0 0.0
  %1382 = vmatpush1.msra.mxu0 0.0
  %1383 = vmatprep.subr.mxu0 0.0
  %1384 = vmatpush1.msra.mxu0 0.0
  %1385 = vmatprep.subr.mxu0 0.0
  %1386 = vmatpush1.msra.mxu0 0.0
  %1387 = vmatprep.subr.mxu0 0.0
  %1388 = vmatpush1.msra.mxu0 0.0
  %1389 = vmatprep.subr.mxu0 0.0
  %1390 = vmatpush1.msra.mxu0 0.0
  %1391 = vmatprep.subr.mxu0 0.0
  %1392 = vmatpush1.msra.mxu0 0.0
  %1393 = vmatprep.subr.mxu0 0.0
  %1394 = vmatpush1.msra.mxu0 0.0
  %1395 = vmatprep.mubr.f32.mxu0 0.0
  %1396 = vmatmul.mubr.f32.gmra.mrb[0].mxu0 %v1329
  %v1397 = vpop.f32.mrb[0].mxu0
  %v1398 = vadd.f32 %v955, %v1397
  %v1399 = vpop.f32.mrb[0].mxu0
  %1400 = vdwg.mxu0
  %v1401 = vsel %vm957, %v1228, 0
  %1403 = vmatprep.subr.mxu0 0.0
  %1404 = vmatpush1.msra.mxu0 %v834
  %1405 = vmatprep.subr.mxu0 0.0
  %1406 = vmatpush1.msra.mxu0 %v835
  %1407 = vmatprep.subr.mxu0 0.0
  %1408 = vmatpush1.msra.mxu0 %v836
  %1409 = vmatprep.subr.mxu0 0.0
  %1410 = vmatpush1.msra.mxu0 %v837
  %1411 = vmatprep.subr.mxu0 0.0
  %1412 = vmatpush1.msra.mxu0 0.0
  %1413 = vmatprep.subr.mxu0 0.0
  %1414 = vmatpush1.msra.mxu0 0.0
  %1415 = vmatprep.subr.mxu0 0.0
  %1416 = vmatpush1.msra.mxu0 0.0
  %1417 = vmatprep.subr.mxu0 0.0
  %1418 = vmatpush1.msra.mxu0 0.0
  %1419 = vmatprep.subr.mxu0 0.0
  %1420 = vmatpush1.msra.mxu0 0.0
  %1421 = vmatprep.subr.mxu0 0.0
  %1422 = vmatpush1.msra.mxu0 0.0
  %1423 = vmatprep.subr.mxu0 0.0
  %1424 = vmatpush1.msra.mxu0 0.0
  %1425 = vmatprep.subr.mxu0 0.0
  %1426 = vmatpush1.msra.mxu0 0.0
  %1427 = vmatprep.subr.mxu0 0.0
  %1428 = vmatpush1.msra.mxu0 0.0
  %1429 = vmatprep.subr.mxu0 0.0
  %1430 = vmatpush1.msra.mxu0 0.0
  %1431 = vmatprep.subr.mxu0 0.0
  %1432 = vmatpush1.msra.mxu0 0.0
  %1433 = vmatprep.subr.mxu0 0.0
  %1434 = vmatpush1.msra.mxu0 0.0
  %1435 = vmatprep.subr.mxu0 0.0
  %1436 = vmatpush1.msra.mxu0 0.0
  %1437 = vmatprep.subr.mxu0 0.0
  %1438 = vmatpush1.msra.mxu0 0.0
  %1439 = vmatprep.subr.mxu0 0.0
  %1440 = vmatpush1.msra.mxu0 0.0
  %1441 = vmatprep.subr.mxu0 0.0
  %1442 = vmatpush1.msra.mxu0 0.0
  %1443 = vmatprep.subr.mxu0 0.0
  %1444 = vmatpush1.msra.mxu0 0.0
  %1445 = vmatprep.subr.mxu0 0.0
  %1446 = vmatpush1.msra.mxu0 0.0
  %1447 = vmatprep.subr.mxu0 0.0
  %1448 = vmatpush1.msra.mxu0 0.0
  %1449 = vmatprep.subr.mxu0 0.0
  %1450 = vmatpush1.msra.mxu0 0.0
  %1451 = vmatprep.subr.mxu0 0.0
  %1452 = vmatpush1.msra.mxu0 0.0
  %1453 = vmatprep.subr.mxu0 0.0
  %1454 = vmatpush1.msra.mxu0 0.0
  %1455 = vmatprep.subr.mxu0 0.0
  %1456 = vmatpush1.msra.mxu0 0.0
  %1457 = vmatprep.subr.mxu0 0.0
  %1458 = vmatpush1.msra.mxu0 0.0
  %1459 = vmatprep.subr.mxu0 0.0
  %1460 = vmatpush1.msra.mxu0 0.0
  %1461 = vmatprep.subr.mxu0 0.0
  %1462 = vmatpush1.msra.mxu0 0.0
  %1463 = vmatprep.subr.mxu0 0.0
  %1464 = vmatpush1.msra.mxu0 0.0
  %1465 = vmatprep.subr.mxu0 0.0
  %1466 = vmatpush1.msra.mxu0 0.0
  %1467 = vmatprep.mubr.f32.mxu0 0.0
  %1468 = vmatmul.mubr.f32.gmra.mrb[0].mxu0 %v1401
  %v1469 = vpop.f32.mrb[0].mxu0
  %v1470 = vadd.f32 0.0, %v1469
  %v1471 = vpop.f32.mrb[0].mxu0
  %1472 = vdwg.mxu0
  %v1473 = vadd.f32 %v1398, %v1470
  %v1474 = vxor.u32 %v1473, 2147483648
  %v1475 = vmul.f32 %v1474, 1.442695
  %v1476 = vpow.pop %v1475
  %v1477 = vadd.f32 %v1476, 1.0
  %v1478 = vrcp.pop %v1477
  %v1479 = vmul.f32 1.0, %v1478
  %v1480 = vtanh.pop %v1473
  %v1481 = vmul.f32 %v1479, %v1219
  %1483 = vrot.lane.b32.xlu0 %v1480, 64
  %v1484 = vpop.permute.xlu0 %1483
  %v1486 = vmul.f32 %v1479, %v1484
  %1488 = vrot.lane.b32.xlu0 %v1486, 32
  %v1489 = vpop.permute.xlu0 %1488
  %v1491 = vadd.f32 %v1481, %v1489
  %v1492 = vtanh.pop %v1491
  %1494 = vrot.lane.b32.xlu0 %v1492, 64
  %v1495 = vpop.permute.xlu0 %1494
  %v1497 = vmul.f32 %v1479, %v1495
  %1499 = vrot.lane.b32.xlu0 %v1497, 64
  %v1500 = vpop.permute.xlu0 %1499
  %vm1502 = vcmask 523520
  %1503 = vst.msk [vmem:[%s8] sm:$0xff] %vm1502, %v1500
  %1504 = vmatprep.subr.mxu0 0.0
  %1505 = vmatpush1.msra.mxu0 %v830
  %1506 = vmatprep.subr.mxu0 0.0
  %1507 = vmatpush1.msra.mxu0 %v831
  %1508 = vmatprep.subr.mxu0 0.0
  %1509 = vmatpush1.msra.mxu0 %v832
  %1510 = vmatprep.subr.mxu0 0.0
  %1511 = vmatpush1.msra.mxu0 %v833
  %1512 = vmatprep.subr.mxu0 0.0
  %1513 = vmatpush1.msra.mxu0 0.0
  %1514 = vmatprep.subr.mxu0 0.0
  %1515 = vmatpush1.msra.mxu0 0.0
  %1516 = vmatprep.subr.mxu0 0.0
  %1517 = vmatpush1.msra.mxu0 0.0
  %1518 = vmatprep.subr.mxu0 0.0
  %1519 = vmatpush1.msra.mxu0 0.0
  %1520 = vmatprep.subr.mxu0 0.0
  %1521 = vmatpush1.msra.mxu0 0.0
  %1522 = vmatprep.subr.mxu0 0.0
  %1523 = vmatpush1.msra.mxu0 0.0
  %1524 = vmatprep.subr.mxu0 0.0
  %1525 = vmatpush1.msra.mxu0 0.0
  %1526 = vmatprep.subr.mxu0 0.0
  %1527 = vmatpush1.msra.mxu0 0.0
  %1528 = vmatprep.subr.mxu0 0.0
  %1529 = vmatpush1.msra.mxu0 0.0
  %1530 = vmatprep.subr.mxu0 0.0
  %1531 = vmatpush1.msra.mxu0 0.0
  %1532 = vmatprep.subr.mxu0 0.0
  %1533 = vmatpush1.msra.mxu0 0.0
  %1534 = vmatprep.subr.mxu0 0.0
  %1535 = vmatpush1.msra.mxu0 0.0
  %1536 = vmatprep.subr.mxu0 0.0
  %1537 = vmatpush1.msra.mxu0 0.0
  %1538 = vmatprep.subr.mxu0 0.0
  %1539 = vmatpush1.msra.mxu0 0.0
  %1540 = vmatprep.subr.mxu0 0.0
  %1541 = vmatpush1.msra.mxu0 0.0
  %1542 = vmatprep.subr.mxu0 0.0
  %1543 = vmatpush1.msra.mxu0 0.0
  %1544 = vmatprep.subr.mxu0 0.0
  %1545 = vmatpush1.msra.mxu0 0.0
  %1546 = vmatprep.subr.mxu0 0.0
  %1547 = vmatpush1.msra.mxu0 0.0
  %1548 = vmatprep.subr.mxu0 0.0
  %1549 = vmatpush1.msra.mxu0 0.0
  %1550 = vmatprep.subr.mxu0 0.0
  %1551 = vmatpush1.msra.mxu0 0.0
  %1552 = vmatprep.subr.mxu0 0.0
  %1553 = vmatpush1.msra.mxu0 0.0
  %1554 = vmatprep.subr.mxu0 0.0
  %1555 = vmatpush1.msra.mxu0 0.0
  %1556 = vmatprep.subr.mxu0 0.0
  %1557 = vmatpush1.msra.mxu0 0.0
  %1558 = vmatprep.subr.mxu0 0.0
  %1559 = vmatpush1.msra.mxu0 0.0
  %1560 = vmatprep.subr.mxu0 0.0
  %1561 = vmatpush1.msra.mxu0 0.0
  %1562 = vmatprep.subr.mxu0 0.0
  %1563 = vmatpush1.msra.mxu0 0.0
  %1564 = vmatprep.subr.mxu0 0.0
  %1565 = vmatpush1.msra.mxu0 0.0
  %1566 = vmatprep.subr.mxu0 0.0
  %1567 = vmatpush1.msra.mxu0 0.0
  %1568 = vmatprep.mubr.f32.mxu0 0.0
  %1569 = vmatmul.mubr.f32.gmra.mrb[0].mxu0 %v1329
  %v1570 = vpop.f32.mrb[0].mxu0
  %v1571 = vadd.f32 0.0, %v1570
  %v1572 = vpop.f32.mrb[0].mxu0
  %1573 = vdwg.mxu0
  %v1574 = vadd.f32 %v923, %v1571
  %v1575 = vxor.u32 %v1574, 2147483648
  %v1576 = vmul.f32 %v1575, 1.442695
  %v1577 = vpow.pop %v1576
  %v1578 = vadd.f32 %v1577, 1.0
  %v1579 = vrcp.pop %v1578
  %v1580 = vmul.f32 1.0, %v1579
  %v1581 = vtanh.pop %v1574
  %v1582 = vmul.f32 %v1580, %v1319
  %1584 = vrot.lane.b32.xlu0 %v1581, 64
  %v1585 = vpop.permute.xlu0 %1584
  %v1587 = vmul.f32 %v1580, %v1585
  %1589 = vrot.lane.b32.xlu0 %v1587, 32
  %v1590 = vpop.permute.xlu0 %1589
  %v1592 = vadd.f32 %v1582, %v1590
  %v1593 = vtanh.pop %v1592
  %1595 = vrot.lane.b32.xlu0 %v1593, 64
  %v1596 = vpop.permute.xlu0 %1595
  %v1598 = vmul.f32 %v1580, %v1596
  %1600 = vrot.lane.b32.xlu0 %v1598, 32
  %v1601 = vpop.permute.xlu0 %1600
  %v1602 = vsel %vm957, %v1601, 0
  %1604 = vmatprep.subr.mxu0 0.0
  %1605 = vmatpush1.msra.mxu0 %v826
  %1606 = vmatprep.subr.mxu0 0.0
  %1607 = vmatpush1.msra.mxu0 %v827
  %1608 = vmatprep.subr.mxu0 0.0
  %1609 = vmatpush1.msra.mxu0 %v828
  %1610 = vmatprep.subr.mxu0 0.0
  %1611 = vmatpush1.msra.mxu0 %v829
  %1612 = vmatprep.subr.mxu0 0.0
  %1613 = vmatpush1.msra.mxu0 0.0
  %1614 = vmatprep.subr.mxu0 0.0
  %1615 = vmatpush1.msra.mxu0 0.0
  %1616 = vmatprep.subr.mxu0 0.0
  %1617 = vmatpush1.msra.mxu0 0.0
  %1618 = vmatprep.subr.mxu0 0.0
  %1619 = vmatpush1.msra.mxu0 0.0
  %1620 = vmatprep.subr.mxu0 0.0
  %1621 = vmatpush1.msra.mxu0 0.0
  %1622 = vmatprep.subr.mxu0 0.0
  %1623 = vmatpush1.msra.mxu0 0.0
  %1624 = vmatprep.subr.mxu0 0.0
  %1625 = vmatpush1.msra.mxu0 0.0
  %1626 = vmatprep.subr.mxu0 0.0
  %1627 = vmatpush1.msra.mxu0 0.0
  %1628 = vmatprep.subr.mxu0 0.0
  %1629 = vmatpush1.msra.mxu0 0.0
  %1630 = vmatprep.subr.mxu0 0.0
  %1631 = vmatpush1.msra.mxu0 0.0
  %1632 = vmatprep.subr.mxu0 0.0
  %1633 = vmatpush1.msra.mxu0 0.0
  %1634 = vmatprep.subr.mxu0 0.0
  %1635 = vmatpush1.msra.mxu0 0.0
  %1636 = vmatprep.subr.mxu0 0.0
  %1637 = vmatpush1.msra.mxu0 0.0
  %1638 = vmatprep.subr.mxu0 0.0
  %1639 = vmatpush1.msra.mxu0 0.0
  %1640 = vmatprep.subr.mxu0 0.0
  %1641 = vmatpush1.msra.mxu0 0.0
  %1642 = vmatprep.subr.mxu0 0.0
  %1643 = vmatpush1.msra.mxu0 0.0
  %1644 = vmatprep.subr.mxu0 0.0
  %1645 = vmatpush1.msra.mxu0 0.0
  %1646 = vmatprep.subr.mxu0 0.0
  %1647 = vmatpush1.msra.mxu0 0.0
  %1648 = vmatprep.subr.mxu0 0.0
  %1649 = vmatpush1.msra.mxu0 0.0
  %1650 = vmatprep.subr.mxu0 0.0
  %1651 = vmatpush1.msra.mxu0 0.0
  %1652 = vmatprep.subr.mxu0 0.0
  %1653 = vmatpush1.msra.mxu0 0.0
  %1654 = vmatprep.subr.mxu0 0.0
  %1655 = vmatpush1.msra.mxu0 0.0
  %1656 = vmatprep.subr.mxu0 0.0
  %1657 = vmatpush1.msra.mxu0 0.0
  %1658 = vmatprep.subr.mxu0 0.0
  %1659 = vmatpush1.msra.mxu0 0.0
  %1660 = vmatprep.subr.mxu0 0.0
  %1661 = vmatpush1.msra.mxu0 0.0
  %1662 = vmatprep.subr.mxu0 0.0
  %1663 = vmatpush1.msra.mxu0 0.0
  %1664 = vmatprep.subr.mxu0 0.0
  %1665 = vmatpush1.msra.mxu0 0.0
  %1666 = vmatprep.subr.mxu0 0.0
  %1667 = vmatpush1.msra.mxu0 0.0
  %1668 = vmatprep.mubr.f32.mxu0 0.0
  %1669 = vmatmul.mubr.f32.gmra.mrb[0].mxu0 %v1602
  %v1670 = vpop.f32.mrb[0].mxu0
  %v1671 = vadd.f32 %v955, %v1670
  %v1672 = vpop.f32.mrb[0].mxu0
  %1673 = vdwg.mxu0
  %1674 = vrot.lane.b32.xlu0 %v1497, 32
  %v1675 = vpop.permute.xlu0 %1674
  %v1676 = vsel %vm957, %v1675, 0
  %1678 = vmatprep.subr.mxu0 0.0
  %1679 = vmatpush1.msra.mxu0 %v834
  %1680 = vmatprep.subr.mxu0 0.0
  %1681 = vmatpush1.msra.mxu0 %v835
  %1682 = vmatprep.subr.mxu0 0.0
  %1683 = vmatpush1.msra.mxu0 %v836
  %1684 = vmatprep.subr.mxu0 0.0
  %1685 = vmatpush1.msra.mxu0 %v837
  %1686 = vmatprep.subr.mxu0 0.0
  %1687 = vmatpush1.msra.mxu0 0.0
  %1688 = vmatprep.subr.mxu0 0.0
  %1689 = vmatpush1.msra.mxu0 0.0
  %1690 = vmatprep.subr.mxu0 0.0
  %1691 = vmatpush1.msra.mxu0 0.0
  %1692 = vmatprep.subr.mxu0 0.0
  %1693 = vmatpush1.msra.mxu0 0.0
  %1694 = vmatprep.subr.mxu0 0.0
  %1695 = vmatpush1.msra.mxu0 0.0
  %1696 = vmatprep.subr.mxu0 0.0
  %1697 = vmatpush1.msra.mxu0 0.0
  %1698 = vmatprep.subr.mxu0 0.0
  %1699 = vmatpush1.msra.mxu0 0.0
  %1700 = vmatprep.subr.mxu0 0.0
  %1701 = vmatpush1.msra.mxu0 0.0
  %1702 = vmatprep.subr.mxu0 0.0
  %1703 = vmatpush1.msra.mxu0 0.0
  %1704 = vmatprep.subr.mxu0 0.0
  %1705 = vmatpush1.msra.mxu0 0.0
  %1706 = vmatprep.subr.mxu0 0.0
  %1707 = vmatpush1.msra.mxu0 0.0
  %1708 = vmatprep.subr.mxu0 0.0
  %1709 = vmatpush1.msra.mxu0 0.0
  %1710 = vmatprep.subr.mxu0 0.0
  %1711 = vmatpush1.msra.mxu0 0.0
  %1712 = vmatprep.subr.mxu0 0.0
  %1713 = vmatpush1.msra.mxu0 0.0
  %1714 = vmatprep.subr.mxu0 0.0
  %1715 = vmatpush1.msra.mxu0 0.0
  %1716 = vmatprep.subr.mxu0 0.0
  %1717 = vmatpush1.msra.mxu0 0.0
  %1718 = vmatprep.subr.mxu0 0.0
  %1719 = vmatpush1.msra.mxu0 0.0
  %1720 = vmatprep.subr.mxu0 0.0
  %1721 = vmatpush1.msra.mxu0 0.0
  %1722 = vmatprep.subr.mxu0 0.0
  %1723 = vmatpush1.msra.mxu0 0.0
  %1724 = vmatprep.subr.mxu0 0.0
  %1725 = vmatpush1.msra.mxu0 0.0
  %1726 = vmatprep.subr.mxu0 0.0
  %1727 = vmatpush1.msra.mxu0 0.0
  %1728 = vmatprep.subr.mxu0 0.0
  %1729 = vmatpush1.msra.mxu0 0.0
  %1730 = vmatprep.subr.mxu0 0.0
  %1731 = vmatpush1.msra.mxu0 0.0
  %1732 = vmatprep.subr.mxu0 0.0
  %1733 = vmatpush1.msra.mxu0 0.0
  %1734 = vmatprep.subr.mxu0 0.0
  %1735 = vmatpush1.msra.mxu0 0.0
  %1736 = vmatprep.subr.mxu0 0.0
  %1737 = vmatpush1.msra.mxu0 0.0
  %1738 = vmatprep.subr.mxu0 0.0
  %1739 = vmatpush1.msra.mxu0 0.0
  %1740 = vmatprep.subr.mxu0 0.0
  %1741 = vmatpush1.msra.mxu0 0.0
  %1742 = vmatprep.mubr.f32.mxu0 0.0
  %1743 = vmatmul.mubr.f32.gmra.mrb[0].mxu0 %v1676
  %v1744 = vpop.f32.mrb[0].mxu0
  %v1745 = vadd.f32 0.0, %v1744
  %v1746 = vpop.f32.mrb[0].mxu0
  %1747 = vdwg.mxu0
  %v1748 = vadd.f32 %v1671, %v1745
  %v1749 = vxor.u32 %v1748, 2147483648
  %v1750 = vmul.f32 %v1749, 1.442695
  %v1751 = vpow.pop %v1750
  %v1752 = vadd.f32 %v1751, 1.0
  %v1753 = vrcp.pop %v1752
  %v1754 = vmul.f32 1.0, %v1753
  %v1755 = vtanh.pop %v1748
  %v1756 = vmul.f32 %v1754, %v1491
  %1758 = vrot.lane.b32.xlu0 %v1755, 64
  %v1759 = vpop.permute.xlu0 %1758
  %v1761 = vmul.f32 %v1754, %v1759
  %1763 = vrot.lane.b32.xlu0 %v1761, 32
  %v1764 = vpop.permute.xlu0 %1763
  %v1766 = vadd.f32 %v1756, %v1764
  %v1767 = vtanh.pop %v1766
  %1769 = vrot.lane.b32.xlu0 %v1767, 64
  %v1770 = vpop.permute.xlu0 %1769
  %v1772 = vmul.f32 %v1754, %v1770
  %1774 = vrot.lane.b32.xlu0 %v1772, 96
  %v1775 = vpop.permute.xlu0 %1774
  %vm1777 = vcmask 785920
  %1778 = vst.msk [vmem:[%s8] sm:$0xff] %vm1777, %v1775
  %1779 = vmatprep.subr.mxu0 0.0
  %1780 = vmatpush1.msra.mxu0 %v830
  %1781 = vmatprep.subr.mxu0 0.0
  %1782 = vmatpush1.msra.mxu0 %v831
  %1783 = vmatprep.subr.mxu0 0.0
  %1784 = vmatpush1.msra.mxu0 %v832
  %1785 = vmatprep.subr.mxu0 0.0
  %1786 = vmatpush1.msra.mxu0 %v833
  %1787 = vmatprep.subr.mxu0 0.0
  %1788 = vmatpush1.msra.mxu0 0.0
  %1789 = vmatprep.subr.mxu0 0.0
  %1790 = vmatpush1.msra.mxu0 0.0
  %1791 = vmatprep.subr.mxu0 0.0
  %1792 = vmatpush1.msra.mxu0 0.0
  %1793 = vmatprep.subr.mxu0 0.0
  %1794 = vmatpush1.msra.mxu0 0.0
  %1795 = vmatprep.subr.mxu0 0.0
  %1796 = vmatpush1.msra.mxu0 0.0
  %1797 = vmatprep.subr.mxu0 0.0
  %1798 = vmatpush1.msra.mxu0 0.0
  %1799 = vmatprep.subr.mxu0 0.0
  %1800 = vmatpush1.msra.mxu0 0.0
  %1801 = vmatprep.subr.mxu0 0.0
  %1802 = vmatpush1.msra.mxu0 0.0
  %1803 = vmatprep.subr.mxu0 0.0
  %1804 = vmatpush1.msra.mxu0 0.0
  %1805 = vmatprep.subr.mxu0 0.0
  %1806 = vmatpush1.msra.mxu0 0.0
  %1807 = vmatprep.subr.mxu0 0.0
  %1808 = vmatpush1.msra.mxu0 0.0
  %1809 = vmatprep.subr.mxu0 0.0
  %1810 = vmatpush1.msra.mxu0 0.0
  %1811 = vmatprep.subr.mxu0 0.0
  %1812 = vmatpush1.msra.mxu0 0.0
  %1813 = vmatprep.subr.mxu0 0.0
  %1814 = vmatpush1.msra.mxu0 0.0
  %1815 = vmatprep.subr.mxu0 0.0
  %1816 = vmatpush1.msra.mxu0 0.0
  %1817 = vmatprep.subr.mxu0 0.0
  %1818 = vmatpush1.msra.mxu0 0.0
  %1819 = vmatprep.subr.mxu0 0.0
  %1820 = vmatpush1.msra.mxu0 0.0
  %1821 = vmatprep.subr.mxu0 0.0
  %1822 = vmatpush1.msra.mxu0 0.0
  %1823 = vmatprep.subr.mxu0 0.0
  %1824 = vmatpush1.msra.mxu0 0.0
  %1825 = vmatprep.subr.mxu0 0.0
  %1826 = vmatpush1.msra.mxu0 0.0
  %1827 = vmatprep.subr.mxu0 0.0
  %1828 = vmatpush1.msra.mxu0 0.0
  %1829 = vmatprep.subr.mxu0 0.0
  %1830 = vmatpush1.msra.mxu0 0.0
  %1831 = vmatprep.subr.mxu0 0.0
  %1832 = vmatpush1.msra.mxu0 0.0
  %1833 = vmatprep.subr.mxu0 0.0
  %1834 = vmatpush1.msra.mxu0 0.0
  %1835 = vmatprep.subr.mxu0 0.0
  %1836 = vmatpush1.msra.mxu0 0.0
  %1837 = vmatprep.subr.mxu0 0.0
  %1838 = vmatpush1.msra.mxu0 0.0
  %1839 = vmatprep.subr.mxu0 0.0
  %1840 = vmatpush1.msra.mxu0 0.0
  %1841 = vmatprep.subr.mxu0 0.0
  %1842 = vmatpush1.msra.mxu0 0.0
  %1843 = vmatprep.mubr.f32.mxu0 0.0
  %1844 = vmatmul.mubr.f32.gmra.mrb[0].mxu0 %v1602
  %v1845 = vpop.f32.mrb[0].mxu0
  %v1846 = vadd.f32 0.0, %v1845
  %v1847 = vpop.f32.mrb[0].mxu0
  %1848 = vdwg.mxu0
  %v1849 = vadd.f32 %v928, %v1846
  %v1850 = vxor.u32 %v1849, 2147483648
  %v1851 = vmul.f32 %v1850, 1.442695
  %v1852 = vpow.pop %v1851
  %v1853 = vadd.f32 %v1852, 1.0
  %v1854 = vrcp.pop %v1853
  %v1855 = vmul.f32 1.0, %v1854
  %v1856 = vtanh.pop %v1849
  %v1857 = vmul.f32 %v1855, %v1592
  %1859 = vrot.lane.b32.xlu0 %v1856, 64
  %v1860 = vpop.permute.xlu0 %1859
  %v1862 = vmul.f32 %v1855, %v1860
  %1864 = vrot.lane.b32.xlu0 %v1862, 32
  %v1865 = vpop.permute.xlu0 %1864
  %v1867 = vadd.f32 %v1857, %v1865
  %v1868 = vtanh.pop %v1867
  %1870 = vrot.lane.b32.xlu0 %v1868, 64
  %v1871 = vpop.permute.xlu0 %1870
  %v1873 = vmul.f32 %v1855, %v1871
  %1875 = vrot.lane.b32.xlu0 %v1873, 32
  %v1876 = vpop.permute.xlu0 %1875
  %v1877 = vsel %vm957, %v1876, 0
  %1879 = vmatprep.subr.mxu0 0.0
  %1880 = vmatpush1.msra.mxu0 %v826
  %1881 = vmatprep.subr.mxu0 0.0
  %1882 = vmatpush1.msra.mxu0 %v827
  %1883 = vmatprep.subr.mxu0 0.0
  %1884 = vmatpush1.msra.mxu0 %v828
  %1885 = vmatprep.subr.mxu0 0.0
  %1886 = vmatpush1.msra.mxu0 %v829
  %1887 = vmatprep.subr.mxu0 0.0
  %1888 = vmatpush1.msra.mxu0 0.0
  %1889 = vmatprep.subr.mxu0 0.0
  %1890 = vmatpush1.msra.mxu0 0.0
  %1891 = vmatprep.subr.mxu0 0.0
  %1892 = vmatpush1.msra.mxu0 0.0
  %1893 = vmatprep.subr.mxu0 0.0
  %1894 = vmatpush1.msra.mxu0 0.0
  %1895 = vmatprep.subr.mxu0 0.0
  %1896 = vmatpush1.msra.mxu0 0.0
  %1897 = vmatprep.subr.mxu0 0.0
  %1898 = vmatpush1.msra.mxu0 0.0
  %1899 = vmatprep.subr.mxu0 0.0
  %1900 = vmatpush1.msra.mxu0 0.0
  %1901 = vmatprep.subr.mxu0 0.0
  %1902 = vmatpush1.msra.mxu0 0.0
  %1903 = vmatprep.subr.mxu0 0.0
  %1904 = vmatpush1.msra.mxu0 0.0
  %1905 = vmatprep.subr.mxu0 0.0
  %1906 = vmatpush1.msra.mxu0 0.0
  %1907 = vmatprep.subr.mxu0 0.0
  %1908 = vmatpush1.msra.mxu0 0.0
  %1909 = vmatprep.subr.mxu0 0.0
  %1910 = vmatpush1.msra.mxu0 0.0
  %1911 = vmatprep.subr.mxu0 0.0
  %1912 = vmatpush1.msra.mxu0 0.0
  %1913 = vmatprep.subr.mxu0 0.0
  %1914 = vmatpush1.msra.mxu0 0.0
  %1915 = vmatprep.subr.mxu0 0.0
  %1916 = vmatpush1.msra.mxu0 0.0
  %1917 = vmatprep.subr.mxu0 0.0
  %1918 = vmatpush1.msra.mxu0 0.0
  %1919 = vmatprep.subr.mxu0 0.0
  %1920 = vmatpush1.msra.mxu0 0.0
  %1921 = vmatprep.subr.mxu0 0.0
  %1922 = vmatpush1.msra.mxu0 0.0
  %1923 = vmatprep.subr.mxu0 0.0
  %1924 = vmatpush1.msra.mxu0 0.0
  %1925 = vmatprep.subr.mxu0 0.0
  %1926 = vmatpush1.msra.mxu0 0.0
  %1927 = vmatprep.subr.mxu0 0.0
  %1928 = vmatpush1.msra.mxu0 0.0
  %1929 = vmatprep.subr.mxu0 0.0
  %1930 = vmatpush1.msra.mxu0 0.0
  %1931 = vmatprep.subr.mxu0 0.0
  %1932 = vmatpush1.msra.mxu0 0.0
  %1933 = vmatprep.subr.mxu0 0.0
  %1934 = vmatpush1.msra.mxu0 0.0
  %1935 = vmatprep.subr.mxu0 0.0
  %1936 = vmatpush1.msra.mxu0 0.0
  %1937 = vmatprep.subr.mxu0 0.0
  %1938 = vmatpush1.msra.mxu0 0.0
  %1939 = vmatprep.subr.mxu0 0.0
  %1940 = vmatpush1.msra.mxu0 0.0
  %1941 = vmatprep.subr.mxu0 0.0
  %1942 = vmatpush1.msra.mxu0 0.0
  %1943 = vmatprep.mubr.f32.mxu0 0.0
  %1944 = vmatmul.mubr.f32.gmra.mrb[0].mxu0 %v1877
  %v1945 = vpop.f32.mrb[0].mxu0
  %v1946 = vadd.f32 %v955, %v1945
  %v1947 = vpop.f32.mrb[0].mxu0
  %1948 = vdwg.mxu0
  %1949 = vrot.lane.b32.xlu0 %v1772, 32
  %v1950 = vpop.permute.xlu0 %1949
  %v1951 = vsel %vm957, %v1950, 0
  %1953 = vmatprep.subr.mxu0 0.0
  %1954 = vmatpush1.msra.mxu0 %v834
  %1955 = vmatprep.subr.mxu0 0.0
  %1956 = vmatpush1.msra.mxu0 %v835
  %1957 = vmatprep.subr.mxu0 0.0
  %1958 = vmatpush1.msra.mxu0 %v836
  %1959 = vmatprep.subr.mxu0 0.0
  %1960 = vmatpush1.msra.mxu0 %v837
  %1961 = vmatprep.subr.mxu0 0.0
  %1962 = vmatpush1.msra.mxu0 0.0
  %1963 = vmatprep.subr.mxu0 0.0
  %1964 = vmatpush1.msra.mxu0 0.0
  %1965 = vmatprep.subr.mxu0 0.0
  %1966 = vmatpush1.msra.mxu0 0.0
  %1967 = vmatprep.subr.mxu0 0.0
  %1968 = vmatpush1.msra.mxu0 0.0
  %1969 = vmatprep.subr.mxu0 0.0
  %1970 = vmatpush1.msra.mxu0 0.0
  %1971 = vmatprep.subr.mxu0 0.0
  %1972 = vmatpush1.msra.mxu0 0.0
  %1973 = vmatprep.subr.mxu0 0.0
  %1974 = vmatpush1.msra.mxu0 0.0
  %1975 = vmatprep.subr.mxu0 0.0
  %1976 = vmatpush1.msra.mxu0 0.0
  %1977 = vmatprep.subr.mxu0 0.0
  %1978 = vmatpush1.msra.mxu0 0.0
  %1979 = vmatprep.subr.mxu0 0.0
  %1980 = vmatpush1.msra.mxu0 0.0
  %1981 = vmatprep.subr.mxu0 0.0
  %1982 = vmatpush1.msra.mxu0 0.0
  %1983 = vmatprep.subr.mxu0 0.0
  %1984 = vmatpush1.msra.mxu0 0.0
  %1985 = vmatprep.subr.mxu0 0.0
  %1986 = vmatpush1.msra.mxu0 0.0
  %1987 = vmatprep.subr.mxu0 0.0
  %1988 = vmatpush1.msra.mxu0 0.0
  %1989 = vmatprep.subr.mxu0 0.0
  %1990 = vmatpush1.msra.mxu0 0.0
  %1991 = vmatprep.subr.mxu0 0.0
  %1992 = vmatpush1.msra.mxu0 0.0
  %1993 = vmatprep.subr.mxu0 0.0
  %1994 = vmatpush1.msra.mxu0 0.0
  %1995 = vmatprep.subr.mxu0 0.0
  %1996 = vmatpush1.msra.mxu0 0.0
  %1997 = vmatprep.subr.mxu0 0.0
  %1998 = vmatpush1.msra.mxu0 0.0
  %1999 = vmatprep.subr.mxu0 0.0
  %2000 = vmatpush1.msra.mxu0 0.0
  %2001 = vmatprep.subr.mxu0 0.0
  %2002 = vmatpush1.msra.mxu0 0.0
  %2003 = vmatprep.subr.mxu0 0.0
  %2004 = vmatpush1.msra.mxu0 0.0
  %2005 = vmatprep.subr.mxu0 0.0
  %2006 = vmatpush1.msra.mxu0 0.0
  %2007 = vmatprep.subr.mxu0 0.0
  %2008 = vmatpush1.msra.mxu0 0.0
  %2009 = vmatprep.subr.mxu0 0.0
  %2010 = vmatpush1.msra.mxu0 0.0
  %2011 = vmatprep.subr.mxu0 0.0
  %2012 = vmatpush1.msra.mxu0 0.0
  %2013 = vmatprep.subr.mxu0 0.0
  %2014 = vmatpush1.msra.mxu0 0.0
  %2015 = vmatprep.subr.mxu0 0.0
  %2016 = vmatpush1.msra.mxu0 0.0
  %2017 = vmatprep.mubr.f32.mxu0 0.0
  %2018 = vmatmul.mubr.f32.gmra.mrb[0].mxu0 %v1951
  %v2019 = vpop.f32.mrb[0].mxu0
  %v2020 = vadd.f32 0.0, %v2019
  %v2021 = vpop.f32.mrb[0].mxu0
  %2022 = vdwg.mxu0
  %v2023 = vadd.f32 %v1946, %v2020
  %v2024 = vxor.u32 %v2023, 2147483648
  %v2025 = vmul.f32 %v2024, 1.442695
  %v2026 = vpow.pop %v2025
  %v2027 = vadd.f32 %v2026, 1.0
  %v2028 = vrcp.pop %v2027
  %v2029 = vmul.f32 1.0, %v2028
  %v2030 = vtanh.pop %v2023
  %v2031 = vmul.f32 %v2029, %v1766
  %2033 = vrot.lane.b32.xlu0 %v2030, 64
  %v2034 = vpop.permute.xlu0 %2033
  %v2036 = vmul.f32 %v2029, %v2034
  %2038 = vrot.lane.b32.xlu0 %v2036, 32
  %v2039 = vpop.permute.xlu0 %2038
  %v2041 = vadd.f32 %v2031, %v2039
  %v2042 = vtanh.pop %v2041
  %2044 = vrot.lane.b32.xlu0 %v2042, 64
  %v2045 = vpop.permute.xlu0 %2044
  %v2047 = vmul.f32 %v2029, %v2045
  %vm2048 = vcmask 1048320
  %2049 = vst.msk [vmem:[%s8] sm:$0xff] %vm2048, %v2047
  %2050 = vmatprep.subr.mxu0 0.0
  %2051 = vmatpush1.msra.mxu0 %v830
  %2052 = vmatprep.subr.mxu0 0.0
  %2053 = vmatpush1.msra.mxu0 %v831
  %2054 = vmatprep.subr.mxu0 0.0
  %2055 = vmatpush1.msra.mxu0 %v832
  %2056 = vmatprep.subr.mxu0 0.0
  %2057 = vmatpush1.msra.mxu0 %v833
  %2058 = vmatprep.subr.mxu0 0.0
  %2059 = vmatpush1.msra.mxu0 0.0
  %2060 = vmatprep.subr.mxu0 0.0
  %2061 = vmatpush1.msra.mxu0 0.0
  %2062 = vmatprep.subr.mxu0 0.0
  %2063 = vmatpush1.msra.mxu0 0.0
  %2064 = vmatprep.subr.mxu0 0.0
  %2065 = vmatpush1.msra.mxu0 0.0
  %2066 = vmatprep.subr.mxu0 0.0
  %2067 = vmatpush1.msra.mxu0 0.0
  %2068 = vmatprep.subr.mxu0 0.0
  %2069 = vmatpush1.msra.mxu0 0.0
  %2070 = vmatprep.subr.mxu0 0.0
  %2071 = vmatpush1.msra.mxu0 0.0
  %2072 = vmatprep.subr.mxu0 0.0
  %2073 = vmatpush1.msra.mxu0 0.0
  %2074 = vmatprep.subr.mxu0 0.0
  %2075 = vmatpush1.msra.mxu0 0.0
  %2076 = vmatprep.subr.mxu0 0.0
  %2077 = vmatpush1.msra.mxu0 0.0
  %2078 = vmatprep.subr.mxu0 0.0
  %2079 = vmatpush1.msra.mxu0 0.0
  %2080 = vmatprep.subr.mxu0 0.0
  %2081 = vmatpush1.msra.mxu0 0.0
  %2082 = vmatprep.subr.mxu0 0.0
  %2083 = vmatpush1.msra.mxu0 0.0
  %2084 = vmatprep.subr.mxu0 0.0
  %2085 = vmatpush1.msra.mxu0 0.0
  %2086 = vmatprep.subr.mxu0 0.0
  %2087 = vmatpush1.msra.mxu0 0.0
  %2088 = vmatprep.subr.mxu0 0.0
  %2089 = vmatpush1.msra.mxu0 0.0
  %2090 = vmatprep.subr.mxu0 0.0
  %2091 = vmatpush1.msra.mxu0 0.0
  %2092 = vmatprep.subr.mxu0 0.0
  %2093 = vmatpush1.msra.mxu0 0.0
  %2094 = vmatprep.subr.mxu0 0.0
  %2095 = vmatpush1.msra.mxu0 0.0
  %2096 = vmatprep.subr.mxu0 0.0
  %2097 = vmatpush1.msra.mxu0 0.0
  %2098 = vmatprep.subr.mxu0 0.0
  %2099 = vmatpush1.msra.mxu0 0.0
  %2100 = vmatprep.subr.mxu0 0.0
  %2101 = vmatpush1.msra.mxu0 0.0
  %2102 = vmatprep.subr.mxu0 0.0
  %2103 = vmatpush1.msra.mxu0 0.0
  %2104 = vmatprep.subr.mxu0 0.0
  %2105 = vmatpush1.msra.mxu0 0.0
  %2106 = vmatprep.subr.mxu0 0.0
  %2107 = vmatpush1.msra.mxu0 0.0
  %2108 = vmatprep.subr.mxu0 0.0
  %2109 = vmatpush1.msra.mxu0 0.0
  %2110 = vmatprep.subr.mxu0 0.0
  %2111 = vmatpush1.msra.mxu0 0.0
  %2112 = vmatprep.subr.mxu0 0.0
  %2113 = vmatpush1.msra.mxu0 0.0
  %2114 = vmatprep.mubr.f32.mxu0 0.0
  %2115 = vmatmul.mubr.f32.gmra.mrb[0].mxu0 %v1877
  %v2116 = vpop.f32.mrb[0].mxu0
  %v2117 = vadd.f32 0.0, %v2116
  %v2118 = vpop.f32.mrb[0].mxu0
  %2119 = vdwg.mxu0
  %v2120 = vadd.f32 %v933, %v2117
  %v2121 = vxor.u32 %v2120, 2147483648
  %v2122 = vmul.f32 %v2121, 1.442695
  %v2123 = vpow.pop %v2122
  %v2124 = vadd.f32 %v2123, 1.0
  %v2125 = vrcp.pop %v2124
  %v2126 = vmul.f32 1.0, %v2125
  %v2127 = vtanh.pop %v2120
  %v2128 = vmul.f32 %v2126, %v1867
  %2130 = vrot.lane.b32.xlu0 %v2127, 64
  %v2131 = vpop.permute.xlu0 %2130
  %v2133 = vmul.f32 %v2126, %v2131
  %2135 = vrot.lane.b32.xlu0 %v2133, 32
  %v2136 = vpop.permute.xlu0 %2135
  %v2138 = vadd.f32 %v2128, %v2136
  %v2139 = vtanh.pop %v2138
  %2141 = vrot.lane.b32.xlu0 %v2139, 64
  %v2142 = vpop.permute.xlu0 %2141
  %v2144 = vmul.f32 %v2126, %v2142
  %2146 = vrot.lane.b32.xlu0 %v2144, 32
  %v2147 = vpop.permute.xlu0 %2146
  %v2148 = vsel %vm957, %v2147, 0
  %2150 = vmatprep.subr.mxu0 0.0
  %2151 = vmatpush1.msra.mxu0 %v826
  %2152 = vmatprep.subr.mxu0 0.0
  %2153 = vmatpush1.msra.mxu0 %v827
  %2154 = vmatprep.subr.mxu0 0.0
  %2155 = vmatpush1.msra.mxu0 %v828
  %2156 = vmatprep.subr.mxu0 0.0
  %2157 = vmatpush1.msra.mxu0 %v829
  %2158 = vmatprep.subr.mxu0 0.0
  %2159 = vmatpush1.msra.mxu0 0.0
  %2160 = vmatprep.subr.mxu0 0.0
  %2161 = vmatpush1.msra.mxu0 0.0
  %2162 = vmatprep.subr.mxu0 0.0
  %2163 = vmatpush1.msra.mxu0 0.0
  %2164 = vmatprep.subr.mxu0 0.0
  %2165 = vmatpush1.msra.mxu0 0.0
  %2166 = vmatprep.subr.mxu0 0.0
  %2167 = vmatpush1.msra.mxu0 0.0
  %2168 = vmatprep.subr.mxu0 0.0
  %2169 = vmatpush1.msra.mxu0 0.0
  %2170 = vmatprep.subr.mxu0 0.0
  %2171 = vmatpush1.msra.mxu0 0.0
  %2172 = vmatprep.subr.mxu0 0.0
  %2173 = vmatpush1.msra.mxu0 0.0
  %2174 = vmatprep.subr.mxu0 0.0
  %2175 = vmatpush1.msra.mxu0 0.0
  %2176 = vmatprep.subr.mxu0 0.0
  %2177 = vmatpush1.msra.mxu0 0.0
  %2178 = vmatprep.subr.mxu0 0.0
  %2179 = vmatpush1.msra.mxu0 0.0
  %2180 = vmatprep.subr.mxu0 0.0
  %2181 = vmatpush1.msra.mxu0 0.0
  %2182 = vmatprep.subr.mxu0 0.0
  %2183 = vmatpush1.msra.mxu0 0.0
  %2184 = vmatprep.subr.mxu0 0.0
  %2185 = vmatpush1.msra.mxu0 0.0
  %2186 = vmatprep.subr.mxu0 0.0
  %2187 = vmatpush1.msra.mxu0 0.0
  %2188 = vmatprep.subr.mxu0 0.0
  %2189 = vmatpush1.msra.mxu0 0.0
  %2190 = vmatprep.subr.mxu0 0.0
  %2191 = vmatpush1.msra.mxu0 0.0
  %2192 = vmatprep.subr.mxu0 0.0
  %2193 = vmatpush1.msra.mxu0 0.0
  %2194 = vmatprep.subr.mxu0 0.0
  %2195 = vmatpush1.msra.mxu0 0.0
  %2196 = vmatprep.subr.mxu0 0.0
  %2197 = vmatpush1.msra.mxu0 0.0
  %2198 = vmatprep.subr.mxu0 0.0
  %2199 = vmatpush1.msra.mxu0 0.0
  %2200 = vmatprep.subr.mxu0 0.0
  %2201 = vmatpush1.msra.mxu0 0.0
  %2202 = vmatprep.subr.mxu0 0.0
  %2203 = vmatpush1.msra.mxu0 0.0
  %2204 = vmatprep.subr.mxu0 0.0
  %2205 = vmatpush1.msra.mxu0 0.0
  %2206 = vmatprep.subr.mxu0 0.0
  %2207 = vmatpush1.msra.mxu0 0.0
  %2208 = vmatprep.subr.mxu0 0.0
  %2209 = vmatpush1.msra.mxu0 0.0
  %2210 = vmatprep.subr.mxu0 0.0
  %2211 = vmatpush1.msra.mxu0 0.0
  %2212 = vmatprep.subr.mxu0 0.0
  %2213 = vmatpush1.msra.mxu0 0.0
  %2214 = vmatprep.mubr.f32.mxu0 0.0
  %2215 = vmatmul.mubr.f32.gmra.mrb[0].mxu0 %v2148
  %v2216 = vpop.f32.mrb[0].mxu0
  %v2217 = vadd.f32 %v955, %v2216
  %v2218 = vpop.f32.mrb[0].mxu0
  %2219 = vdwg.mxu0
  %2221 = vrot.lane.b32.xlu0 %v2047, 32
  %v2222 = vpop.permute.xlu0 %2221
  %v2223 = vsel %vm957, %v2222, 0
  %2225 = vmatprep.subr.mxu0 0.0
  %2226 = vmatpush1.msra.mxu0 %v834
  %2227 = vmatprep.subr.mxu0 0.0
  %2228 = vmatpush1.msra.mxu0 %v835
  %2229 = vmatprep.subr.mxu0 0.0
  %2230 = vmatpush1.msra.mxu0 %v836
  %2231 = vmatprep.subr.mxu0 0.0
  %2232 = vmatpush1.msra.mxu0 %v837
  %2233 = vmatprep.subr.mxu0 0.0
  %2234 = vmatpush1.msra.mxu0 0.0
  %2235 = vmatprep.subr.mxu0 0.0
  %2236 = vmatpush1.msra.mxu0 0.0
  %2237 = vmatprep.subr.mxu0 0.0
  %2238 = vmatpush1.msra.mxu0 0.0
  %2239 = vmatprep.subr.mxu0 0.0
  %2240 = vmatpush1.msra.mxu0 0.0
  %2241 = vmatprep.subr.mxu0 0.0
  %2242 = vmatpush1.msra.mxu0 0.0
  %2243 = vmatprep.subr.mxu0 0.0
  %2244 = vmatpush1.msra.mxu0 0.0
  %2245 = vmatprep.subr.mxu0 0.0
  %2246 = vmatpush1.msra.mxu0 0.0
  %2247 = vmatprep.subr.mxu0 0.0
  %2248 = vmatpush1.msra.mxu0 0.0
  %2249 = vmatprep.subr.mxu0 0.0
  %2250 = vmatpush1.msra.mxu0 0.0
  %2251 = vmatprep.subr.mxu0 0.0
  %2252 = vmatpush1.msra.mxu0 0.0
  %2253 = vmatprep.subr.mxu0 0.0
  %2254 = vmatpush1.msra.mxu0 0.0
  %2255 = vmatprep.subr.mxu0 0.0
  %2256 = vmatpush1.msra.mxu0 0.0
  %2257 = vmatprep.subr.mxu0 0.0
  %2258 = vmatpush1.msra.mxu0 0.0
  %2259 = vmatprep.subr.mxu0 0.0
  %2260 = vmatpush1.msra.mxu0 0.0
  %2261 = vmatprep.subr.mxu0 0.0
  %2262 = vmatpush1.msra.mxu0 0.0
  %2263 = vmatprep.subr.mxu0 0.0
  %2264 = vmatpush1.msra.mxu0 0.0
  %2265 = vmatprep.subr.mxu0 0.0
  %2266 = vmatpush1.msra.mxu0 0.0
  %2267 = vmatprep.subr.mxu0 0.0
  %2268 = vmatpush1.msra.mxu0 0.0
  %2269 = vmatprep.subr.mxu0 0.0
  %2270 = vmatpush1.msra.mxu0 0.0
  %2271 = vmatprep.subr.mxu0 0.0
  %2272 = vmatpush1.msra.mxu0 0.0
  %2273 = vmatprep.subr.mxu0 0.0
  %2274 = vmatpush1.msra.mxu0 0.0
  %2275 = vmatprep.subr.mxu0 0.0
  %2276 = vmatpush1.msra.mxu0 0.0
  %2277 = vmatprep.subr.mxu0 0.0
  %2278 = vmatpush1.msra.mxu0 0.0
  %2279 = vmatprep.subr.mxu0 0.0
  %2280 = vmatpush1.msra.mxu0 0.0
  %2281 = vmatprep.subr.mxu0 0.0
  %2282 = vmatpush1.msra.mxu0 0.0
  %2283 = vmatprep.subr.mxu0 0.0
  %2284 = vmatpush1.msra.mxu0 0.0
  %2285 = vmatprep.subr.mxu0 0.0
  %2286 = vmatpush1.msra.mxu0 0.0
  %2287 = vmatprep.subr.mxu0 0.0
  %2288 = vmatpush1.msra.mxu0 0.0
  %2289 = vmatprep.mubr.f32.mxu0 0.0
  %2290 = vmatmul.mubr.f32.gmra.mrb[0].mxu0 %v2223
  %v2291 = vpop.f32.mrb[0].mxu0
  %v2292 = vadd.f32 0.0, %v2291
  %v2293 = vpop.f32.mrb[0].mxu0
  %2294 = vdwg.mxu0
  %v2295 = vadd.f32 %v2217, %v2292
  %v2296 = vxor.u32 %v2295, 2147483648
  %v2297 = vmul.f32 %v2296, 1.442695
  %v2298 = vpow.pop %v2297
  %v2299 = vadd.f32 %v2298, 1.0
  %v2300 = vrcp.pop %v2299
  %v2301 = vmul.f32 1.0, %v2300
  %v2302 = vtanh.pop %v2295
  %v2303 = vmul.f32 %v2301, %v2041
  %2305 = vrot.lane.b32.xlu0 %v2302, 64
  %v2306 = vpop.permute.xlu0 %2305
  %v2308 = vmul.f32 %v2301, %v2306
  %2310 = vrot.lane.b32.xlu0 %v2308, 32
  %v2311 = vpop.permute.xlu0 %2310
  %v2313 = vadd.f32 %v2303, %v2311
  %v2314 = vtanh.pop %v2313
  %2316 = vrot.lane.b32.xlu0 %v2314, 64
  %v2317 = vpop.permute.xlu0 %2316
  %v2319 = vmul.f32 %v2301, %v2317
  %2321 = vrot.lane.b32.xlu0 %v2319, 32
  %v2322 = vpop.permute.xlu0 %2321
  %2324 = vst.msk [vmem:[%s8 + $0x8] sm:$0xff] %vm957, %v2322
  %2325 = vmatprep.subr.mxu0 0.0
  %2326 = vmatpush1.msra.mxu0 %v830
  %2327 = vmatprep.subr.mxu0 0.0
  %2328 = vmatpush1.msra.mxu0 %v831
  %2329 = vmatprep.subr.mxu0 0.0
  %2330 = vmatpush1.msra.mxu0 %v832
  %2331 = vmatprep.subr.mxu0 0.0
  %2332 = vmatpush1.msra.mxu0 %v833
  %2333 = vmatprep.subr.mxu0 0.0
  %2334 = vmatpush1.msra.mxu0 0.0
  %2335 = vmatprep.subr.mxu0 0.0
  %2336 = vmatpush1.msra.mxu0 0.0
  %2337 = vmatprep.subr.mxu0 0.0
  %2338 = vmatpush1.msra.mxu0 0.0
  %2339 = vmatprep.subr.mxu0 0.0
  %2340 = vmatpush1.msra.mxu0 0.0
  %2341 = vmatprep.subr.mxu0 0.0
  %2342 = vmatpush1.msra.mxu0 0.0
  %2343 = vmatprep.subr.mxu0 0.0
  %2344 = vmatpush1.msra.mxu0 0.0
  %2345 = vmatprep.subr.mxu0 0.0
  %2346 = vmatpush1.msra.mxu0 0.0
  %2347 = vmatprep.subr.mxu0 0.0
  %2348 = vmatpush1.msra.mxu0 0.0
  %2349 = vmatprep.subr.mxu0 0.0
  %2350 = vmatpush1.msra.mxu0 0.0
  %2351 = vmatprep.subr.mxu0 0.0
  %2352 = vmatpush1.msra.mxu0 0.0
  %2353 = vmatprep.subr.mxu0 0.0
  %2354 = vmatpush1.msra.mxu0 0.0
  %2355 = vmatprep.subr.mxu0 0.0
  %2356 = vmatpush1.msra.mxu0 0.0
  %2357 = vmatprep.subr.mxu0 0.0
  %2358 = vmatpush1.msra.mxu0 0.0
  %2359 = vmatprep.subr.mxu0 0.0
  %2360 = vmatpush1.msra.mxu0 0.0
  %2361 = vmatprep.subr.mxu0 0.0
  %2362 = vmatpush1.msra.mxu0 0.0
  %2363 = vmatprep.subr.mxu0 0.0
  %2364 = vmatpush1.msra.mxu0 0.0
  %2365 = vmatprep.subr.mxu0 0.0
  %2366 = vmatpush1.msra.mxu0 0.0
  %2367 = vmatprep.subr.mxu0 0.0
  %2368 = vmatpush1.msra.mxu0 0.0
  %2369 = vmatprep.subr.mxu0 0.0
  %2370 = vmatpush1.msra.mxu0 0.0
  %2371 = vmatprep.subr.mxu0 0.0
  %2372 = vmatpush1.msra.mxu0 0.0
  %2373 = vmatprep.subr.mxu0 0.0
  %2374 = vmatpush1.msra.mxu0 0.0
  %2375 = vmatprep.subr.mxu0 0.0
  %2376 = vmatpush1.msra.mxu0 0.0
  %2377 = vmatprep.subr.mxu0 0.0
  %2378 = vmatpush1.msra.mxu0 0.0
  %2379 = vmatprep.subr.mxu0 0.0
  %2380 = vmatpush1.msra.mxu0 0.0
  %2381 = vmatprep.subr.mxu0 0.0
  %2382 = vmatpush1.msra.mxu0 0.0
  %2383 = vmatprep.subr.mxu0 0.0
  %2384 = vmatpush1.msra.mxu0 0.0
  %2385 = vmatprep.subr.mxu0 0.0
  %2386 = vmatpush1.msra.mxu0 0.0
  %2387 = vmatprep.subr.mxu0 0.0
  %2388 = vmatpush1.msra.mxu0 0.0
  %2389 = vmatprep.mubr.f32.mxu0 0.0
  %2390 = vmatmul.mubr.f32.gmra.mrb[0].mxu0 %v2148
  %v2391 = vpop.f32.mrb[0].mxu0
  %v2392 = vadd.f32 0.0, %v2391
  %v2393 = vpop.f32.mrb[0].mxu0
  %2394 = vdwg.mxu0
  %v2395 = vadd.f32 %v938, %v2392
  %v2396 = vxor.u32 %v2395, 2147483648
  %v2397 = vmul.f32 %v2396, 1.442695
  %v2398 = vpow.pop %v2397
  %v2399 = vadd.f32 %v2398, 1.0
  %v2400 = vrcp.pop %v2399
  %v2401 = vmul.f32 1.0, %v2400
  %v2402 = vtanh.pop %v2395
  %v2403 = vmul.f32 %v2401, %v2138
  %2405 = vrot.lane.b32.xlu0 %v2402, 64
  %v2406 = vpop.permute.xlu0 %2405
  %v2408 = vmul.f32 %v2401, %v2406
  %2410 = vrot.lane.b32.xlu0 %v2408, 32
  %v2411 = vpop.permute.xlu0 %2410
  %v2413 = vadd.f32 %v2403, %v2411
  %v2414 = vtanh.pop %v2413
  %2416 = vrot.lane.b32.xlu0 %v2414, 64
  %v2417 = vpop.permute.xlu0 %2416
  %v2419 = vmul.f32 %v2401, %v2417
  %2421 = vrot.lane.b32.xlu0 %v2419, 32
  %v2422 = vpop.permute.xlu0 %2421
  %v2423 = vsel %vm957, %v2422, 0
  %2425 = vmatprep.subr.mxu0 0.0
  %2426 = vmatpush1.msra.mxu0 %v826
  %2427 = vmatprep.subr.mxu0 0.0
  %2428 = vmatpush1.msra.mxu0 %v827
  %2429 = vmatprep.subr.mxu0 0.0
  %2430 = vmatpush1.msra.mxu0 %v828
  %2431 = vmatprep.subr.mxu0 0.0
  %2432 = vmatpush1.msra.mxu0 %v829
  %2433 = vmatprep.subr.mxu0 0.0
  %2434 = vmatpush1.msra.mxu0 0.0
  %2435 = vmatprep.subr.mxu0 0.0
  %2436 = vmatpush1.msra.mxu0 0.0
  %2437 = vmatprep.subr.mxu0 0.0
  %2438 = vmatpush1.msra.mxu0 0.0
  %2439 = vmatprep.subr.mxu0 0.0
  %2440 = vmatpush1.msra.mxu0 0.0
  %2441 = vmatprep.subr.mxu0 0.0
  %2442 = vmatpush1.msra.mxu0 0.0
  %2443 = vmatprep.subr.mxu0 0.0
  %2444 = vmatpush1.msra.mxu0 0.0
  %2445 = vmatprep.subr.mxu0 0.0
  %2446 = vmatpush1.msra.mxu0 0.0
  %2447 = vmatprep.subr.mxu0 0.0
  %2448 = vmatpush1.msra.mxu0 0.0
  %2449 = vmatprep.subr.mxu0 0.0
  %2450 = vmatpush1.msra.mxu0 0.0
  %2451 = vmatprep.subr.mxu0 0.0
  %2452 = vmatpush1.msra.mxu0 0.0
  %2453 = vmatprep.subr.mxu0 0.0
  %2454 = vmatpush1.msra.mxu0 0.0
  %2455 = vmatprep.subr.mxu0 0.0
  %2456 = vmatpush1.msra.mxu0 0.0
  %2457 = vmatprep.subr.mxu0 0.0
  %2458 = vmatpush1.msra.mxu0 0.0
  %2459 = vmatprep.subr.mxu0 0.0
  %2460 = vmatpush1.msra.mxu0 0.0
  %2461 = vmatprep.subr.mxu0 0.0
  %2462 = vmatpush1.msra.mxu0 0.0
  %2463 = vmatprep.subr.mxu0 0.0
  %2464 = vmatpush1.msra.mxu0 0.0
  %2465 = vmatprep.subr.mxu0 0.0
  %2466 = vmatpush1.msra.mxu0 0.0
  %2467 = vmatprep.subr.mxu0 0.0
  %2468 = vmatpush1.msra.mxu0 0.0
  %2469 = vmatprep.subr.mxu0 0.0
  %2470 = vmatpush1.msra.mxu0 0.0
  %2471 = vmatprep.subr.mxu0 0.0
  %2472 = vmatpush1.msra.mxu0 0.0
  %2473 = vmatprep.subr.mxu0 0.0
  %2474 = vmatpush1.msra.mxu0 0.0
  %2475 = vmatprep.subr.mxu0 0.0
  %2476 = vmatpush1.msra.mxu0 0.0
  %2477 = vmatprep.subr.mxu0 0.0
  %2478 = vmatpush1.msra.mxu0 0.0
  %2479 = vmatprep.subr.mxu0 0.0
  %2480 = vmatpush1.msra.mxu0 0.0
  %2481 = vmatprep.subr.mxu0 0.0
  %2482 = vmatpush1.msra.mxu0 0.0
  %2483 = vmatprep.subr.mxu0 0.0
  %2484 = vmatpush1.msra.mxu0 0.0
  %2485 = vmatprep.subr.mxu0 0.0
  %2486 = vmatpush1.msra.mxu0 0.0
  %2487 = vmatprep.subr.mxu0 0.0
  %2488 = vmatpush1.msra.mxu0 0.0
  %2489 = vmatprep.mubr.f32.mxu0 0.0
  %2490 = vmatmul.mubr.f32.gmra.mrb[0].mxu0 %v2423
  %v2491 = vpop.f32.mrb[0].mxu0
  %v2492 = vadd.f32 %v955, %v2491
  %v2493 = vpop.f32.mrb[0].mxu0
  %2494 = vdwg.mxu0
  %v2495 = vsel %vm957, %v2322, 0
  %2497 = vmatprep.subr.mxu0 0.0
  %2498 = vmatpush1.msra.mxu0 %v834
  %2499 = vmatprep.subr.mxu0 0.0
  %2500 = vmatpush1.msra.mxu0 %v835
  %2501 = vmatprep.subr.mxu0 0.0
  %2502 = vmatpush1.msra.mxu0 %v836
  %2503 = vmatprep.subr.mxu0 0.0
  %2504 = vmatpush1.msra.mxu0 %v837
  %2505 = vmatprep.subr.mxu0 0.0
  %2506 = vmatpush1.msra.mxu0 0.0
  %2507 = vmatprep.subr.mxu0 0.0
  %2508 = vmatpush1.msra.mxu0 0.0
  %2509 = vmatprep.subr.mxu0 0.0
  %2510 = vmatpush1.msra.mxu0 0.0
  %2511 = vmatprep.subr.mxu0 0.0
  %2512 = vmatpush1.msra.mxu0 0.0
  %2513 = vmatprep.subr.mxu0 0.0
  %2514 = vmatpush1.msra.mxu0 0.0
  %2515 = vmatprep.subr.mxu0 0.0
  %2516 = vmatpush1.msra.mxu0 0.0
  %2517 = vmatprep.subr.mxu0 0.0
  %2518 = vmatpush1.msra.mxu0 0.0
  %2519 = vmatprep.subr.mxu0 0.0
  %2520 = vmatpush1.msra.mxu0 0.0
  %2521 = vmatprep.subr.mxu0 0.0
  %2522 = vmatpush1.msra.mxu0 0.0
  %2523 = vmatprep.subr.mxu0 0.0
  %2524 = vmatpush1.msra.mxu0 0.0
  %2525 = vmatprep.subr.mxu0 0.0
  %2526 = vmatpush1.msra.mxu0 0.0
  %2527 = vmatprep.subr.mxu0 0.0
  %2528 = vmatpush1.msra.mxu0 0.0
  %2529 = vmatprep.subr.mxu0 0.0
  %2530 = vmatpush1.msra.mxu0 0.0
  %2531 = vmatprep.subr.mxu0 0.0
  %2532 = vmatpush1.msra.mxu0 0.0
  %2533 = vmatprep.subr.mxu0 0.0
  %2534 = vmatpush1.msra.mxu0 0.0
  %2535 = vmatprep.subr.mxu0 0.0
  %2536 = vmatpush1.msra.mxu0 0.0
  %2537 = vmatprep.subr.mxu0 0.0
  %2538 = vmatpush1.msra.mxu0 0.0
  %2539 = vmatprep.subr.mxu0 0.0
  %2540 = vmatpush1.msra.mxu0 0.0
  %2541 = vmatprep.subr.mxu0 0.0
  %2542 = vmatpush1.msra.mxu0 0.0
  %2543 = vmatprep.subr.mxu0 0.0
  %2544 = vmatpush1.msra.mxu0 0.0
  %2545 = vmatprep.subr.mxu0 0.0
  %2546 = vmatpush1.msra.mxu0 0.0
  %2547 = vmatprep.subr.mxu0 0.0
  %2548 = vmatpush1.msra.mxu0 0.0
  %2549 = vmatprep.subr.mxu0 0.0
  %2550 = vmatpush1.msra.mxu0 0.0
  %2551 = vmatprep.subr.mxu0 0.0
  %2552 = vmatpush1.msra.mxu0 0.0
  %2553 = vmatprep.subr.mxu0 0.0
  %2554 = vmatpush1.msra.mxu0 0.0
  %2555 = vmatprep.subr.mxu0 0.0
  %2556 = vmatpush1.msra.mxu0 0.0
  %2557 = vmatprep.subr.mxu0 0.0
  %2558 = vmatpush1.msra.mxu0 0.0
  %2559 = vmatprep.subr.mxu0 0.0
  %2560 = vmatpush1.msra.mxu0 0.0
  %2561 = vmatprep.mubr.f32.mxu0 0.0
  %2562 = vmatmul.mubr.f32.gmra.mrb[0].mxu0 %v2495
  %v2563 = vpop.f32.mrb[0].mxu0
  %v2564 = vadd.f32 0.0, %v2563
  %v2565 = vpop.f32.mrb[0].mxu0
  %2566 = vdwg.mxu0
  %v2567 = vadd.f32 %v2492, %v2564
  %v2568 = vxor.u32 %v2567, 2147483648
  %v2569 = vmul.f32 %v2568, 1.442695
  %v2570 = vpow.pop %v2569
  %v2571 = vadd.f32 %v2570, 1.0
  %v2572 = vrcp.pop %v2571
  %v2573 = vmul.f32 1.0, %v2572
  %v2574 = vtanh.pop %v2567
  %v2575 = vmul.f32 %v2573, %v2313
  %2577 = vrot.lane.b32.xlu0 %v2574, 64
  %v2578 = vpop.permute.xlu0 %2577
  %v2580 = vmul.f32 %v2573, %v2578
  %2582 = vrot.lane.b32.xlu0 %v2580, 32
  %v2583 = vpop.permute.xlu0 %2582
  %v2585 = vadd.f32 %v2575, %v2583
  %v2586 = vtanh.pop %v2585
  %2588 = vrot.lane.b32.xlu0 %v2586, 64
  %v2589 = vpop.permute.xlu0 %2588
  %v2591 = vmul.f32 %v2573, %v2589
  %2593 = vrot.lane.b32.xlu0 %v2591, 64
  %v2594 = vpop.permute.xlu0 %2593
  %2596 = vst.msk [vmem:[%s8 + $0x8] sm:$0xff] %vm1502, %v2594
  %2597 = vmatprep.subr.mxu0 0.0
  %2598 = vmatpush1.msra.mxu0 %v830
  %2599 = vmatprep.subr.mxu0 0.0
  %2600 = vmatpush1.msra.mxu0 %v831
  %2601 = vmatprep.subr.mxu0 0.0
  %2602 = vmatpush1.msra.mxu0 %v832
  %2603 = vmatprep.subr.mxu0 0.0
  %2604 = vmatpush1.msra.mxu0 %v833
  %2605 = vmatprep.subr.mxu0 0.0
  %2606 = vmatpush1.msra.mxu0 0.0
  %2607 = vmatprep.subr.mxu0 0.0
  %2608 = vmatpush1.msra.mxu0 0.0
  %2609 = vmatprep.subr.mxu0 0.0
  %2610 = vmatpush1.msra.mxu0 0.0
  %2611 = vmatprep.subr.mxu0 0.0
  %2612 = vmatpush1.msra.mxu0 0.0
  %2613 = vmatprep.subr.mxu0 0.0
  %2614 = vmatpush1.msra.mxu0 0.0
  %2615 = vmatprep.subr.mxu0 0.0
  %2616 = vmatpush1.msra.mxu0 0.0
  %2617 = vmatprep.subr.mxu0 0.0
  %2618 = vmatpush1.msra.mxu0 0.0
  %2619 = vmatprep.subr.mxu0 0.0
  %2620 = vmatpush1.msra.mxu0 0.0
  %2621 = vmatprep.subr.mxu0 0.0
  %2622 = vmatpush1.msra.mxu0 0.0
  %2623 = vmatprep.subr.mxu0 0.0
  %2624 = vmatpush1.msra.mxu0 0.0
  %2625 = vmatprep.subr.mxu0 0.0
  %2626 = vmatpush1.msra.mxu0 0.0
  %2627 = vmatprep.subr.mxu0 0.0
  %2628 = vmatpush1.msra.mxu0 0.0
  %2629 = vmatprep.subr.mxu0 0.0
  %2630 = vmatpush1.msra.mxu0 0.0
  %2631 = vmatprep.subr.mxu0 0.0
  %2632 = vmatpush1.msra.mxu0 0.0
  %2633 = vmatprep.subr.mxu0 0.0
  %2634 = vmatpush1.msra.mxu0 0.0
  %2635 = vmatprep.subr.mxu0 0.0
  %2636 = vmatpush1.msra.mxu0 0.0
  %2637 = vmatprep.subr.mxu0 0.0
  %2638 = vmatpush1.msra.mxu0 0.0
  %2639 = vmatprep.subr.mxu0 0.0
  %2640 = vmatpush1.msra.mxu0 0.0
  %2641 = vmatprep.subr.mxu0 0.0
  %2642 = vmatpush1.msra.mxu0 0.0
  %2643 = vmatprep.subr.mxu0 0.0
  %2644 = vmatpush1.msra.mxu0 0.0
  %2645 = vmatprep.subr.mxu0 0.0
  %2646 = vmatpush1.msra.mxu0 0.0
  %2647 = vmatprep.subr.mxu0 0.0
  %2648 = vmatpush1.msra.mxu0 0.0
  %2649 = vmatprep.subr.mxu0 0.0
  %2650 = vmatpush1.msra.mxu0 0.0
  %2651 = vmatprep.subr.mxu0 0.0
  %2652 = vmatpush1.msra.mxu0 0.0
  %2653 = vmatprep.subr.mxu0 0.0
  %2654 = vmatpush1.msra.mxu0 0.0
  %2655 = vmatprep.subr.mxu0 0.0
  %2656 = vmatpush1.msra.mxu0 0.0
  %2657 = vmatprep.subr.mxu0 0.0
  %2658 = vmatpush1.msra.mxu0 0.0
  %2659 = vmatprep.subr.mxu0 0.0
  %2660 = vmatpush1.msra.mxu0 0.0
  %2661 = vmatprep.mubr.f32.mxu0 0.0
  %2662 = vmatmul.mubr.f32.gmra.mrb[0].mxu0 %v2423
  %v2663 = vpop.f32.mrb[0].mxu0
  %v2664 = vadd.f32 0.0, %v2663
  %v2665 = vpop.f32.mrb[0].mxu0
  %2666 = vdwg.mxu0
  %v2667 = vadd.f32 %v943, %v2664
  %v2668 = vxor.u32 %v2667, 2147483648
  %v2669 = vmul.f32 %v2668, 1.442695
  %v2670 = vpow.pop %v2669
  %v2671 = vadd.f32 %v2670, 1.0
  %v2672 = vrcp.pop %v2671
  %v2673 = vmul.f32 1.0, %v2672
  %v2674 = vtanh.pop %v2667
  %v2675 = vmul.f32 %v2673, %v2413
  %2677 = vrot.lane.b32.xlu0 %v2674, 64
  %v2678 = vpop.permute.xlu0 %2677
  %v2680 = vmul.f32 %v2673, %v2678
  %2682 = vrot.lane.b32.xlu0 %v2680, 32
  %v2683 = vpop.permute.xlu0 %2682
  %v2685 = vadd.f32 %v2675, %v2683
  %v2686 = vtanh.pop %v2685
  %2688 = vrot.lane.b32.xlu0 %v2686, 64
  %v2689 = vpop.permute.xlu0 %2688
  %v2691 = vmul.f32 %v2673, %v2689
  %2693 = vrot.lane.b32.xlu0 %v2691, 32
  %v2694 = vpop.permute.xlu0 %2693
  %v2695 = vsel %vm957, %v2694, 0
  %2697 = vmatprep.subr.mxu0 0.0
  %2698 = vmatpush1.msra.mxu0 %v826
  %2699 = vmatprep.subr.mxu0 0.0
  %2700 = vmatpush1.msra.mxu0 %v827
  %2701 = vmatprep.subr.mxu0 0.0
  %2702 = vmatpush1.msra.mxu0 %v828
  %2703 = vmatprep.subr.mxu0 0.0
  %2704 = vmatpush1.msra.mxu0 %v829
  %2705 = vmatprep.subr.mxu0 0.0
  %2706 = vmatpush1.msra.mxu0 0.0
  %2707 = vmatprep.subr.mxu0 0.0
  %2708 = vmatpush1.msra.mxu0 0.0
  %2709 = vmatprep.subr.mxu0 0.0
  %2710 = vmatpush1.msra.mxu0 0.0
  %2711 = vmatprep.subr.mxu0 0.0
  %2712 = vmatpush1.msra.mxu0 0.0
  %2713 = vmatprep.subr.mxu0 0.0
  %2714 = vmatpush1.msra.mxu0 0.0
  %2715 = vmatprep.subr.mxu0 0.0
  %2716 = vmatpush1.msra.mxu0 0.0
  %2717 = vmatprep.subr.mxu0 0.0
  %2718 = vmatpush1.msra.mxu0 0.0
  %2719 = vmatprep.subr.mxu0 0.0
  %2720 = vmatpush1.msra.mxu0 0.0
  %2721 = vmatprep.subr.mxu0 0.0
  %2722 = vmatpush1.msra.mxu0 0.0
  %2723 = vmatprep.subr.mxu0 0.0
  %2724 = vmatpush1.msra.mxu0 0.0
  %2725 = vmatprep.subr.mxu0 0.0
  %2726 = vmatpush1.msra.mxu0 0.0
  %2727 = vmatprep.subr.mxu0 0.0
  %2728 = vmatpush1.msra.mxu0 0.0
  %2729 = vmatprep.subr.mxu0 0.0
  %2730 = vmatpush1.msra.mxu0 0.0
  %2731 = vmatprep.subr.mxu0 0.0
  %2732 = vmatpush1.msra.mxu0 0.0
  %2733 = vmatprep.subr.mxu0 0.0
  %2734 = vmatpush1.msra.mxu0 0.0
  %2735 = vmatprep.subr.mxu0 0.0
  %2736 = vmatpush1.msra.mxu0 0.0
  %2737 = vmatprep.subr.mxu0 0.0
  %2738 = vmatpush1.msra.mxu0 0.0
  %2739 = vmatprep.subr.mxu0 0.0
  %2740 = vmatpush1.msra.mxu0 0.0
  %2741 = vmatprep.subr.mxu0 0.0
  %2742 = vmatpush1.msra.mxu0 0.0
  %2743 = vmatprep.subr.mxu0 0.0
  %2744 = vmatpush1.msra.mxu0 0.0
  %2745 = vmatprep.subr.mxu0 0.0
  %2746 = vmatpush1.msra.mxu0 0.0
  %2747 = vmatprep.subr.mxu0 0.0
  %2748 = vmatpush1.msra.mxu0 0.0
  %2749 = vmatprep.subr.mxu0 0.0
  %2750 = vmatpush1.msra.mxu0 0.0
  %2751 = vmatprep.subr.mxu0 0.0
  %2752 = vmatpush1.msra.mxu0 0.0
  %2753 = vmatprep.subr.mxu0 0.0
  %2754 = vmatpush1.msra.mxu0 0.0
  %2755 = vmatprep.subr.mxu0 0.0
  %2756 = vmatpush1.msra.mxu0 0.0
  %2757 = vmatprep.subr.mxu0 0.0
  %2758 = vmatpush1.msra.mxu0 0.0
  %2759 = vmatprep.subr.mxu0 0.0
  %2760 = vmatpush1.msra.mxu0 0.0
  %2761 = vmatprep.mubr.f32.mxu0 0.0
  %2762 = vmatmul.mubr.f32.gmra.mrb[0].mxu0 %v2695
  %v2763 = vpop.f32.mrb[0].mxu0
  %v2764 = vadd.f32 %v955, %v2763
  %v2765 = vpop.f32.mrb[0].mxu0
  %2766 = vdwg.mxu0
  %2767 = vrot.lane.b32.xlu0 %v2591, 32
  %v2768 = vpop.permute.xlu0 %2767
  %v2769 = vsel %vm957, %v2768, 0
  %2771 = vmatprep.subr.mxu0 0.0
  %2772 = vmatpush1.msra.mxu0 %v834
  %2773 = vmatprep.subr.mxu0 0.0
  %2774 = vmatpush1.msra.mxu0 %v835
  %2775 = vmatprep.subr.mxu0 0.0
  %2776 = vmatpush1.msra.mxu0 %v836
  %2777 = vmatprep.subr.mxu0 0.0
  %2778 = vmatpush1.msra.mxu0 %v837
  %2779 = vmatprep.subr.mxu0 0.0
  %2780 = vmatpush1.msra.mxu0 0.0
  %2781 = vmatprep.subr.mxu0 0.0
  %2782 = vmatpush1.msra.mxu0 0.0
  %2783 = vmatprep.subr.mxu0 0.0
  %2784 = vmatpush1.msra.mxu0 0.0
  %2785 = vmatprep.subr.mxu0 0.0
  %2786 = vmatpush1.msra.mxu0 0.0
  %2787 = vmatprep.subr.mxu0 0.0
  %2788 = vmatpush1.msra.mxu0 0.0
  %2789 = vmatprep.subr.mxu0 0.0
  %2790 = vmatpush1.msra.mxu0 0.0
  %2791 = vmatprep.subr.mxu0 0.0
  %2792 = vmatpush1.msra.mxu0 0.0
  %2793 = vmatprep.subr.mxu0 0.0
  %2794 = vmatpush1.msra.mxu0 0.0
  %2795 = vmatprep.subr.mxu0 0.0
  %2796 = vmatpush1.msra.mxu0 0.0
  %2797 = vmatprep.subr.mxu0 0.0
  %2798 = vmatpush1.msra.mxu0 0.0
  %2799 = vmatprep.subr.mxu0 0.0
  %2800 = vmatpush1.msra.mxu0 0.0
  %2801 = vmatprep.subr.mxu0 0.0
  %2802 = vmatpush1.msra.mxu0 0.0
  %2803 = vmatprep.subr.mxu0 0.0
  %2804 = vmatpush1.msra.mxu0 0.0
  %2805 = vmatprep.subr.mxu0 0.0
  %2806 = vmatpush1.msra.mxu0 0.0
  %2807 = vmatprep.subr.mxu0 0.0
  %2808 = vmatpush1.msra.mxu0 0.0
  %2809 = vmatprep.subr.mxu0 0.0
  %2810 = vmatpush1.msra.mxu0 0.0
  %2811 = vmatprep.subr.mxu0 0.0
  %2812 = vmatpush1.msra.mxu0 0.0
  %2813 = vmatprep.subr.mxu0 0.0
  %2814 = vmatpush1.msra.mxu0 0.0
  %2815 = vmatprep.subr.mxu0 0.0
  %2816 = vmatpush1.msra.mxu0 0.0
  %2817 = vmatprep.subr.mxu0 0.0
  %2818 = vmatpush1.msra.mxu0 0.0
  %2819 = vmatprep.subr.mxu0 0.0
  %2820 = vmatpush1.msra.mxu0 0.0
  %2821 = vmatprep.subr.mxu0 0.0
  %2822 = vmatpush1.msra.mxu0 0.0
  %2823 = vmatprep.subr.mxu0 0.0
  %2824 = vmatpush1.msra.mxu0 0.0
  %2825 = vmatprep.subr.mxu0 0.0
  %2826 = vmatpush1.msra.mxu0 0.0
  %2827 = vmatprep.subr.mxu0 0.0
  %2828 = vmatpush1.msra.mxu0 0.0
  %2829 = vmatprep.subr.mxu0 0.0
  %2830 = vmatpush1.msra.mxu0 0.0
  %2831 = vmatprep.subr.mxu0 0.0
  %2832 = vmatpush1.msra.mxu0 0.0
  %2833 = vmatprep.subr.mxu0 0.0
  %2834 = vmatpush1.msra.mxu0 0.0
  %2835 = vmatprep.mubr.f32.mxu0 0.0
  %2836 = vmatmul.mubr.f32.gmra.mrb[0].mxu0 %v2769
  %v2837 = vpop.f32.mrb[0].mxu0
  %v2838 = vadd.f32 0.0, %v2837
  %v2839 = vpop.f32.mrb[0].mxu0
  %2840 = vdwg.mxu0
  %v2841 = vadd.f32 %v2764, %v2838
  %v2842 = vxor.u32 %v2841, 2147483648
  %v2843 = vmul.f32 %v2842, 1.442695
  %v2844 = vpow.pop %v2843
  %v2845 = vadd.f32 %v2844, 1.0
  %v2846 = vrcp.pop %v2845
  %v2847 = vmul.f32 1.0, %v2846
  %v2848 = vtanh.pop %v2841
  %v2849 = vmul.f32 %v2847, %v2585
  %2851 = vrot.lane.b32.xlu0 %v2848, 64
  %v2852 = vpop.permute.xlu0 %2851
  %v2854 = vmul.f32 %v2847, %v2852
  %2856 = vrot.lane.b32.xlu0 %v2854, 32
  %v2857 = vpop.permute.xlu0 %2856
  %v2859 = vadd.f32 %v2849, %v2857
  %v2860 = vtanh.pop %v2859
  %2862 = vrot.lane.b32.xlu0 %v2860, 64
  %v2863 = vpop.permute.xlu0 %2862
  %v2865 = vmul.f32 %v2847, %v2863
  %2867 = vrot.lane.b32.xlu0 %v2865, 96
  %v2868 = vpop.permute.xlu0 %2867
  %2870 = vst.msk [vmem:[%s8 + $0x8] sm:$0xff] %vm1777, %v2868
  %2871 = vmatprep.subr.mxu0 0.0
  %2872 = vmatpush1.msra.mxu0 %v830
  %2873 = vmatprep.subr.mxu0 0.0
  %2874 = vmatpush1.msra.mxu0 %v831
  %2875 = vmatprep.subr.mxu0 0.0
  %2876 = vmatpush1.msra.mxu0 %v832
  %2877 = vmatprep.subr.mxu0 0.0
  %2878 = vmatpush1.msra.mxu0 %v833
  %2879 = vmatprep.subr.mxu0 0.0
  %2880 = vmatpush1.msra.mxu0 0.0
  %2881 = vmatprep.subr.mxu0 0.0
  %2882 = vmatpush1.msra.mxu0 0.0
  %2883 = vmatprep.subr.mxu0 0.0
  %2884 = vmatpush1.msra.mxu0 0.0
  %2885 = vmatprep.subr.mxu0 0.0
  %2886 = vmatpush1.msra.mxu0 0.0
  %2887 = vmatprep.subr.mxu0 0.0
  %2888 = vmatpush1.msra.mxu0 0.0
  %2889 = vmatprep.subr.mxu0 0.0
  %2890 = vmatpush1.msra.mxu0 0.0
  %2891 = vmatprep.subr.mxu0 0.0
  %2892 = vmatpush1.msra.mxu0 0.0
  %2893 = vmatprep.subr.mxu0 0.0
  %2894 = vmatpush1.msra.mxu0 0.0
  %2895 = vmatprep.subr.mxu0 0.0
  %2896 = vmatpush1.msra.mxu0 0.0
  %2897 = vmatprep.subr.mxu0 0.0
  %2898 = vmatpush1.msra.mxu0 0.0
  %2899 = vmatprep.subr.mxu0 0.0
  %2900 = vmatpush1.msra.mxu0 0.0
  %2901 = vmatprep.subr.mxu0 0.0
  %2902 = vmatpush1.msra.mxu0 0.0
  %2903 = vmatprep.subr.mxu0 0.0
  %2904 = vmatpush1.msra.mxu0 0.0
  %2905 = vmatprep.subr.mxu0 0.0
  %2906 = vmatpush1.msra.mxu0 0.0
  %2907 = vmatprep.subr.mxu0 0.0
  %2908 = vmatpush1.msra.mxu0 0.0
  %2909 = vmatprep.subr.mxu0 0.0
  %2910 = vmatpush1.msra.mxu0 0.0
  %2911 = vmatprep.subr.mxu0 0.0
  %2912 = vmatpush1.msra.mxu0 0.0
  %2913 = vmatprep.subr.mxu0 0.0
  %2914 = vmatpush1.msra.mxu0 0.0
  %2915 = vmatprep.subr.mxu0 0.0
  %2916 = vmatpush1.msra.mxu0 0.0
  %2917 = vmatprep.subr.mxu0 0.0
  %2918 = vmatpush1.msra.mxu0 0.0
  %2919 = vmatprep.subr.mxu0 0.0
  %2920 = vmatpush1.msra.mxu0 0.0
  %2921 = vmatprep.subr.mxu0 0.0
  %2922 = vmatpush1.msra.mxu0 0.0
  %2923 = vmatprep.subr.mxu0 0.0
  %2924 = vmatpush1.msra.mxu0 0.0
  %2925 = vmatprep.subr.mxu0 0.0
  %2926 = vmatpush1.msra.mxu0 0.0
  %2927 = vmatprep.subr.mxu0 0.0
  %2928 = vmatpush1.msra.mxu0 0.0
  %2929 = vmatprep.subr.mxu0 0.0
  %2930 = vmatpush1.msra.mxu0 0.0
  %2931 = vmatprep.subr.mxu0 0.0
  %2932 = vmatpush1.msra.mxu0 0.0
  %2933 = vmatprep.subr.mxu0 0.0
  %2934 = vmatpush1.msra.mxu0 0.0
  %2935 = vmatprep.mubr.f32.mxu0 0.0
  %2936 = vmatmul.mubr.f32.gmra.mrb[0].mxu0 %v2695
  %v2937 = vpop.f32.mrb[0].mxu0
  %v2938 = vadd.f32 0.0, %v2937
  %v2939 = vpop.f32.mrb[0].mxu0
  %2940 = vdwg.mxu0
  %v2941 = vadd.f32 %v948, %v2938
  %v2942 = vxor.u32 %v2941, 2147483648
  %v2943 = vmul.f32 %v2942, 1.442695
  %v2944 = vpow.pop %v2943
  %v2945 = vadd.f32 %v2944, 1.0
  %v2946 = vrcp.pop %v2945
  %v2947 = vmul.f32 1.0, %v2946
  %v2948 = vtanh.pop %v2941
  %v2949 = vmul.f32 %v2947, %v2685
  %2951 = vrot.lane.b32.xlu0 %v2948, 64
  %v2952 = vpop.permute.xlu0 %2951
  %v2954 = vmul.f32 %v2947, %v2952
  %2956 = vrot.lane.b32.xlu0 %v2954, 32
  %v2957 = vpop.permute.xlu0 %2956
  %v2959 = vadd.f32 %v2949, %v2957
  %v2960 = vtanh.pop %v2959
  %2962 = vrot.lane.b32.xlu0 %v2960, 64
  %v2963 = vpop.permute.xlu0 %2962
  %v2965 = vmul.f32 %v2947, %v2963
  %2967 = vrot.lane.b32.xlu0 %v2965, 32
  %v2968 = vpop.permute.xlu0 %2967
  %v2969 = vsel %vm957, %v2968, 0
  %2971 = vmatprep.subr.mxu0 0.0
  %2972 = vmatpush1.msra.mxu0 %v826
  %2973 = vmatprep.subr.mxu0 0.0
  %2974 = vmatpush1.msra.mxu0 %v827
  %2975 = vmatprep.subr.mxu0 0.0
  %2976 = vmatpush1.msra.mxu0 %v828
  %2977 = vmatprep.subr.mxu0 0.0
  %2978 = vmatpush1.msra.mxu0 %v829
  %2979 = vmatprep.subr.mxu0 0.0
  %2980 = vmatpush1.msra.mxu0 0.0
  %2981 = vmatprep.subr.mxu0 0.0
  %2982 = vmatpush1.msra.mxu0 0.0
  %2983 = vmatprep.subr.mxu0 0.0
  %2984 = vmatpush1.msra.mxu0 0.0
  %2985 = vmatprep.subr.mxu0 0.0
  %2986 = vmatpush1.msra.mxu0 0.0
  %2987 = vmatprep.subr.mxu0 0.0
  %2988 = vmatpush1.msra.mxu0 0.0
  %2989 = vmatprep.subr.mxu0 0.0
  %2990 = vmatpush1.msra.mxu0 0.0
  %2991 = vmatprep.subr.mxu0 0.0
  %2992 = vmatpush1.msra.mxu0 0.0
  %2993 = vmatprep.subr.mxu0 0.0
  %2994 = vmatpush1.msra.mxu0 0.0
  %2995 = vmatprep.subr.mxu0 0.0
  %2996 = vmatpush1.msra.mxu0 0.0
  %2997 = vmatprep.subr.mxu0 0.0
  %2998 = vmatpush1.msra.mxu0 0.0
  %2999 = vmatprep.subr.mxu0 0.0
  %3000 = vmatpush1.msra.mxu0 0.0
  %3001 = vmatprep.subr.mxu0 0.0
  %3002 = vmatpush1.msra.mxu0 0.0
  %3003 = vmatprep.subr.mxu0 0.0
  %3004 = vmatpush1.msra.mxu0 0.0
  %3005 = vmatprep.subr.mxu0 0.0
  %3006 = vmatpush1.msra.mxu0 0.0
  %3007 = vmatprep.subr.mxu0 0.0
  %3008 = vmatpush1.msra.mxu0 0.0
  %3009 = vmatprep.subr.mxu0 0.0
  %3010 = vmatpush1.msra.mxu0 0.0
  %3011 = vmatprep.subr.mxu0 0.0
  %3012 = vmatpush1.msra.mxu0 0.0
  %3013 = vmatprep.subr.mxu0 0.0
  %3014 = vmatpush1.msra.mxu0 0.0
  %3015 = vmatprep.subr.mxu0 0.0
  %3016 = vmatpush1.msra.mxu0 0.0
  %3017 = vmatprep.subr.mxu0 0.0
  %3018 = vmatpush1.msra.mxu0 0.0
  %3019 = vmatprep.subr.mxu0 0.0
  %3020 = vmatpush1.msra.mxu0 0.0
  %3021 = vmatprep.subr.mxu0 0.0
  %3022 = vmatpush1.msra.mxu0 0.0
  %3023 = vmatprep.subr.mxu0 0.0
  %3024 = vmatpush1.msra.mxu0 0.0
  %3025 = vmatprep.subr.mxu0 0.0
  %3026 = vmatpush1.msra.mxu0 0.0
  %3027 = vmatprep.subr.mxu0 0.0
  %3028 = vmatpush1.msra.mxu0 0.0
  %3029 = vmatprep.subr.mxu0 0.0
  %3030 = vmatpush1.msra.mxu0 0.0
  %3031 = vmatprep.subr.mxu0 0.0
  %3032 = vmatpush1.msra.mxu0 0.0
  %3033 = vmatprep.subr.mxu0 0.0
  %3034 = vmatpush1.msra.mxu0 0.0
  %3035 = vmatprep.mubr.f32.mxu0 0.0
  %3036 = vmatmul.mubr.f32.gmra.mrb[0].mxu0 %v2969
  %v3037 = vpop.f32.mrb[0].mxu0
  %v3038 = vadd.f32 %v955, %v3037
  %v3039 = vpop.f32.mrb[0].mxu0
  %3040 = vdwg.mxu0
  %3041 = vrot.lane.b32.xlu0 %v2865, 32
  %v3042 = vpop.permute.xlu0 %3041
  %v3043 = vsel %vm957, %v3042, 0
  %3045 = vmatprep.subr.mxu0 0.0
  %3046 = vmatpush1.msra.mxu0 %v834
  %3047 = vmatprep.subr.mxu0 0.0
  %3048 = vmatpush1.msra.mxu0 %v835
  %3049 = vmatprep.subr.mxu0 0.0
  %3050 = vmatpush1.msra.mxu0 %v836
  %3051 = vmatprep.subr.mxu0 0.0
  %3052 = vmatpush1.msra.mxu0 %v837
  %3053 = vmatprep.subr.mxu0 0.0
  %3054 = vmatpush1.msra.mxu0 0.0
  %3055 = vmatprep.subr.mxu0 0.0
  %3056 = vmatpush1.msra.mxu0 0.0
  %3057 = vmatprep.subr.mxu0 0.0
  %3058 = vmatpush1.msra.mxu0 0.0
  %3059 = vmatprep.subr.mxu0 0.0
  %3060 = vmatpush1.msra.mxu0 0.0
  %3061 = vmatprep.subr.mxu0 0.0
  %3062 = vmatpush1.msra.mxu0 0.0
  %3063 = vmatprep.subr.mxu0 0.0
  %3064 = vmatpush1.msra.mxu0 0.0
  %3065 = vmatprep.subr.mxu0 0.0
  %3066 = vmatpush1.msra.mxu0 0.0
  %3067 = vmatprep.subr.mxu0 0.0
  %3068 = vmatpush1.msra.mxu0 0.0
  %3069 = vmatprep.subr.mxu0 0.0
  %3070 = vmatpush1.msra.mxu0 0.0
  %3071 = vmatprep.subr.mxu0 0.0
  %3072 = vmatpush1.msra.mxu0 0.0
  %3073 = vmatprep.subr.mxu0 0.0
  %3074 = vmatpush1.msra.mxu0 0.0
  %3075 = vmatprep.subr.mxu0 0.0
  %3076 = vmatpush1.msra.mxu0 0.0
  %3077 = vmatprep.subr.mxu0 0.0
  %3078 = vmatpush1.msra.mxu0 0.0
  %3079 = vmatprep.subr.mxu0 0.0
  %3080 = vmatpush1.msra.mxu0 0.0
  %3081 = vmatprep.subr.mxu0 0.0
  %3082 = vmatpush1.msra.mxu0 0.0
  %3083 = vmatprep.subr.mxu0 0.0
  %3084 = vmatpush1.msra.mxu0 0.0
  %3085 = vmatprep.subr.mxu0 0.0
  %3086 = vmatpush1.msra.mxu0 0.0
  %3087 = vmatprep.subr.mxu0 0.0
  %3088 = vmatpush1.msra.mxu0 0.0
  %3089 = vmatprep.subr.mxu0 0.0
  %3090 = vmatpush1.msra.mxu0 0.0
  %3091 = vmatprep.subr.mxu0 0.0
  %3092 = vmatpush1.msra.mxu0 0.0
  %3093 = vmatprep.subr.mxu0 0.0
  %3094 = vmatpush1.msra.mxu0 0.0
  %3095 = vmatprep.subr.mxu0 0.0
  %3096 = vmatpush1.msra.mxu0 0.0
  %3097 = vmatprep.subr.mxu0 0.0
  %3098 = vmatpush1.msra.mxu0 0.0
  %3099 = vmatprep.subr.mxu0 0.0
  %3100 = vmatpush1.msra.mxu0 0.0
  %3101 = vmatprep.subr.mxu0 0.0
  %3102 = vmatpush1.msra.mxu0 0.0
  %3103 = vmatprep.subr.mxu0 0.0
  %3104 = vmatpush1.msra.mxu0 0.0
  %3105 = vmatprep.subr.mxu0 0.0
  %3106 = vmatpush1.msra.mxu0 0.0
  %3107 = vmatprep.subr.mxu0 0.0
  %3108 = vmatpush1.msra.mxu0 0.0
  %3109 = vmatprep.mubr.f32.mxu0 0.0
  %3110 = vmatmul.mubr.f32.gmra.mrb[0].mxu0 %v3043
  %v3111 = vpop.f32.mrb[0].mxu0
  %v3112 = vadd.f32 0.0, %v3111
  %v3113 = vpop.f32.mrb[0].mxu0
  %3114 = vdwg.mxu0
  %v3115 = vadd.f32 %v3038, %v3112
  %v3116 = vxor.u32 %v3115, 2147483648
  %v3117 = vmul.f32 %v3116, 1.442695
  %v3118 = vpow.pop %v3117
  %v3119 = vadd.f32 %v3118, 1.0
  %v3120 = vrcp.pop %v3119
  %v3121 = vmul.f32 1.0, %v3120
  %v3122 = vtanh.pop %v3115
  %v3123 = vmul.f32 %v3121, %v2859
  %3125 = vrot.lane.b32.xlu0 %v3122, 64
  %v3126 = vpop.permute.xlu0 %3125
  %v3128 = vmul.f32 %v3121, %v3126
  %3130 = vrot.lane.b32.xlu0 %v3128, 32
  %v3131 = vpop.permute.xlu0 %3130
  %v3133 = vadd.f32 %v3123, %v3131
  %v3134 = vtanh.pop %v3133
  %3136 = vrot.lane.b32.xlu0 %v3134, 64
  %v3137 = vpop.permute.xlu0 %3136
  %v3139 = vmul.f32 %v3121, %v3137
  %3140 = vst.msk [vmem:[%s8 + $0x8] sm:$0xff] %vm2048, %v3139
  // Predicated region
  $region34: #{forward.1} parent=0 // pred_check
    _
  $region35: #{forward.1} parent=0 // pred_check_branch
    %3142 = sbr.rel (0) target = $region37
  $region36: #{forward.1} parent=0 // pred_region
    _
  $region37: #{forward.1} parent=0 // pred_fallthru
    _
  // Predicated region
  $region38: #{forward.1} parent=0 // pred_check
    _
  $region39: #{forward.1} parent=0 // pred_check_branch
    %3144 = sbr.rel (0) target = $region41
  $region40: #{forward.1} parent=0 // pred_region
    _
  $region41: #{forward.1} parent=0 // pred_fallthru
    _

</llo_original>
